<compile_context>
chip_gen: v6e
topology: v6e:2x2x1
jax: 0.10.0
libtpu: 0.0.40
codegen_flags: <defaults>
</compile_context>

<pallas_src>
import jax
import jax.numpy as jnp
from jax import lax
from jax.experimental import pallas as pl
from jax.experimental.pallas import tpu as pltpu

K_SIZE = 4          # ConvTranspose2d kernel size used throughout the DCGAN generator
BN_EPS = 1e-5
LANE = 128          # matmul output columns padded to a multiple of the lane width
MAX_TM = 1024       # row tile (M axis); whole layer runs in one grid step when it fits


def _round_up(x, m):
    return ((x + m - 1) // m) * m


def _row_tile(m):
    """Return (m_pad, tm): padded row count and row-tile size (tm divides m_pad)."""
    m8 = _round_up(m, 8)
    if m8 <= MAX_TM:
        return m8, m8
    return _round_up(m, MAX_TM), MAX_TM


# ----------------------------------------------------------------------------
# Pallas kernels
# ----------------------------------------------------------------------------
def _matmul_stats_kernel(x_ref, w_ref, y_ref, sum_ref, ssq_ref):
    """y = x @ w (bf16 in, f32 accumulate) + per-tile column sum / sum-of-squares."""
    y = jnp.dot(x_ref[...], w_ref[...], preferred_element_type=jnp.float32)
    y_ref[...] = y
    s = jnp.sum(y, axis=0, keepdims=True)
    q = jnp.sum(y * y, axis=0, keepdims=True)
    # (8, C) partial-stat blocks keep the out-spec sublane-aligned; row 0 is consumed.
    sum_ref[...] = jnp.broadcast_to(s, sum_ref.shape)
    ssq_ref[...] = jnp.broadcast_to(q, ssq_ref.shape)


def _affine_relu_kernel(y_ref, scale_ref, shift_ref, o_ref):
    """Per-column BatchNorm affine + ReLU (in place via input_output_aliases)."""
    o_ref[...] = jnp.maximum(y_ref[...] * scale_ref[...] + shift_ref[...], 0.0)


def _matmul_tanh_kernel(x_ref, w_ref, o_ref):
    """Fused matmul + tanh for the final layer (no BatchNorm)."""
    y = jnp.dot(x_ref[...], w_ref[...], preferred_element_type=jnp.float32)
    o_ref[...] = jnp.tanh(y)


# ----------------------------------------------------------------------------
# pallas_call wrappers
# ----------------------------------------------------------------------------
def _matmul_with_stats(x_col, w_mat):
    m_true, k = x_col.shape
    c = w_mat.shape[1]
    c_pad = _round_up(c, LANE)
    m_pad, tm = _row_tile(m_true)
    ntiles = m_pad // tm

    x_p = jnp.pad(x_col, ((0, m_pad - m_true), (0, 0))).astype(jnp.bfloat16)
    w_p = jnp.pad(w_mat, ((0, 0), (0, c_pad - c))).astype(jnp.bfloat16)

    y, psum, pssq = pl.pallas_call(
        _matmul_stats_kernel,
        out_shape=(jax.ShapeDtypeStruct((m_pad, c_pad), jnp.float32),
                   jax.ShapeDtypeStruct((8 * ntiles, c_pad), jnp.float32),
                   jax.ShapeDtypeStruct((8 * ntiles, c_pad), jnp.float32)),
        grid=(ntiles,),
        in_specs=[pl.BlockSpec((tm, k), lambda i: (i, 0)),
                  pl.BlockSpec((k, c_pad), lambda i: (0, 0))],
        out_specs=(pl.BlockSpec((tm, c_pad), lambda i: (i, 0)),
                   pl.BlockSpec((8, c_pad), lambda i: (i, 0)),
                   pl.BlockSpec((8, c_pad), lambda i: (i, 0))),
        compiler_params=pltpu.CompilerParams(dimension_semantics=("parallel",)),
    )(x_p, w_p)

    col_sum = psum.reshape(ntiles, 8, c_pad)[:, 0, :].sum(axis=0)
    col_ssq = pssq.reshape(ntiles, 8, c_pad)[:, 0, :].sum(axis=0)
    return y, col_sum, col_ssq, tm, c_pad


def _apply_affine_relu(y, scale, shift, tm):
    m_pad, c_pad = y.shape
    return pl.pallas_call(
        _affine_relu_kernel,
        out_shape=jax.ShapeDtypeStruct((m_pad, c_pad), jnp.float32),
        grid=(m_pad // tm,),
        in_specs=[pl.BlockSpec((tm, c_pad), lambda i: (i, 0)),
                  pl.BlockSpec((1, c_pad), lambda i: (0, 0)),
                  pl.BlockSpec((1, c_pad), lambda i: (0, 0))],
        out_specs=pl.BlockSpec((tm, c_pad), lambda i: (i, 0)),
        input_output_aliases={0: 0},              # overwrite y in place
        compiler_params=pltpu.CompilerParams(dimension_semantics=("parallel",)),
    )(y, scale, shift)


def _conv_bn_relu(x_col, w_mat, gamma, beta, group, cout):
    """Matmul with (position, channel) lane-dense columns + BatchNorm2d (batch
    statistics) + ReLU.  Returns (M, group * cout) in f32."""
    m_true = x_col.shape[0]
    c = w_mat.shape[1]                                  # == group * cout
    y, col_sum, col_ssq, tm, c_pad = _matmul_with_stats(x_col, w_mat)

    # Pool the per-(position, channel) column statistics over the `group` positions.
    count = m_true * group                              # = N * OH * OW samples / channel
    s = col_sum[:c].reshape(group, cout).sum(axis=0)
    q = col_ssq[:c].reshape(group, cout).sum(axis=0)
    mean = s / count
    var = jnp.maximum(q / count - mean * mean, 0.0)     # clamp: cancellation safety
    scale_c = gamma / jnp.sqrt(var + BN_EPS)
    shift_c = beta - mean * scale_c
    scale = jnp.pad(jnp.tile(scale_c, group), (0, c_pad - c)).reshape(1, c_pad)
    shift = jnp.pad(jnp.tile(shift_c, group), (0, c_pad - c)).reshape(1, c_pad)

    y = _apply_affine_relu(y, scale, shift, tm)
    return y[:m_true, :c]


def _conv_tanh(x_col, w_mat):
    m_true, k = x_col.shape
    c = w_mat.shape[1]
    c_pad = _round_up(c, LANE)
    m_pad, tm = _row_tile(m_true)
    x_p = jnp.pad(x_col, ((0, m_pad - m_true), (0, 0))).astype(jnp.bfloat16)
    w_p = jnp.pad(w_mat, ((0, 0), (0, c_pad - c))).astype(jnp.bfloat16)
    y = pl.pallas_call(
        _matmul_tanh_kernel,
        out_shape=jax.ShapeDtypeStruct((m_pad, c_pad), jnp.float32),
        grid=(m_pad // tm,),
        in_specs=[pl.BlockSpec((tm, k), lambda i: (i, 0)),
                  pl.BlockSpec((k, c_pad), lambda i: (0, 0))],
        out_specs=pl.BlockSpec((tm, c_pad), lambda i: (i, 0)),
        compiler_params=pltpu.CompilerParams(dimension_semantics=("parallel",)),
    )(x_p, w_p)
    return y[:m_true, :c]


# ----------------------------------------------------------------------------
# Plain-JAX glue: stride-2 ConvTranspose2d -> sub-pixel matmul operands
# ----------------------------------------------------------------------------
def _subpixel_weight(w):
    """ConvTranspose2d(stride=2, padding=1, k=4) weight (Cin, Cout, 4, 4) -> dense
    sub-pixel weight (Cin*9, 4*Cout).  Rows: (ci, dh, dw) over the 3x3 input patch;
    columns: (rh, rw, co) output parity x channel."""
    cin, cout = w.shape[0], w.shape[1]
    wb = jnp.zeros((cin, 3, 3, 2, 2, cout), w.dtype)
    for rh in range(2):
        for dhi in range(3):
            kh = rh + 1 - 2 * (dhi - 1)     # output row 2*m+rh reads x[m + dhi - 1]
            if not 0 <= kh < K_SIZE:
                continue
            for rw in range(2):
                for dwi in range(3):
                    kw = rw + 1 - 2 * (dwi - 1)
                    if not 0 <= kw < K_SIZE:
                        continue
                    wb = wb.at[:, dhi, dwi, rh, rw, :].set(w[:, :, kh, kw])
    return wb.reshape(cin * 9, 4 * cout)


def _subpixel_operands(x_nhwc, w):
    """im2col of 3x3 patches (no zero-upsampling) for a stride-2 ConvTranspose2d."""
    n, h, wd, cin = x_nhwc.shape
    cout = w.shape[1]
    xp = jnp.pad(x_nhwc, ((0, 0), (1, 1), (1, 1), (0, 0)))
    patches = [xp[:, dh:dh + h, dw:dw + wd, :] for dh in range(3) for dw in range(3)]
    x_col = jnp.stack(patches, axis=-1).reshape(n * h * wd, cin * 9)
    return x_col, _subpixel_weight(w), (n, h, wd, cout)


def _pixel_shuffle(y, n, h, w, cout):
    """(N*H*W, 4*Cout) with column layout (rh, rw, co) -> (N, 2H, 2W, Cout)."""
    return (y.reshape(n, h, w, 2, 2, cout)
             .transpose(0, 1, 3, 2, 4, 5)
             .reshape(n, 2 * h, 2 * w, cout))


# ----------------------------------------------------------------------------
# Generator forward
# ----------------------------------------------------------------------------
def dcgan_generator_forward(z, params):
    """z: (N, z_noise, 1, 1) NCHW -> (N, channels, 64, 64) NCHW."""
    # TODO(synk): nn.parallel.data_parallel (ngpu > 1) branch not modeled; single-device forward.
    layers = params["layers"]
    n = z.shape[0]

    # layer 0: 1x1 input, stride 1, padding 0 -> one GEMM with (kh, kw, co) columns.
    l0 = layers[0]
    cz = z.shape[1]
    cout0 = l0["weight"].shape[1]
    w0 = l0["weight"].transpose(0, 2, 3, 1).reshape(cz, K_SIZE * K_SIZE * cout0)
    y = _conv_bn_relu(z.reshape(n, cz), w0, l0["gamma"], l0["beta"],
                      group=K_SIZE * K_SIZE, cout=cout0)
    x = y.reshape(n, K_SIZE, K_SIZE, cout0)             # channels-last (N, 4, 4, C)

    # layers 1..3: stride-2 ConvTranspose2d + BatchNorm2d + ReLU
    for layer in layers[1:-1]:
        x_col, w_mat, (nb, h, wd, cout) = _subpixel_operands(x, layer["weight"])
        y = _conv_bn_relu(x_col, w_mat, layer["gamma"], layer["beta"],
                          group=4, cout=cout)
        x = _pixel_shuffle(y, nb, h, wd, cout)

    # final layer: stride-2 ConvTranspose2d + Tanh (fused into one kernel)
    last = layers[-1]
    x_col, w_mat, (nb, h, wd, cout) = _subpixel_operands(x, last["weight"])
    y = _conv_tanh(x_col, w_mat)
    x = _pixel_shuffle(y, nb, h, wd, cout)
    return x.transpose(0, 3, 1, 2)                      # NHWC -> NCHW


# ----------------------------------------------------------------------------
# Deterministic parameter init (shapes from DcganGenerator.__init__)
# ----------------------------------------------------------------------------
def init_params(key, z_noise, channels, ngf):
    cfg = [  # (cin, cout, stride, padding, has_bn)
        (z_noise, ngf * 8, 1, 0, True),
        (ngf * 8, ngf * 4, 2, 1, True),
        (ngf * 4, ngf * 2, 2, 1, True),
        (ngf * 2, ngf,     2, 1, True),
        (ngf,     channels, 2, 1, False),
    ]
    layers = []
    for cin, cout, stride, padding, has_bn in cfg:
        key, wk, gk, bk = jax.random.split(key, 4)
        layer = {
            "weight": 0.02 * jax.random.normal(wk, (cin, cout, K_SIZE, K_SIZE), jnp.float32),
            "stride": stride,
            "padding": padding,
        }
        if has_bn:
            layer["gamma"] = 1.0 + 0.02 * jax.random.normal(gk, (cout,), jnp.float32)
            layer["beta"] = 0.02 * jax.random.normal(bk, (cout,), jnp.float32)
        layers.append(layer)
    return {"layers": layers}


# ----------------------------------------------------------------------------
# Pure-JAX reference (lax convs) for correctness checking
# ----------------------------------------------------------------------------
def reference_forward(z, params):
    x = z
    layers = params["layers"]
    for idx, layer in enumerate(layers):
        w = layer["weight"]                                  # (Cin, Cout, k, k)
        s, p = layer["stride"], layer["padding"]
        rhs = jnp.flip(w, (2, 3)).transpose(1, 0, 2, 3)      # (Cout, Cin, k, k) OIHW
        x = lax.conv_general_dilated(
            x, rhs, window_strides=(1, 1),
            padding=[(K_SIZE - 1 - p, K_SIZE - 1 - p)] * 2,
            lhs_dilation=(s, s),
            dimension_numbers=("NCHW", "OIHW", "NCHW"))
        if idx < len(layers) - 1:
            mean = jnp.mean(x, axis=(0, 2, 3), keepdims=True)
            var = jnp.var(x, axis=(0, 2, 3), keepdims=True)
            x = (x - mean) / jnp.sqrt(var + BN_EPS)
            x = x * layer["gamma"][None, :, None, None] + layer["beta"][None, :, None, None]
            x = jnp.maximum(x, 0.0)
        else:
            x = jnp.tanh(x)
    return x


if __name__ == "__main__":
    key = jax.random.PRNGKey(0)
    batch, z_noise, channels, ngf = 2, 16, 3, 8

    pkey, zkey = jax.random.split(key)
    params = init_params(pkey, z_noise, channels, ngf)
    z = jax.random.normal(zkey, (batch, z_noise, 1, 1), jnp.float32)   # NCHW latent

    fwd = jax.jit(dcgan_generator_forward)
    out = jax.block_until_ready(fwd(z, params))
    assert out.shape == (batch, channels, 64, 64), out.shape

    ref = jax.block_until_ready(reference_forward(z, params))
    err = float(jnp.max(jnp.abs(out - ref)))
    # bf16 matmul inputs with f32 accumulation -> loose-ish tolerance vs f32 reference.
    assert err < 3e-2, err

    print("KERNEL_OK")
</pallas_src>

<mosaic_0001>
module attributes {stable_mosaic.version = 11 : i64} {
  func.func @_matmul_stats_kernel(%arg0: i32, %arg1: memref<8x16xbf16, #tpu.memory_space<vmem>>, %arg2: memref<16x1024xbf16, #tpu.memory_space<vmem>>, %arg3: memref<8x1024xf32, #tpu.memory_space<vmem>>, %arg4: memref<8x1024xf32, #tpu.memory_space<vmem>>, %arg5: memref<8x1024xf32, #tpu.memory_space<vmem>>) attributes {dimension_semantics = [#tpu.dimension_semantics<parallel>], iteration_bounds = array<i64: 1>, scalar_prefetch = 0 : i64, scratch_operands = 0 : i64, tpu.core_type = #tpu.core_type<tc>, window_params = [{transform_indices = @transform_0, window_bounds = array<i64: 8, 16>}, {pipeline_mode = #tpu.pipeline_mode<synchronous>, transform_indices = @transform_1, window_bounds = array<i64: 16, 1024>}, {transform_indices = @transform_2, window_bounds = array<i64: 8, 1024>}, {transform_indices = @transform_3, window_bounds = array<i64: 8, 1024>}, {transform_indices = @transform_4, window_bounds = array<i64: 8, 1024>}]} {
    %c0 = arith.constant 0 : index
    %c0_0 = arith.constant 0 : index
    %0 = vector.load %arg1[%c0, %c0_0] : memref<8x16xbf16, #tpu.memory_space<vmem>>, vector<8x16xbf16>
    %c0_1 = arith.constant 0 : index
    %c0_2 = arith.constant 0 : index
    %1 = vector.load %arg2[%c0_1, %c0_2] : memref<16x1024xbf16, #tpu.memory_space<vmem>>, vector<16x1024xbf16>
    %cst = arith.constant dense<0.000000e+00> : vector<8x1024xf32>
    %2 = tpu.matmul %0, %1, %cst {dimension_numbers = #tpu.dot_dimension_numbers<[1], [0], [0], [1], [0, 0, 1, 1], [], []>} : vector<8x16xbf16>, vector<16x1024xbf16>, vector<8x1024xf32> -> vector<8x1024xf32>
    %c0_3 = arith.constant 0 : index
    %c0_4 = arith.constant 0 : index
    %3 = vector.load %arg3[%c0_3, %c0_4] : memref<8x1024xf32, #tpu.memory_space<vmem>>, vector<8x1024xf32>
    tpu.vector_store %arg3[%c0_3, %c0_4], %2 {strides = array<i32>} : memref<8x1024xf32, #tpu.memory_space<vmem>>, vector<8x1024xf32>,
    %cst_5 = arith.constant dense<0.000000e+00> : vector<1024xf32>
    %4 = vector.multi_reduction <add>, %2, %cst_5 [0] : vector<8x1024xf32> to vector<1024xf32>
    %5 = vector.shape_cast %4 : vector<1024xf32> to vector<1x1024xf32>
    %6 = arith.mulf %2, %2 : vector<8x1024xf32>
    %cst_6 = arith.constant dense<0.000000e+00> : vector<1024xf32>
    %7 = vector.multi_reduction <add>, %6, %cst_6 [0] : vector<8x1024xf32> to vector<1024xf32>
    %8 = vector.shape_cast %7 : vector<1024xf32> to vector<1x1024xf32>
    %9 = vector.shape_cast %5 : vector<1x1024xf32> to vector<1x1024xf32>
    %10 = vector.broadcast %9 : vector<1x1024xf32> to vector<8x1024xf32>
    %c0_7 = arith.constant 0 : index
    %c0_8 = arith.constant 0 : index
    %11 = vector.load %arg4[%c0_7, %c0_8] : memref<8x1024xf32, #tpu.memory_space<vmem>>, vector<8x1024xf32>
    tpu.vector_store %arg4[%c0_7, %c0_8], %10 {strides = array<i32>} : memref<8x1024xf32, #tpu.memory_space<vmem>>, vector<8x1024xf32>,
    %12 = vector.shape_cast %8 : vector<1x1024xf32> to vector<1x1024xf32>
    %13 = vector.broadcast %12 : vector<1x1024xf32> to vector<8x1024xf32>
    %c0_9 = arith.constant 0 : index
    %c0_10 = arith.constant 0 : index
    %14 = vector.load %arg5[%c0_9, %c0_10] : memref<8x1024xf32, #tpu.memory_space<vmem>>, vector<8x1024xf32>
    tpu.vector_store %arg5[%c0_9, %c0_10], %13 {strides = array<i32>} : memref<8x1024xf32, #tpu.memory_space<vmem>>, vector<8x1024xf32>,
    return
  }
  func.func @transform_0(%arg0: i32) -> (i32, i32) {
    %c0_i32 = arith.constant 0 : i32
    %c0_i32_0 = arith.constant 0 : i32
    return %arg0, %c0_i32 : i32, i32
  }
  func.func @transform_1(%arg0: i32) -> (i32, i32) {
    %c0_i32 = arith.constant 0 : i32
    %c0_i32_0 = arith.constant 0 : i32
    %c0_i32_1 = arith.constant 0 : i32
    return %c0_i32, %c0_i32_0 : i32, i32
  }
  func.func @transform_2(%arg0: i32) -> (i32, i32) {
    %c0_i32 = arith.constant 0 : i32
    %c0_i32_0 = arith.constant 0 : i32
    return %arg0, %c0_i32 : i32, i32
  }
  func.func @transform_3(%arg0: i32) -> (i32, i32) {
    %c0_i32 = arith.constant 0 : i32
    %c0_i32_0 = arith.constant 0 : i32
    return %arg0, %c0_i32 : i32, i32
  }
  func.func @transform_4(%arg0: i32) -> (i32, i32) {
    %c0_i32 = arith.constant 0 : i32
    %c0_i32_0 = arith.constant 0 : i32
    return %arg0, %c0_i32 : i32, i32
  }
}

module attributes {stable_mosaic.version = 11 : i64} {
  func.func @_affine_relu_kernel(%arg0: i32, %arg1: memref<8x1024xf32, #tpu.memory_space<vmem>>, %arg2: memref<1x1024xf32, #tpu.memory_space<vmem>>, %arg3: memref<1x1024xf32, #tpu.memory_space<vmem>>, %arg4: memref<8x1024xf32, #tpu.memory_space<vmem>>) attributes {dimension_semantics = [#tpu.dimension_semantics<parallel>], iteration_bounds = array<i64: 1>, scalar_prefetch = 0 : i64, scratch_operands = 0 : i64, tpu.core_type = #tpu.core_type<tc>, window_params = [{transform_indices = @transform_0, window_bounds = array<i64: 8, 1024>}, {pipeline_mode = #tpu.pipeline_mode<synchronous>, transform_indices = @transform_1, window_bounds = array<i64: 1, 1024>}, {pipeline_mode = #tpu.pipeline_mode<synchronous>, transform_indices = @transform_2, window_bounds = array<i64: 1, 1024>}, {transform_indices = @transform_3, window_bounds = array<i64: 8, 1024>}]} {
    %c0 = arith.constant 0 : index
    %c0_0 = arith.constant 0 : index
    %0 = vector.load %arg1[%c0, %c0_0] : memref<8x1024xf32, #tpu.memory_space<vmem>>, vector<8x1024xf32>
    %c0_1 = arith.constant 0 : index
    %c0_2 = arith.constant 0 : index
    %1 = vector.load %arg2[%c0_1, %c0_2] : memref<1x1024xf32, #tpu.memory_space<vmem>>, vector<1x1024xf32>
    %2 = vector.broadcast %1 : vector<1x1024xf32> to vector<8x1024xf32>
    %3 = arith.mulf %0, %2 : vector<8x1024xf32>
    %c0_3 = arith.constant 0 : index
    %c0_4 = arith.constant 0 : index
    %4 = vector.load %arg3[%c0_3, %c0_4] : memref<1x1024xf32, #tpu.memory_space<vmem>>, vector<1x1024xf32>
    %5 = vector.broadcast %4 : vector<1x1024xf32> to vector<8x1024xf32>
    %6 = arith.addf %3, %5 : vector<8x1024xf32>
    %cst = arith.constant 0.000000e+00 : f32
    %7 = vector.broadcast %cst : f32 to vector<8x1024xf32>
    %8 = arith.maximumf %6, %7 : vector<8x1024xf32>
    %c0_5 = arith.constant 0 : index
    %c0_6 = arith.constant 0 : index
    %9 = vector.load %arg4[%c0_5, %c0_6] : memref<8x1024xf32, #tpu.memory_space<vmem>>, vector<8x1024xf32>
    tpu.vector_store %arg4[%c0_5, %c0_6], %8 {strides = array<i32>} : memref<8x1024xf32, #tpu.memory_space<vmem>>, vector<8x1024xf32>,
    return
  }
  func.func @transform_0(%arg0: i32) -> (i32, i32) {
    %c0_i32 = arith.constant 0 : i32
    %c0_i32_0 = arith.constant 0 : i32
    return %arg0, %c0_i32 : i32, i32
  }
  func.func @transform_1(%arg0: i32) -> (i32, i32) {
    %c0_i32 = arith.constant 0 : i32
    %c0_i32_0 = arith.constant 0 : i32
    %c0_i32_1 = arith.constant 0 : i32
    return %c0_i32, %c0_i32_0 : i32, i32
  }
  func.func @transform_2(%arg0: i32) -> (i32, i32) {
    %c0_i32 = arith.constant 0 : i32
    %c0_i32_0 = arith.constant 0 : i32
    %c0_i32_1 = arith.constant 0 : i32
    return %c0_i32, %c0_i32_0 : i32, i32
  }
  func.func @transform_3(%arg0: i32) -> (i32, i32) {
    %c0_i32 = arith.constant 0 : i32
    %c0_i32_0 = arith.constant 0 : i32
    return %arg0, %c0_i32 : i32, i32
  }
}

module attributes {stable_mosaic.version = 11 : i64} {
  func.func @_matmul_stats_kernel(%arg0: i32, %arg1: memref<32x576xbf16, #tpu.memory_space<vmem>>, %arg2: memref<576x128xbf16, #tpu.memory_space<vmem>>, %arg3: memref<32x128xf32, #tpu.memory_space<vmem>>, %arg4: memref<8x128xf32, #tpu.memory_space<vmem>>, %arg5: memref<8x128xf32, #tpu.memory_space<vmem>>) attributes {dimension_semantics = [#tpu.dimension_semantics<parallel>], iteration_bounds = array<i64: 1>, scalar_prefetch = 0 : i64, scratch_operands = 0 : i64, tpu.core_type = #tpu.core_type<tc>, window_params = [{transform_indices = @transform_0, window_bounds = array<i64: 32, 576>}, {pipeline_mode = #tpu.pipeline_mode<synchronous>, transform_indices = @transform_1, window_bounds = array<i64: 576, 128>}, {transform_indices = @transform_2, window_bounds = array<i64: 32, 128>}, {transform_indices = @transform_3, window_bounds = array<i64: 8, 128>}, {transform_indices = @transform_4, window_bounds = array<i64: 8, 128>}]} {
    %c0 = arith.constant 0 : index
    %c0_0 = arith.constant 0 : index
    %0 = vector.load %arg1[%c0, %c0_0] : memref<32x576xbf16, #tpu.memory_space<vmem>>, vector<32x576xbf16>
    %c0_1 = arith.constant 0 : index
    %c0_2 = arith.constant 0 : index
    %1 = vector.load %arg2[%c0_1, %c0_2] : memref<576x128xbf16, #tpu.memory_space<vmem>>, vector<576x128xbf16>
    %cst = arith.constant dense<0.000000e+00> : vector<32x128xf32>
    %2 = tpu.matmul %0, %1, %cst {dimension_numbers = #tpu.dot_dimension_numbers<[1], [0], [0], [1], [0, 0, 1, 1], [], []>} : vector<32x576xbf16>, vector<576x128xbf16>, vector<32x128xf32> -> vector<32x128xf32>
    %c0_3 = arith.constant 0 : index
    %c0_4 = arith.constant 0 : index
    %3 = vector.load %arg3[%c0_3, %c0_4] : memref<32x128xf32, #tpu.memory_space<vmem>>, vector<32x128xf32>
    tpu.vector_store %arg3[%c0_3, %c0_4], %2 {strides = array<i32>} : memref<32x128xf32, #tpu.memory_space<vmem>>, vector<32x128xf32>,
    %cst_5 = arith.constant dense<0.000000e+00> : vector<128xf32>
    %4 = vector.multi_reduction <add>, %2, %cst_5 [0] : vector<32x128xf32> to vector<128xf32>
    %5 = vector.shape_cast %4 : vector<128xf32> to vector<1x128xf32>
    %6 = arith.mulf %2, %2 : vector<32x128xf32>
    %cst_6 = arith.constant dense<0.000000e+00> : vector<128xf32>
    %7 = vector.multi_reduction <add>, %6, %cst_6 [0] : vector<32x128xf32> to vector<128xf32>
    %8 = vector.shape_cast %7 : vector<128xf32> to vector<1x128xf32>
    %9 = vector.shape_cast %5 : vector<1x128xf32> to vector<1x128xf32>
    %10 = vector.broadcast %9 : vector<1x128xf32> to vector<8x128xf32>
    %c0_7 = arith.constant 0 : index
    %c0_8 = arith.constant 0 : index
    %11 = vector.load %arg4[%c0_7, %c0_8] : memref<8x128xf32, #tpu.memory_space<vmem>>, vector<8x128xf32>
    tpu.vector_store %arg4[%c0_7, %c0_8], %10 {strides = array<i32>} : memref<8x128xf32, #tpu.memory_space<vmem>>, vector<8x128xf32>,
    %12 = vector.shape_cast %8 : vector<1x128xf32> to vector<1x128xf32>
    %13 = vector.broadcast %12 : vector<1x128xf32> to vector<8x128xf32>
    %c0_9 = arith.constant 0 : index
    %c0_10 = arith.constant 0 : index
    %14 = vector.load %arg5[%c0_9, %c0_10] : memref<8x128xf32, #tpu.memory_space<vmem>>, vector<8x128xf32>
    tpu.vector_store %arg5[%c0_9, %c0_10], %13 {strides = array<i32>} : memref<8x128xf32, #tpu.memory_space<vmem>>, vector<8x128xf32>,
    return
  }
  func.func @transform_0(%arg0: i32) -> (i32, i32) {
    %c0_i32 = arith.constant 0 : i32
    %c0_i32_0 = arith.constant 0 : i32
    return %arg0, %c0_i32 : i32, i32
  }
  func.func @transform_1(%arg0: i32) -> (i32, i32) {
    %c0_i32 = arith.constant 0 : i32
    %c0_i32_0 = arith.constant 0 : i32
    %c0_i32_1 = arith.constant 0 : i32
    return %c0_i32, %c0_i32_0 : i32, i32
  }
  func.func @transform_2(%arg0: i32) -> (i32, i32) {
    %c0_i32 = arith.constant 0 : i32
    %c0_i32_0 = arith.constant 0 : i32
    return %arg0, %c0_i32 : i32, i32
  }
  func.func @transform_3(%arg0: i32) -> (i32, i32) {
    %c0_i32 = arith.constant 0 : i32
    %c0_i32_0 = arith.constant 0 : i32
    return %arg0, %c0_i32 : i32, i32
  }
  func.func @transform_4(%arg0: i32) -> (i32, i32) {
    %c0_i32 = arith.constant 0 : i32
    %c0_i32_0 = arith.constant 0 : i32
    return %arg0, %c0_i32 : i32, i32
  }
}

module attributes {stable_mosaic.version = 11 : i64} {
  func.func @_affine_relu_kernel(%arg0: i32, %arg1: memref<32x128xf32, #tpu.memory_space<vmem>>, %arg2: memref<1x128xf32, #tpu.memory_space<vmem>>, %arg3: memref<1x128xf32, #tpu.memory_space<vmem>>, %arg4: memref<32x128xf32, #tpu.memory_space<vmem>>) attributes {dimension_semantics = [#tpu.dimension_semantics<parallel>], iteration_bounds = array<i64: 1>, scalar_prefetch = 0 : i64, scratch_operands = 0 : i64, tpu.core_type = #tpu.core_type<tc>, window_params = [{transform_indices = @transform_0, window_bounds = array<i64: 32, 128>}, {pipeline_mode = #tpu.pipeline_mode<synchronous>, transform_indices = @transform_1, window_bounds = array<i64: 1, 128>}, {pipeline_mode = #tpu.pipeline_mode<synchronous>, transform_indices = @transform_2, window_bounds = array<i64: 1, 128>}, {transform_indices = @transform_3, window_bounds = array<i64: 32, 128>}]} {
    %c0 = arith.constant 0 : index
    %c0_0 = arith.constant 0 : index
    %0 = vector.load %arg1[%c0, %c0_0] : memref<32x128xf32, #tpu.memory_space<vmem>>, vector<32x128xf32>
    %c0_1 = arith.constant 0 : index
    %c0_2 = arith.constant 0 : index
    %1 = vector.load %arg2[%c0_1, %c0_2] : memref<1x128xf32, #tpu.memory_space<vmem>>, vector<1x128xf32>
    %2 = vector.broadcast %1 : vector<1x128xf32> to vector<32x128xf32>
    %3 = arith.mulf %0, %2 : vector<32x128xf32>
    %c0_3 = arith.constant 0 : index
    %c0_4 = arith.constant 0 : index
    %4 = vector.load %arg3[%c0_3, %c0_4] : memref<1x128xf32, #tpu.memory_space<vmem>>, vector<1x128xf32>
    %5 = vector.broadcast %4 : vector<1x128xf32> to vector<32x128xf32>
    %6 = arith.addf %3, %5 : vector<32x128xf32>
    %cst = arith.constant 0.000000e+00 : f32
    %7 = vector.broadcast %cst : f32 to vector<32x128xf32>
    %8 = arith.maximumf %6, %7 : vector<32x128xf32>
    %c0_5 = arith.constant 0 : index
    %c0_6 = arith.constant 0 : index
    %9 = vector.load %arg4[%c0_5, %c0_6] : memref<32x128xf32, #tpu.memory_space<vmem>>, vector<32x128xf32>
    tpu.vector_store %arg4[%c0_5, %c0_6], %8 {strides = array<i32>} : memref<32x128xf32, #tpu.memory_space<vmem>>, vector<32x128xf32>,
    return
  }
  func.func @transform_0(%arg0: i32) -> (i32, i32) {
    %c0_i32 = arith.constant 0 : i32
    %c0_i32_0 = arith.constant 0 : i32
    return %arg0, %c0_i32 : i32, i32
  }
  func.func @transform_1(%arg0: i32) -> (i32, i32) {
    %c0_i32 = arith.constant 0 : i32
    %c0_i32_0 = arith.constant 0 : i32
    %c0_i32_1 = arith.constant 0 : i32
    return %c0_i32, %c0_i32_0 : i32, i32
  }
  func.func @transform_2(%arg0: i32) -> (i32, i32) {
    %c0_i32 = arith.constant 0 : i32
    %c0_i32_0 = arith.constant 0 : i32
    %c0_i32_1 = arith.constant 0 : i32
    return %c0_i32, %c0_i32_0 : i32, i32
  }
  func.func @transform_3(%arg0: i32) -> (i32, i32) {
    %c0_i32 = arith.constant 0 : i32
    %c0_i32_0 = arith.constant 0 : i32
    return %arg0, %c0_i32 : i32, i32
  }
}

module attributes {stable_mosaic.version = 11 : i64} {
  func.func @_matmul_stats_kernel(%arg0: i32, %arg1: memref<128x288xbf16, #tpu.memory_space<vmem>>, %arg2: memref<288x128xbf16, #tpu.memory_space<vmem>>, %arg3: memref<128x128xf32, #tpu.memory_space<vmem>>, %arg4: memref<8x128xf32, #tpu.memory_space<vmem>>, %arg5: memref<8x128xf32, #tpu.memory_space<vmem>>) attributes {dimension_semantics = [#tpu.dimension_semantics<parallel>], iteration_bounds = array<i64: 1>, scalar_prefetch = 0 : i64, scratch_operands = 0 : i64, tpu.core_type = #tpu.core_type<tc>, window_params = [{transform_indices = @transform_0, window_bounds = array<i64: 128, 288>}, {pipeline_mode = #tpu.pipeline_mode<synchronous>, transform_indices = @transform_1, window_bounds = array<i64: 288, 128>}, {transform_indices = @transform_2, window_bounds = array<i64: 128, 128>}, {transform_indices = @transform_3, window_bounds = array<i64: 8, 128>}, {transform_indices = @transform_4, window_bounds = array<i64: 8, 128>}]} {
    %c0 = arith.constant 0 : index
    %c0_0 = arith.constant 0 : index
    %0 = vector.load %arg1[%c0, %c0_0] : memref<128x288xbf16, #tpu.memory_space<vmem>>, vector<128x288xbf16>
    %c0_1 = arith.constant 0 : index
    %c0_2 = arith.constant 0 : index
    %1 = vector.load %arg2[%c0_1, %c0_2] : memref<288x128xbf16, #tpu.memory_space<vmem>>, vector<288x128xbf16>
    %cst = arith.constant dense<0.000000e+00> : vector<128x128xf32>
    %2 = tpu.matmul %0, %1, %cst {dimension_numbers = #tpu.dot_dimension_numbers<[1], [0], [0], [1], [0, 0, 1, 1], [], []>} : vector<128x288xbf16>, vector<288x128xbf16>, vector<128x128xf32> -> vector<128x128xf32>
    %c0_3 = arith.constant 0 : index
    %c0_4 = arith.constant 0 : index
    %3 = vector.load %arg3[%c0_3, %c0_4] : memref<128x128xf32, #tpu.memory_space<vmem>>, vector<128x128xf32>
    tpu.vector_store %arg3[%c0_3, %c0_4], %2 {strides = array<i32>} : memref<128x128xf32, #tpu.memory_space<vmem>>, vector<128x128xf32>,
    %cst_5 = arith.constant dense<0.000000e+00> : vector<128xf32>
    %4 = vector.multi_reduction <add>, %2, %cst_5 [0] : vector<128x128xf32> to vector<128xf32>
    %5 = vector.shape_cast %4 : vector<128xf32> to vector<1x128xf32>
    %6 = arith.mulf %2, %2 : vector<128x128xf32>
    %cst_6 = arith.constant dense<0.000000e+00> : vector<128xf32>
    %7 = vector.multi_reduction <add>, %6, %cst_6 [0] : vector<128x128xf32> to vector<128xf32>
    %8 = vector.shape_cast %7 : vector<128xf32> to vector<1x128xf32>
    %9 = vector.shape_cast %5 : vector<1x128xf32> to vector<1x128xf32>
    %10 = vector.broadcast %9 : vector<1x128xf32> to vector<8x128xf32>
    %c0_7 = arith.constant 0 : index
    %c0_8 = arith.constant 0 : index
    %11 = vector.load %arg4[%c0_7, %c0_8] : memref<8x128xf32, #tpu.memory_space<vmem>>, vector<8x128xf32>
    tpu.vector_store %arg4[%c0_7, %c0_8], %10 {strides = array<i32>} : memref<8x128xf32, #tpu.memory_space<vmem>>, vector<8x128xf32>,
    %12 = vector.shape_cast %8 : vector<1x128xf32> to vector<1x128xf32>
    %13 = vector.broadcast %12 : vector<1x128xf32> to vector<8x128xf32>
    %c0_9 = arith.constant 0 : index
    %c0_10 = arith.constant 0 : index
    %14 = vector.load %arg5[%c0_9, %c0_10] : memref<8x128xf32, #tpu.memory_space<vmem>>, vector<8x128xf32>
    tpu.vector_store %arg5[%c0_9, %c0_10], %13 {strides = array<i32>} : memref<8x128xf32, #tpu.memory_space<vmem>>, vector<8x128xf32>,
    return
  }
  func.func @transform_0(%arg0: i32) -> (i32, i32) {
    %c0_i32 = arith.constant 0 : i32
    %c0_i32_0 = arith.constant 0 : i32
    return %arg0, %c0_i32 : i32, i32
  }
  func.func @transform_1(%arg0: i32) -> (i32, i32) {
    %c0_i32 = arith.constant 0 : i32
    %c0_i32_0 = arith.constant 0 : i32
    %c0_i32_1 = arith.constant 0 : i32
    return %c0_i32, %c0_i32_0 : i32, i32
  }
  func.func @transform_2(%arg0: i32) -> (i32, i32) {
    %c0_i32 = arith.constant 0 : i32
    %c0_i32_0 = arith.constant 0 : i32
    return %arg0, %c0_i32 : i32, i32
  }
  func.func @transform_3(%arg0: i32) -> (i32, i32) {
    %c0_i32 = arith.constant 0 : i32
    %c0_i32_0 = arith.constant 0 : i32
    return %arg0, %c0_i32 : i32, i32
  }
  func.func @transform_4(%arg0: i32) -> (i32, i32) {
    %c0_i32 = arith.constant 0 : i32
    %c0_i32_0 = arith.constant 0 : i32
    return %arg0, %c0_i32 : i32, i32
  }
}

module attributes {stable_mosaic.version = 11 : i64} {
  func.func @_affine_relu_kernel(%arg0: i32, %arg1: memref<128x128xf32, #tpu.memory_space<vmem>>, %arg2: memref<1x128xf32, #tpu.memory_space<vmem>>, %arg3: memref<1x128xf32, #tpu.memory_space<vmem>>, %arg4: memref<128x128xf32, #tpu.memory_space<vmem>>) attributes {dimension_semantics = [#tpu.dimension_semantics<parallel>], iteration_bounds = array<i64: 1>, scalar_prefetch = 0 : i64, scratch_operands = 0 : i64, tpu.core_type = #tpu.core_type<tc>, window_params = [{transform_indices = @transform_0, window_bounds = array<i64: 128, 128>}, {pipeline_mode = #tpu.pipeline_mode<synchronous>, transform_indices = @transform_1, window_bounds = array<i64: 1, 128>}, {pipeline_mode = #tpu.pipeline_mode<synchronous>, transform_indices = @transform_2, window_bounds = array<i64: 1, 128>}, {transform_indices = @transform_3, window_bounds = array<i64: 128, 128>}]} {
    %c0 = arith.constant 0 : index
    %c0_0 = arith.constant 0 : index
    %0 = vector.load %arg1[%c0, %c0_0] : memref<128x128xf32, #tpu.memory_space<vmem>>, vector<128x128xf32>
    %c0_1 = arith.constant 0 : index
    %c0_2 = arith.constant 0 : index
    %1 = vector.load %arg2[%c0_1, %c0_2] : memref<1x128xf32, #tpu.memory_space<vmem>>, vector<1x128xf32>
    %2 = vector.broadcast %1 : vector<1x128xf32> to vector<128x128xf32>
    %3 = arith.mulf %0, %2 : vector<128x128xf32>
    %c0_3 = arith.constant 0 : index
    %c0_4 = arith.constant 0 : index
    %4 = vector.load %arg3[%c0_3, %c0_4] : memref<1x128xf32, #tpu.memory_space<vmem>>, vector<1x128xf32>
    %5 = vector.broadcast %4 : vector<1x128xf32> to vector<128x128xf32>
    %6 = arith.addf %3, %5 : vector<128x128xf32>
    %cst = arith.constant 0.000000e+00 : f32
    %7 = vector.broadcast %cst : f32 to vector<128x128xf32>
    %8 = arith.maximumf %6, %7 : vector<128x128xf32>
    %c0_5 = arith.constant 0 : index
    %c0_6 = arith.constant 0 : index
    %9 = vector.load %arg4[%c0_5, %c0_6] : memref<128x128xf32, #tpu.memory_space<vmem>>, vector<128x128xf32>
    tpu.vector_store %arg4[%c0_5, %c0_6], %8 {strides = array<i32>} : memref<128x128xf32, #tpu.memory_space<vmem>>, vector<128x128xf32>,
    return
  }
  func.func @transform_0(%arg0: i32) -> (i32, i32) {
    %c0_i32 = arith.constant 0 : i32
    %c0_i32_0 = arith.constant 0 : i32
    return %arg0, %c0_i32 : i32, i32
  }
  func.func @transform_1(%arg0: i32) -> (i32, i32) {
    %c0_i32 = arith.constant 0 : i32
    %c0_i32_0 = arith.constant 0 : i32
    %c0_i32_1 = arith.constant 0 : i32
    return %c0_i32, %c0_i32_0 : i32, i32
  }
  func.func @transform_2(%arg0: i32) -> (i32, i32) {
    %c0_i32 = arith.constant 0 : i32
    %c0_i32_0 = arith.constant 0 : i32
    %c0_i32_1 = arith.constant 0 : i32
    return %c0_i32, %c0_i32_0 : i32, i32
  }
  func.func @transform_3(%arg0: i32) -> (i32, i32) {
    %c0_i32 = arith.constant 0 : i32
    %c0_i32_0 = arith.constant 0 : i32
    return %arg0, %c0_i32 : i32, i32
  }
}

module attributes {stable_mosaic.version = 11 : i64} {
  func.func @_matmul_stats_kernel(%arg0: i32, %arg1: memref<512x144xbf16, #tpu.memory_space<vmem>>, %arg2: memref<144x128xbf16, #tpu.memory_space<vmem>>, %arg3: memref<512x128xf32, #tpu.memory_space<vmem>>, %arg4: memref<8x128xf32, #tpu.memory_space<vmem>>, %arg5: memref<8x128xf32, #tpu.memory_space<vmem>>) attributes {dimension_semantics = [#tpu.dimension_semantics<parallel>], iteration_bounds = array<i64: 1>, scalar_prefetch = 0 : i64, scratch_operands = 0 : i64, tpu.core_type = #tpu.core_type<tc>, window_params = [{transform_indices = @transform_0, window_bounds = array<i64: 512, 144>}, {pipeline_mode = #tpu.pipeline_mode<synchronous>, transform_indices = @transform_1, window_bounds = array<i64: 144, 128>}, {transform_indices = @transform_2, window_bounds = array<i64: 512, 128>}, {transform_indices = @transform_3, window_bounds = array<i64: 8, 128>}, {transform_indices = @transform_4, window_bounds = array<i64: 8, 128>}]} {
    %c0 = arith.constant 0 : index
    %c0_0 = arith.constant 0 : index
    %0 = vector.load %arg1[%c0, %c0_0] : memref<512x144xbf16, #tpu.memory_space<vmem>>, vector<512x144xbf16>
    %c0_1 = arith.constant 0 : index
    %c0_2 = arith.constant 0 : index
    %1 = vector.load %arg2[%c0_1, %c0_2] : memref<144x128xbf16, #tpu.memory_space<vmem>>, vector<144x128xbf16>
    %cst = arith.constant dense<0.000000e+00> : vector<512x128xf32>
    %2 = tpu.matmul %0, %1, %cst {dimension_numbers = #tpu.dot_dimension_numbers<[1], [0], [0], [1], [0, 0, 1, 1], [], []>} : vector<512x144xbf16>, vector<144x128xbf16>, vector<512x128xf32> -> vector<512x128xf32>
    %c0_3 = arith.constant 0 : index
    %c0_4 = arith.constant 0 : index
    %3 = vector.load %arg3[%c0_3, %c0_4] : memref<512x128xf32, #tpu.memory_space<vmem>>, vector<512x128xf32>
    tpu.vector_store %arg3[%c0_3, %c0_4], %2 {strides = array<i32>} : memref<512x128xf32, #tpu.memory_space<vmem>>, vector<512x128xf32>,
    %cst_5 = arith.constant dense<0.000000e+00> : vector<128xf32>
    %4 = vector.multi_reduction <add>, %2, %cst_5 [0] : vector<512x128xf32> to vector<128xf32>
    %5 = vector.shape_cast %4 : vector<128xf32> to vector<1x128xf32>
    %6 = arith.mulf %2, %2 : vector<512x128xf32>
    %cst_6 = arith.constant dense<0.000000e+00> : vector<128xf32>
    %7 = vector.multi_reduction <add>, %6, %cst_6 [0] : vector<512x128xf32> to vector<128xf32>
    %8 = vector.shape_cast %7 : vector<128xf32> to vector<1x128xf32>
    %9 = vector.shape_cast %5 : vector<1x128xf32> to vector<1x128xf32>
    %10 = vector.broadcast %9 : vector<1x128xf32> to vector<8x128xf32>
    %c0_7 = arith.constant 0 : index
    %c0_8 = arith.constant 0 : index
    %11 = vector.load %arg4[%c0_7, %c0_8] : memref<8x128xf32, #tpu.memory_space<vmem>>, vector<8x128xf32>
    tpu.vector_store %arg4[%c0_7, %c0_8], %10 {strides = array<i32>} : memref<8x128xf32, #tpu.memory_space<vmem>>, vector<8x128xf32>,
    %12 = vector.shape_cast %8 : vector<1x128xf32> to vector<1x128xf32>
    %13 = vector.broadcast %12 : vector<1x128xf32> to vector<8x128xf32>
    %c0_9 = arith.constant 0 : index
    %c0_10 = arith.constant 0 : index
    %14 = vector.load %arg5[%c0_9, %c0_10] : memref<8x128xf32, #tpu.memory_space<vmem>>, vector<8x128xf32>
    tpu.vector_store %arg5[%c0_9, %c0_10], %13 {strides = array<i32>} : memref<8x128xf32, #tpu.memory_space<vmem>>, vector<8x128xf32>,
    return
  }
  func.func @transform_0(%arg0: i32) -> (i32, i32) {
    %c0_i32 = arith.constant 0 : i32
    %c0_i32_0 = arith.constant 0 : i32
    return %arg0, %c0_i32 : i32, i32
  }
  func.func @transform_1(%arg0: i32) -> (i32, i32) {
    %c0_i32 = arith.constant 0 : i32
    %c0_i32_0 = arith.constant 0 : i32
    %c0_i32_1 = arith.constant 0 : i32
    return %c0_i32, %c0_i32_0 : i32, i32
  }
  func.func @transform_2(%arg0: i32) -> (i32, i32) {
    %c0_i32 = arith.constant 0 : i32
    %c0_i32_0 = arith.constant 0 : i32
    return %arg0, %c0_i32 : i32, i32
  }
  func.func @transform_3(%arg0: i32) -> (i32, i32) {
    %c0_i32 = arith.constant 0 : i32
    %c0_i32_0 = arith.constant 0 : i32
    return %arg0, %c0_i32 : i32, i32
  }
  func.func @transform_4(%arg0: i32) -> (i32, i32) {
    %c0_i32 = arith.constant 0 : i32
    %c0_i32_0 = arith.constant 0 : i32
    return %arg0, %c0_i32 : i32, i32
  }
}

module attributes {stable_mosaic.version = 11 : i64} {
  func.func @_affine_relu_kernel(%arg0: i32, %arg1: memref<512x128xf32, #tpu.memory_space<vmem>>, %arg2: memref<1x128xf32, #tpu.memory_space<vmem>>, %arg3: memref<1x128xf32, #tpu.memory_space<vmem>>, %arg4: memref<512x128xf32, #tpu.memory_space<vmem>>) attributes {dimension_semantics = [#tpu.dimension_semantics<parallel>], iteration_bounds = array<i64: 1>, scalar_prefetch = 0 : i64, scratch_operands = 0 : i64, tpu.core_type = #tpu.core_type<tc>, window_params = [{transform_indices = @transform_0, window_bounds = array<i64: 512, 128>}, {pipeline_mode = #tpu.pipeline_mode<synchronous>, transform_indices = @transform_1, window_bounds = array<i64: 1, 128>}, {pipeline_mode = #tpu.pipeline_mode<synchronous>, transform_indices = @transform_2, window_bounds = array<i64: 1, 128>}, {transform_indices = @transform_3, window_bounds = array<i64: 512, 128>}]} {
    %c0 = arith.constant 0 : index
    %c0_0 = arith.constant 0 : index
    %0 = vector.load %arg1[%c0, %c0_0] : memref<512x128xf32, #tpu.memory_space<vmem>>, vector<512x128xf32>
    %c0_1 = arith.constant 0 : index
    %c0_2 = arith.constant 0 : index
    %1 = vector.load %arg2[%c0_1, %c0_2] : memref<1x128xf32, #tpu.memory_space<vmem>>, vector<1x128xf32>
    %2 = vector.broadcast %1 : vector<1x128xf32> to vector<512x128xf32>
    %3 = arith.mulf %0, %2 : vector<512x128xf32>
    %c0_3 = arith.constant 0 : index
    %c0_4 = arith.constant 0 : index
    %4 = vector.load %arg3[%c0_3, %c0_4] : memref<1x128xf32, #tpu.memory_space<vmem>>, vector<1x128xf32>
    %5 = vector.broadcast %4 : vector<1x128xf32> to vector<512x128xf32>
    %6 = arith.addf %3, %5 : vector<512x128xf32>
    %cst = arith.constant 0.000000e+00 : f32
    %7 = vector.broadcast %cst : f32 to vector<512x128xf32>
    %8 = arith.maximumf %6, %7 : vector<512x128xf32>
    %c0_5 = arith.constant 0 : index
    %c0_6 = arith.constant 0 : index
    %9 = vector.load %arg4[%c0_5, %c0_6] : memref<512x128xf32, #tpu.memory_space<vmem>>, vector<512x128xf32>
    tpu.vector_store %arg4[%c0_5, %c0_6], %8 {strides = array<i32>} : memref<512x128xf32, #tpu.memory_space<vmem>>, vector<512x128xf32>,
    return
  }
  func.func @transform_0(%arg0: i32) -> (i32, i32) {
    %c0_i32 = arith.constant 0 : i32
    %c0_i32_0 = arith.constant 0 : i32
    return %arg0, %c0_i32 : i32, i32
  }
  func.func @transform_1(%arg0: i32) -> (i32, i32) {
    %c0_i32 = arith.constant 0 : i32
    %c0_i32_0 = arith.constant 0 : i32
    %c0_i32_1 = arith.constant 0 : i32
    return %c0_i32, %c0_i32_0 : i32, i32
  }
  func.func @transform_2(%arg0: i32) -> (i32, i32) {
    %c0_i32 = arith.constant 0 : i32
    %c0_i32_0 = arith.constant 0 : i32
    %c0_i32_1 = arith.constant 0 : i32
    return %c0_i32, %c0_i32_0 : i32, i32
  }
  func.func @transform_3(%arg0: i32) -> (i32, i32) {
    %c0_i32 = arith.constant 0 : i32
    %c0_i32_0 = arith.constant 0 : i32
    return %arg0, %c0_i32 : i32, i32
  }
}

module attributes {stable_mosaic.version = 11 : i64} {
  func.func @_matmul_tanh_kernel(%arg0: i32, %arg1: memref<1024x72xbf16, #tpu.memory_space<vmem>>, %arg2: memref<72x128xbf16, #tpu.memory_space<vmem>>, %arg3: memref<1024x128xf32, #tpu.memory_space<vmem>>) attributes {dimension_semantics = [#tpu.dimension_semantics<parallel>], iteration_bounds = array<i64: 2>, scalar_prefetch = 0 : i64, scratch_operands = 0 : i64, tpu.core_type = #tpu.core_type<tc>, window_params = [{transform_indices = @transform_0, window_bounds = array<i64: 1024, 72>}, {pipeline_mode = #tpu.pipeline_mode<synchronous>, transform_indices = @transform_1, window_bounds = array<i64: 72, 128>}, {transform_indices = @transform_2, window_bounds = array<i64: 1024, 128>}]} {
    %c0 = arith.constant 0 : index
    %c0_0 = arith.constant 0 : index
    %0 = vector.load %arg1[%c0, %c0_0] : memref<1024x72xbf16, #tpu.memory_space<vmem>>, vector<1024x72xbf16>
    %c0_1 = arith.constant 0 : index
    %c0_2 = arith.constant 0 : index
    %1 = vector.load %arg2[%c0_1, %c0_2] : memref<72x128xbf16, #tpu.memory_space<vmem>>, vector<72x128xbf16>
    %cst = arith.constant dense<0.000000e+00> : vector<1024x128xf32>
    %2 = tpu.matmul %0, %1, %cst {dimension_numbers = #tpu.dot_dimension_numbers<[1], [0], [0], [1], [0, 0, 1, 1], [], []>} : vector<1024x72xbf16>, vector<72x128xbf16>, vector<1024x128xf32> -> vector<1024x128xf32>
    %3 = math.tanh %2 : vector<1024x128xf32>
    %c0_3 = arith.constant 0 : index
    %c0_4 = arith.constant 0 : index
    %4 = vector.load %arg3[%c0_3, %c0_4] : memref<1024x128xf32, #tpu.memory_space<vmem>>, vector<1024x128xf32>
    tpu.vector_store %arg3[%c0_3, %c0_4], %3 {strides = array<i32>} : memref<1024x128xf32, #tpu.memory_space<vmem>>, vector<1024x128xf32>,
    return
  }
  func.func @transform_0(%arg0: i32) -> (i32, i32) {
    %c0_i32 = arith.constant 0 : i32
    %c0_i32_0 = arith.constant 0 : i32
    return %arg0, %c0_i32 : i32, i32
  }
  func.func @transform_1(%arg0: i32) -> (i32, i32) {
    %c0_i32 = arith.constant 0 : i32
    %c0_i32_0 = arith.constant 0 : i32
    %c0_i32_1 = arith.constant 0 : i32
    return %c0_i32, %c0_i32_0 : i32, i32
  }
  func.func @transform_2(%arg0: i32) -> (i32, i32) {
    %c0_i32 = arith.constant 0 : i32
    %c0_i32_0 = arith.constant 0 : i32
    return %arg0, %c0_i32 : i32, i32
  }
}

</mosaic_0001>

<llo_original>
// kernel: tile.43
$region0: #{tile.43}
  #allocation0 [shape = 's32[1]{0}', space=sflag, size = 0x4, scoped, tag = 'scoped memory for tile.43']
  %s0 = inlined_call_operand.vmem [shape: f32[64], index: 0, kind: input, shape index: {}]
  %s1 = inlined_call_operand.vmem [shape: f32[16,64], index: 1, kind: output, shape index: {}]
  // Predicated region
  $region2: #{tile.43} parent=0 // pred_check
    _
  $region3: #{tile.43} parent=0 // pred_check_branch
    %3 = sbr.rel (0) target = $region5
  $region4: #{tile.43} parent=0 // pred_region
    _
  $region5: #{tile.43} parent=0 // pred_fallthru
    _
  %v4 = vld [vmem:[%s0] ss:$0 sm:$0xff]
  %5 = vst [vmem:[%s1] sm:$0xff] %v4
  %s6 = scalar_lea.vmem %s1, 8
  %7 = vst [vmem:[%s6] sm:$0xff] %v4

// kernel: dcgan_generator_forward.10
$region0: #{dcgan_generator_forward.10}
  #allocation0 [shape = 'u32[]', space=smem, size = 0x4, offset = 0x4, fixed_abs, tag = 'smem constant byte address 0x4 - core index']
  #allocation1 [shape = 'u32[144,128]{1,0:T(1,128)}', space=vmem, size = 0x12000, scoped, tag = 'internal scratch']
  %s0 = inlined_call_operand.vmem [shape: f32[8,1024], index: 0, kind: input, shape index: {}, may-alias: {0,3}]
  %s1 = inlined_call_operand.vmem [shape: f32[1,1024], index: 1, kind: input, shape index: {}]
  %s2 = inlined_call_operand.vmem [shape: f32[1,1024], index: 2, kind: input, shape index: {}]
  %s3 = inlined_call_operand.vmem [shape: f32[8,1024], index: 3, kind: output, shape index: {}, may-alias: {0,3}]
  %s4 = sld [smem:[#allocation0]]
  $region22: #{dcgan_generator_forward.10} parent=0
    _
  %s6 = ssub.s32 1, %s4
  %s7 = scalar_select 0, %s6, %s4
  // Predicated region
  $region2: #{dcgan_generator_forward.10} parent=0 // pred_check
    _
  $region3: #{dcgan_generator_forward.10} parent=0 // pred_check_branch
    %9 = sbr.rel (0) target = $region5
  $region4: #{dcgan_generator_forward.10} parent=0 // pred_region
    _
  $region5: #{dcgan_generator_forward.10} parent=0 // pred_fallthru
    _
  // Predicated region
  $region6: #{dcgan_generator_forward.10} parent=0 // pred_check
    _
  $region7: #{dcgan_generator_forward.10} parent=0 // pred_check_branch
    %11 = sbr.rel (0) target = $region9
  $region8: #{dcgan_generator_forward.10} parent=0 // pred_region
    _
  $region9: #{dcgan_generator_forward.10} parent=0 // pred_fallthru
    _
  // Predicated region
  $region10: #{dcgan_generator_forward.10} parent=0 // pred_check
    _
  $region11: #{dcgan_generator_forward.10} parent=0 // pred_check_branch
    %13 = sbr.rel (0) target = $region13
  $region12: #{dcgan_generator_forward.10} parent=0 // pred_region
    _
  $region13: #{dcgan_generator_forward.10} parent=0 // pred_fallthru
    _
  %v14 = vld [vmem:[%s0] sm:$0xff]
  %v15 = vld [vmem:[%s0 + $0x8] sm:$0xff]
  %v16 = vld [vmem:[%s0 + $0x10] sm:$0xff]
  %v17 = vld [vmem:[%s0 + $0x18] sm:$0xff]
  %v18 = vld [vmem:[%s0 + $0x20] sm:$0xff]
  %v19 = vld [vmem:[%s0 + $0x28] sm:$0xff]
  %v20 = vld [vmem:[%s0 + $0x30] sm:$0xff]
  %v21 = vld [vmem:[%s0 + $0x38] sm:$0xff]
  %v22 = vld [vmem:[%s1] sm:$0xff]
  %v24 = vlaneseq
  %v25 = vshrl.u32 %v24, 7
  %v26 = vsub.s32 0, %v25
  %v27 = vrot.slane %v22, %v26
  %v28 = vlaneseq
  %v29 = vshrl.u32 %v28, 7
  %v30 = vsub.s32 1, %v29
  %v31 = vrot.slane %v22, %v30
  %v32 = vlaneseq
  %v33 = vshrl.u32 %v32, 7
  %v34 = vsub.s32 2, %v33
  %v35 = vrot.slane %v22, %v34
  %v36 = vlaneseq
  %v37 = vshrl.u32 %v36, 7
  %v38 = vsub.s32 3, %v37
  %v39 = vrot.slane %v22, %v38
  %v40 = vlaneseq
  %v41 = vshrl.u32 %v40, 7
  %v42 = vsub.s32 4, %v41
  %v43 = vrot.slane %v22, %v42
  %v44 = vlaneseq
  %v45 = vshrl.u32 %v44, 7
  %v46 = vsub.s32 5, %v45
  %v47 = vrot.slane %v22, %v46
  %v48 = vlaneseq
  %v49 = vshrl.u32 %v48, 7
  %v50 = vsub.s32 6, %v49
  %v51 = vrot.slane %v22, %v50
  %v52 = vlaneseq
  %v53 = vshrl.u32 %v52, 7
  %v54 = vsub.s32 7, %v53
  %v55 = vrot.slane %v22, %v54
  %v64 = vmul.f32 %v14, %v27
  %v65 = vmul.f32 %v15, %v31
  %v66 = vmul.f32 %v16, %v35
  %v67 = vmul.f32 %v17, %v39
  %v68 = vmul.f32 %v18, %v43
  %v69 = vmul.f32 %v19, %v47
  %v70 = vmul.f32 %v20, %v51
  %v71 = vmul.f32 %v21, %v55
  %v72 = vld [vmem:[%s2] sm:$0xff]
  %v74 = vlaneseq
  %v75 = vshrl.u32 %v74, 7
  %v76 = vsub.s32 0, %v75
  %v77 = vrot.slane %v72, %v76
  %v78 = vlaneseq
  %v79 = vshrl.u32 %v78, 7
  %v80 = vsub.s32 1, %v79
  %v81 = vrot.slane %v72, %v80
  %v82 = vlaneseq
  %v83 = vshrl.u32 %v82, 7
  %v84 = vsub.s32 2, %v83
  %v85 = vrot.slane %v72, %v84
  %v86 = vlaneseq
  %v87 = vshrl.u32 %v86, 7
  %v88 = vsub.s32 3, %v87
  %v89 = vrot.slane %v72, %v88
  %v90 = vlaneseq
  %v91 = vshrl.u32 %v90, 7
  %v92 = vsub.s32 4, %v91
  %v93 = vrot.slane %v72, %v92
  %v94 = vlaneseq
  %v95 = vshrl.u32 %v94, 7
  %v96 = vsub.s32 5, %v95
  %v97 = vrot.slane %v72, %v96
  %v98 = vlaneseq
  %v99 = vshrl.u32 %v98, 7
  %v100 = vsub.s32 6, %v99
  %v101 = vrot.slane %v72, %v100
  %v102 = vlaneseq
  %v103 = vshrl.u32 %v102, 7
  %v104 = vsub.s32 7, %v103
  %v105 = vrot.slane %v72, %v104
  %v114 = vadd.f32 %v64, %v77
  %v115 = vadd.f32 %v65, %v81
  %v116 = vadd.f32 %v66, %v85
  %v117 = vadd.f32 %v67, %v89
  %v118 = vadd.f32 %v68, %v93
  %v119 = vadd.f32 %v69, %v97
  %v120 = vadd.f32 %v70, %v101
  %v121 = vadd.f32 %v71, %v105
  %v122 = vmax.f32 %v114, 0.0
  %v123 = vmax.f32 %v115, 0.0
  %v124 = vmax.f32 %v116, 0.0
  %v125 = vmax.f32 %v117, 0.0
  %v126 = vmax.f32 %v118, 0.0
  %v127 = vmax.f32 %v119, 0.0
  %v128 = vmax.f32 %v120, 0.0
  %v129 = vmax.f32 %v121, 0.0
  %130 = vst [vmem:[%s3] sm:$0xff] %v122
  %131 = vst [vmem:[%s3 + $0x8] sm:$0xff] %v123
  %132 = vst [vmem:[%s3 + $0x10] sm:$0xff] %v124
  %133 = vst [vmem:[%s3 + $0x18] sm:$0xff] %v125
  %134 = vst [vmem:[%s3 + $0x20] sm:$0xff] %v126
  %135 = vst [vmem:[%s3 + $0x28] sm:$0xff] %v127
  %136 = vst [vmem:[%s3 + $0x30] sm:$0xff] %v128
  %137 = vst [vmem:[%s3 + $0x38] sm:$0xff] %v129
  // Predicated region
  $region14: #{dcgan_generator_forward.10} parent=0 // pred_check
    _
  $region15: #{dcgan_generator_forward.10} parent=0 // pred_check_branch
    %139 = sbr.rel (0) target = $region17
  $region16: #{dcgan_generator_forward.10} parent=0 // pred_region
    _
  $region17: #{dcgan_generator_forward.10} parent=0 // pred_fallthru
    _
  // Predicated region
  $region18: #{dcgan_generator_forward.10} parent=0 // pred_check
    _
  $region19: #{dcgan_generator_forward.10} parent=0 // pred_check_branch
    %141 = sbr.rel (0) target = $region21
  $region20: #{dcgan_generator_forward.10} parent=0 // pred_region
    _
  $region21: #{dcgan_generator_forward.10} parent=0 // pred_fallthru
    _

// kernel: dcgan_generator_forward.9
$region0: #{dcgan_generator_forward.9}
  #allocation0 [shape = 'u32[]', space=smem, size = 0x4, offset = 0x4, fixed_abs, tag = 'smem constant byte address 0x4 - core index']
  #allocation1 [shape = 'u32[144,128]{1,0:T(1,128)}', space=vmem, size = 0x12000, scoped, tag = 'internal scratch']
  %s0 = inlined_call_operand.vmem [shape: bf16[8,16], index: 0, kind: input, shape index: {}]
  %s1 = inlined_call_operand.vmem [shape: bf16[16,1024], index: 1, kind: input, shape index: {}]
  %s2 = inlined_call_operand.vmem [shape: f32[8,1024], index: 2, kind: output, shape index: {0}]
  %s3 = inlined_call_operand.vmem [shape: f32[8,1024], index: 3, kind: output, shape index: {1}]
  %s4 = inlined_call_operand.vmem [shape: f32[8,1024], index: 4, kind: output, shape index: {2}]
  %5 = xla_tuple %s2, %s3, %s4
  %s6 = sld [smem:[#allocation0]]
  $region34: #{dcgan_generator_forward.9} parent=0
    _
  %s8 = ssub.s32 1, %s6
  %s9 = scalar_select 0, %s8, %s6
  // Predicated region
  $region2: #{dcgan_generator_forward.9} parent=0 // pred_check
    _
  $region3: #{dcgan_generator_forward.9} parent=0 // pred_check_branch
    %11 = sbr.rel (0) target = $region5
  $region4: #{dcgan_generator_forward.9} parent=0 // pred_region
    _
  $region5: #{dcgan_generator_forward.9} parent=0 // pred_fallthru
    _
  // Predicated region
  $region6: #{dcgan_generator_forward.9} parent=0 // pred_check
    _
  $region7: #{dcgan_generator_forward.9} parent=0 // pred_check_branch
    %13 = sbr.rel (0) target = $region9
  $region8: #{dcgan_generator_forward.9} parent=0 // pred_region
    _
  $region9: #{dcgan_generator_forward.9} parent=0 // pred_fallthru
    _
  %v15 = vld [vmem:[%s0] sm:$0xf]
  %v16 = vld [vmem:[%s1] sm:$0xff]
  %v17 = vld [vmem:[%s1 + $0x8] sm:$0xff]
  %v18 = vld [vmem:[%s1 + $0x10] sm:$0xff]
  %v19 = vld [vmem:[%s1 + $0x18] sm:$0xff]
  %v20 = vld [vmem:[%s1 + $0x20] sm:$0xff]
  %v21 = vld [vmem:[%s1 + $0x28] sm:$0xff]
  %v22 = vld [vmem:[%s1 + $0x30] sm:$0xff]
  %v23 = vld [vmem:[%s1 + $0x38] sm:$0xff]
  %v32 = vunpack.c.l.b16 %v16
  %v33 = vunpack.c.h.b16 %v16
  %v34 = vunpack.c.l.b16 %v17
  %v35 = vunpack.c.h.b16 %v17
  %v36 = vunpack.c.l.b16 %v18
  %v37 = vunpack.c.h.b16 %v18
  %v38 = vunpack.c.l.b16 %v19
  %v39 = vunpack.c.h.b16 %v19
  %v40 = vunpack.c.l.b16 %v20
  %v41 = vunpack.c.h.b16 %v20
  %v42 = vunpack.c.l.b16 %v21
  %v43 = vunpack.c.h.b16 %v21
  %v44 = vunpack.c.l.b16 %v22
  %v45 = vunpack.c.h.b16 %v22
  %v46 = vunpack.c.l.b16 %v23
  %v47 = vunpack.c.h.b16 %v23
  %v48 = vpack.c.b16 %v40, %v32
  %v49 = vpack.c.b16 %v41, %v33
  %v50 = vpack.c.b16 %v42, %v34
  %v51 = vpack.c.b16 %v43, %v35
  %v52 = vpack.c.b16 %v44, %v36
  %v53 = vpack.c.b16 %v45, %v37
  %v54 = vpack.c.b16 %v46, %v38
  %v55 = vpack.c.b16 %v47, %v39
  %vm64 = vcmask 130048
  %v66 = vsel %vm64, %v15, 0
  %68 = vmatprep.subr.bf16.mxu0 0
  %69 = vmatpush1.bf16.msra.mxu0 0
  %70 = vmatprep.subr.bf16.mxu0 0
  %71 = vmatpush1.bf16.msra.mxu0 0
  %72 = vmatprep.subr.bf16.mxu0 0
  %73 = vmatpush1.bf16.msra.mxu0 0
  %74 = vmatprep.subr.bf16.mxu0 0
  %75 = vmatpush1.bf16.msra.mxu0 0
  %76 = vmatprep.subr.bf16.mxu0 0
  %77 = vmatpush1.bf16.msra.mxu0 0
  %78 = vmatprep.subr.bf16.mxu0 0
  %79 = vmatpush1.bf16.msra.mxu0 0
  %80 = vmatprep.subr.bf16.mxu0 0
  %81 = vmatpush1.bf16.msra.mxu0 0
  %82 = vmatprep.subr.bf16.mxu0 %v49
  %83 = vmatpush1.bf16.msra.mxu0 %v48
  %84 = vmatprep.subr.bf16.mxu0 0
  %85 = vmatpush2.bf16.msra.mxu0 0
  %86 = vmatprep.subr.bf16.mxu0 0
  %87 = vmatpush2.bf16.msra.mxu0 0
  %88 = vmatprep.subr.bf16.mxu0 0
  %89 = vmatpush2.bf16.msra.mxu0 0
  %90 = vmatprep.subr.bf16.mxu0 0
  %91 = vmatpush2.bf16.msra.mxu0 0
  %92 = vmatprep.subr.bf16.mxu0 0
  %93 = vmatpush2.bf16.msra.mxu0 0
  %94 = vmatprep.subr.bf16.mxu0 0
  %95 = vmatpush2.bf16.msra.mxu0 0
  %96 = vmatprep.subr.bf16.mxu0 0
  %97 = vmatpush2.bf16.msra.mxu0 0
  %98 = vmatprep.subr.bf16.mxu0 0
  %99 = vmatpush2.bf16.msra.mxu0 0
  %100 = vmatprep.mubr.bf16.mxu0 0
  %101 = vmatmul.mubr.bf16.gmra.mxu0 %v66
  %v102 = vpop.f32.mrf.mxu0
  %v103 = vadd.f32 0.0, %v102
  %v104 = vpop.f32.mrf.mxu0
  %v105 = vadd.f32 0.0, %v104
  %v106 = vpop.f32.mrf.mxu0
  %v107 = vpop.f32.mrf.mxu0
  %108 = vdwg.mxu0
  %109 = vmatprep.subr.bf16.mxu0 0
  %110 = vmatpush1.bf16.msra.mxu0 0
  %111 = vmatprep.subr.bf16.mxu0 0
  %112 = vmatpush1.bf16.msra.mxu0 0
  %113 = vmatprep.subr.bf16.mxu0 0
  %114 = vmatpush1.bf16.msra.mxu0 0
  %115 = vmatprep.subr.bf16.mxu0 0
  %116 = vmatpush1.bf16.msra.mxu0 0
  %117 = vmatprep.subr.bf16.mxu0 0
  %118 = vmatpush1.bf16.msra.mxu0 0
  %119 = vmatprep.subr.bf16.mxu0 0
  %120 = vmatpush1.bf16.msra.mxu0 0
  %121 = vmatprep.subr.bf16.mxu0 0
  %122 = vmatpush1.bf16.msra.mxu0 0
  %123 = vmatprep.subr.bf16.mxu0 %v51
  %124 = vmatpush1.bf16.msra.mxu0 %v50
  %125 = vmatprep.subr.bf16.mxu0 0
  %126 = vmatpush2.bf16.msra.mxu0 0
  %127 = vmatprep.subr.bf16.mxu0 0
  %128 = vmatpush2.bf16.msra.mxu0 0
  %129 = vmatprep.subr.bf16.mxu0 0
  %130 = vmatpush2.bf16.msra.mxu0 0
  %131 = vmatprep.subr.bf16.mxu0 0
  %132 = vmatpush2.bf16.msra.mxu0 0
  %133 = vmatprep.subr.bf16.mxu0 0
  %134 = vmatpush2.bf16.msra.mxu0 0
  %135 = vmatprep.subr.bf16.mxu0 0
  %136 = vmatpush2.bf16.msra.mxu0 0
  %137 = vmatprep.subr.bf16.mxu0 0
  %138 = vmatpush2.bf16.msra.mxu0 0
  %139 = vmatprep.subr.bf16.mxu0 0
  %140 = vmatpush2.bf16.msra.mxu0 0
  %141 = vmatprep.mubr.bf16.mxu0 0
  %142 = vmatmul.mubr.bf16.gmra.mxu0 %v66
  %v143 = vpop.f32.mrf.mxu0
  %v144 = vadd.f32 0.0, %v143
  %v145 = vpop.f32.mrf.mxu0
  %v146 = vadd.f32 0.0, %v145
  %v147 = vpop.f32.mrf.mxu0
  %v148 = vpop.f32.mrf.mxu0
  %149 = vdwg.mxu0
  %150 = vmatprep.subr.bf16.mxu0 0
  %151 = vmatpush1.bf16.msra.mxu0 0
  %152 = vmatprep.subr.bf16.mxu0 0
  %153 = vmatpush1.bf16.msra.mxu0 0
  %154 = vmatprep.subr.bf16.mxu0 0
  %155 = vmatpush1.bf16.msra.mxu0 0
  %156 = vmatprep.subr.bf16.mxu0 0
  %157 = vmatpush1.bf16.msra.mxu0 0
  %158 = vmatprep.subr.bf16.mxu0 0
  %159 = vmatpush1.bf16.msra.mxu0 0
  %160 = vmatprep.subr.bf16.mxu0 0
  %161 = vmatpush1.bf16.msra.mxu0 0
  %162 = vmatprep.subr.bf16.mxu0 0
  %163 = vmatpush1.bf16.msra.mxu0 0
  %164 = vmatprep.subr.bf16.mxu0 %v53
  %165 = vmatpush1.bf16.msra.mxu0 %v52
  %166 = vmatprep.subr.bf16.mxu0 0
  %167 = vmatpush2.bf16.msra.mxu0 0
  %168 = vmatprep.subr.bf16.mxu0 0
  %169 = vmatpush2.bf16.msra.mxu0 0
  %170 = vmatprep.subr.bf16.mxu0 0
  %171 = vmatpush2.bf16.msra.mxu0 0
  %172 = vmatprep.subr.bf16.mxu0 0
  %173 = vmatpush2.bf16.msra.mxu0 0
  %174 = vmatprep.subr.bf16.mxu0 0
  %175 = vmatpush2.bf16.msra.mxu0 0
  %176 = vmatprep.subr.bf16.mxu0 0
  %177 = vmatpush2.bf16.msra.mxu0 0
  %178 = vmatprep.subr.bf16.mxu0 0
  %179 = vmatpush2.bf16.msra.mxu0 0
  %180 = vmatprep.subr.bf16.mxu0 0
  %181 = vmatpush2.bf16.msra.mxu0 0
  %182 = vmatprep.mubr.bf16.mxu0 0
  %183 = vmatmul.mubr.bf16.gmra.mxu0 %v66
  %v184 = vpop.f32.mrf.mxu0
  %v185 = vadd.f32 0.0, %v184
  %v186 = vpop.f32.mrf.mxu0
  %v187 = vadd.f32 0.0, %v186
  %v188 = vpop.f32.mrf.mxu0
  %v189 = vpop.f32.mrf.mxu0
  %190 = vdwg.mxu0
  %191 = vmatprep.subr.bf16.mxu0 0
  %192 = vmatpush1.bf16.msra.mxu0 0
  %193 = vmatprep.subr.bf16.mxu0 0
  %194 = vmatpush1.bf16.msra.mxu0 0
  %195 = vmatprep.subr.bf16.mxu0 0
  %196 = vmatpush1.bf16.msra.mxu0 0
  %197 = vmatprep.subr.bf16.mxu0 0
  %198 = vmatpush1.bf16.msra.mxu0 0
  %199 = vmatprep.subr.bf16.mxu0 0
  %200 = vmatpush1.bf16.msra.mxu0 0
  %201 = vmatprep.subr.bf16.mxu0 0
  %202 = vmatpush1.bf16.msra.mxu0 0
  %203 = vmatprep.subr.bf16.mxu0 0
  %204 = vmatpush1.bf16.msra.mxu0 0
  %205 = vmatprep.subr.bf16.mxu0 %v55
  %206 = vmatpush1.bf16.msra.mxu0 %v54
  %207 = vmatprep.subr.bf16.mxu0 0
  %208 = vmatpush2.bf16.msra.mxu0 0
  %209 = vmatprep.subr.bf16.mxu0 0
  %210 = vmatpush2.bf16.msra.mxu0 0
  %211 = vmatprep.subr.bf16.mxu0 0
  %212 = vmatpush2.bf16.msra.mxu0 0
  %213 = vmatprep.subr.bf16.mxu0 0
  %214 = vmatpush2.bf16.msra.mxu0 0
  %215 = vmatprep.subr.bf16.mxu0 0
  %216 = vmatpush2.bf16.msra.mxu0 0
  %217 = vmatprep.subr.bf16.mxu0 0
  %218 = vmatpush2.bf16.msra.mxu0 0
  %219 = vmatprep.subr.bf16.mxu0 0
  %220 = vmatpush2.bf16.msra.mxu0 0
  %221 = vmatprep.subr.bf16.mxu0 0
  %222 = vmatpush2.bf16.msra.mxu0 0
  %223 = vmatprep.mubr.bf16.mxu0 0
  %224 = vmatmul.mubr.bf16.gmra.mxu0 %v66
  %v225 = vpop.f32.mrf.mxu0
  %v226 = vadd.f32 0.0, %v225
  %v227 = vpop.f32.mrf.mxu0
  %v228 = vadd.f32 0.0, %v227
  %v229 = vpop.f32.mrf.mxu0
  %v230 = vpop.f32.mrf.mxu0
  %231 = vdwg.mxu0
  %232 = vst [vmem:[%s2] sm:$0xff] %v103
  %233 = vst [vmem:[%s2 + $0x8] sm:$0xff] %v105
  %234 = vst [vmem:[%s2 + $0x10] sm:$0xff] %v144
  %235 = vst [vmem:[%s2 + $0x18] sm:$0xff] %v146
  %236 = vst [vmem:[%s2 + $0x20] sm:$0xff] %v185
  %237 = vst [vmem:[%s2 + $0x28] sm:$0xff] %v187
  %238 = vst [vmem:[%s2 + $0x30] sm:$0xff] %v226
  %239 = vst [vmem:[%s2 + $0x38] sm:$0xff] %v228
  %v240 = vrot.slane %v103, 4
  %v241 = vadd.f32 %v103, %v240
  %v242 = vrot.slane %v241, 2
  %v243 = vadd.f32 %v241, %v242
  %v244 = vrot.slane %v243, 1
  %v245 = vadd.f32 %v243, %v244
  %v246 = vrot.slane %v105, 4
  %v247 = vadd.f32 %v105, %v246
  %v248 = vrot.slane %v247, 2
  %v249 = vadd.f32 %v247, %v248
  %v250 = vrot.slane %v249, 1
  %v251 = vadd.f32 %v249, %v250
  %v252 = vrot.slane %v144, 4
  %v253 = vadd.f32 %v144, %v252
  %v254 = vrot.slane %v253, 2
  %v255 = vadd.f32 %v253, %v254
  %v256 = vrot.slane %v255, 1
  %v257 = vadd.f32 %v255, %v256
  %v258 = vrot.slane %v146, 4
  %v259 = vadd.f32 %v146, %v258
  %v260 = vrot.slane %v259, 2
  %v261 = vadd.f32 %v259, %v260
  %v262 = vrot.slane %v261, 1
  %v263 = vadd.f32 %v261, %v262
  %v264 = vrot.slane %v185, 4
  %v265 = vadd.f32 %v185, %v264
  %v266 = vrot.slane %v265, 2
  %v267 = vadd.f32 %v265, %v266
  %v268 = vrot.slane %v267, 1
  %v269 = vadd.f32 %v267, %v268
  %v270 = vrot.slane %v187, 4
  %v271 = vadd.f32 %v187, %v270
  %v272 = vrot.slane %v271, 2
  %v273 = vadd.f32 %v271, %v272
  %v274 = vrot.slane %v273, 1
  %v275 = vadd.f32 %v273, %v274
  %v276 = vrot.slane %v226, 4
  %v277 = vadd.f32 %v226, %v276
  %v278 = vrot.slane %v277, 2
  %v279 = vadd.f32 %v277, %v278
  %v280 = vrot.slane %v279, 1
  %v281 = vadd.f32 %v279, %v280
  %v282 = vrot.slane %v228, 4
  %v283 = vadd.f32 %v228, %v282
  %v284 = vrot.slane %v283, 2
  %v285 = vadd.f32 %v283, %v284
  %v286 = vrot.slane %v285, 1
  %v287 = vadd.f32 %v285, %v286
  %v288 = vmul.f32 %v103, %v103
  %v289 = vmul.f32 %v105, %v105
  %v290 = vmul.f32 %v144, %v144
  %v291 = vmul.f32 %v146, %v146
  %v292 = vmul.f32 %v185, %v185
  %v293 = vmul.f32 %v187, %v187
  %v294 = vmul.f32 %v226, %v226
  %v295 = vmul.f32 %v228, %v228
  %v296 = vrot.slane %v288, 4
  %v297 = vadd.f32 %v288, %v296
  %v298 = vrot.slane %v297, 2
  %v299 = vadd.f32 %v297, %v298
  %v300 = vrot.slane %v299, 1
  %v301 = vadd.f32 %v299, %v300
  %v302 = vrot.slane %v289, 4
  %v303 = vadd.f32 %v289, %v302
  %v304 = vrot.slane %v303, 2
  %v305 = vadd.f32 %v303, %v304
  %v306 = vrot.slane %v305, 1
  %v307 = vadd.f32 %v305, %v306
  %v308 = vrot.slane %v290, 4
  %v309 = vadd.f32 %v290, %v308
  %v310 = vrot.slane %v309, 2
  %v311 = vadd.f32 %v309, %v310
  %v312 = vrot.slane %v311, 1
  %v313 = vadd.f32 %v311, %v312
  %v314 = vrot.slane %v291, 4
  %v315 = vadd.f32 %v291, %v314
  %v316 = vrot.slane %v315, 2
  %v317 = vadd.f32 %v315, %v316
  %v318 = vrot.slane %v317, 1
  %v319 = vadd.f32 %v317, %v318
  %v320 = vrot.slane %v292, 4
  %v321 = vadd.f32 %v292, %v320
  %v322 = vrot.slane %v321, 2
  %v323 = vadd.f32 %v321, %v322
  %v324 = vrot.slane %v323, 1
  %v325 = vadd.f32 %v323, %v324
  %v326 = vrot.slane %v293, 4
  %v327 = vadd.f32 %v293, %v326
  %v328 = vrot.slane %v327, 2
  %v329 = vadd.f32 %v327, %v328
  %v330 = vrot.slane %v329, 1
  %v331 = vadd.f32 %v329, %v330
  %v332 = vrot.slane %v294, 4
  %v333 = vadd.f32 %v294, %v332
  %v334 = vrot.slane %v333, 2
  %v335 = vadd.f32 %v333, %v334
  %v336 = vrot.slane %v335, 1
  %v337 = vadd.f32 %v335, %v336
  %v338 = vrot.slane %v295, 4
  %v339 = vadd.f32 %v295, %v338
  %v340 = vrot.slane %v339, 2
  %v341 = vadd.f32 %v339, %v340
  %v342 = vrot.slane %v341, 1
  %v343 = vadd.f32 %v341, %v342
  %344 = vst [vmem:[%s3] sm:$0xff] %v245
  %345 = vst [vmem:[%s3 + $0x8] sm:$0xff] %v251
  %346 = vst [vmem:[%s3 + $0x10] sm:$0xff] %v257
  %347 = vst [vmem:[%s3 + $0x18] sm:$0xff] %v263
  %348 = vst [vmem:[%s3 + $0x20] sm:$0xff] %v269
  %349 = vst [vmem:[%s3 + $0x28] sm:$0xff] %v275
  %350 = vst [vmem:[%s3 + $0x30] sm:$0xff] %v281
  %351 = vst [vmem:[%s3 + $0x38] sm:$0xff] %v287
  %352 = vst [vmem:[%s4] sm:$0xff] %v301
  %353 = vst [vmem:[%s4 + $0x8] sm:$0xff] %v307
  %354 = vst [vmem:[%s4 + $0x10] sm:$0xff] %v313
  %355 = vst [vmem:[%s4 + $0x18] sm:$0xff] %v319
  %356 = vst [vmem:[%s4 + $0x20] sm:$0xff] %v325
  %357 = vst [vmem:[%s4 + $0x28] sm:$0xff] %v331
  %358 = vst [vmem:[%s4 + $0x30] sm:$0xff] %v337
  %359 = vst [vmem:[%s4 + $0x38] sm:$0xff] %v343
  // Predicated region
  $region10: #{dcgan_generator_forward.9} parent=0 // pred_check
    _
  $region11: #{dcgan_generator_forward.9} parent=0 // pred_check_branch
    %361 = sbr.rel (0) target = $region13
  $region12: #{dcgan_generator_forward.9} parent=0 // pred_region
    _
  $region13: #{dcgan_generator_forward.9} parent=0 // pred_fallthru
    _
  // Predicated region
  $region14: #{dcgan_generator_forward.9} parent=0 // pred_check
    _
  $region15: #{dcgan_generator_forward.9} parent=0 // pred_check_branch
    %363 = sbr.rel (0) target = $region17
  $region16: #{dcgan_generator_forward.9} parent=0 // pred_region
    _
  $region17: #{dcgan_generator_forward.9} parent=0 // pred_fallthru
    _
  // Predicated region
  $region18: #{dcgan_generator_forward.9} parent=0 // pred_check
    _
  $region19: #{dcgan_generator_forward.9} parent=0 // pred_check_branch
    %365 = sbr.rel (0) target = $region21
  $region20: #{dcgan_generator_forward.9} parent=0 // pred_region
    _
  $region21: #{dcgan_generator_forward.9} parent=0 // pred_fallthru
    _
  // Predicated region
  $region22: #{dcgan_generator_forward.9} parent=0 // pred_check
    _
  $region23: #{dcgan_generator_forward.9} parent=0 // pred_check_branch
    %367 = sbr.rel (0) target = $region25
  $region24: #{dcgan_generator_forward.9} parent=0 // pred_region
    _
  $region25: #{dcgan_generator_forward.9} parent=0 // pred_fallthru
    _
  // Predicated region
  $region26: #{dcgan_generator_forward.9} parent=0 // pred_check
    _
  $region27: #{dcgan_generator_forward.9} parent=0 // pred_check_branch
    %369 = sbr.rel (0) target = $region29
  $region28: #{dcgan_generator_forward.9} parent=0 // pred_region
    _
  $region29: #{dcgan_generator_forward.9} parent=0 // pred_fallthru
    _
  // Predicated region
  $region30: #{dcgan_generator_forward.9} parent=0 // pred_check
    _
  $region31: #{dcgan_generator_forward.9} parent=0 // pred_check_branch
    %371 = sbr.rel (0) target = $region33
  $region32: #{dcgan_generator_forward.9} parent=0 // pred_region
    _
  $region33: #{dcgan_generator_forward.9} parent=0 // pred_fallthru
    _

// kernel: dcgan_generator_forward.11
$region0: #{dcgan_generator_forward.11}
  #allocation0 [shape = 'u32[]', space=smem, size = 0x4, offset = 0x4, fixed_abs, tag = 'smem constant byte address 0x4 - core index']
  #allocation1 [shape = 'u32[144,128]{1,0:T(1,128)}', space=vmem, size = 0x12000, scoped, tag = 'internal scratch']
  %s0 = inlined_call_operand.vmem [shape: bf16[32,576], index: 0, kind: input, shape index: {}]
  %s1 = inlined_call_operand.vmem [shape: bf16[576,128], index: 1, kind: input, shape index: {}]
  %s2 = inlined_call_operand.vmem [shape: f32[32,128], index: 2, kind: output, shape index: {0}]
  %s3 = inlined_call_operand.vmem [shape: f32[8,128], index: 3, kind: output, shape index: {1}]
  %s4 = inlined_call_operand.vmem [shape: f32[8,128], index: 4, kind: output, shape index: {2}]
  %5 = xla_tuple %s2, %s3, %s4
  %s6 = sld [smem:[#allocation0]]
  $region34: #{dcgan_generator_forward.11} parent=0
    _
  %s8 = ssub.s32 1, %s6
  %s9 = scalar_select 0, %s8, %s6
  // Predicated region
  $region2: #{dcgan_generator_forward.11} parent=0 // pred_check
    _
  $region3: #{dcgan_generator_forward.11} parent=0 // pred_check_branch
    %11 = sbr.rel (0) target = $region5
  $region4: #{dcgan_generator_forward.11} parent=0 // pred_region
    _
  $region5: #{dcgan_generator_forward.11} parent=0 // pred_fallthru
    _
  // Predicated region
  $region6: #{dcgan_generator_forward.11} parent=0 // pred_check
    _
  $region7: #{dcgan_generator_forward.11} parent=0 // pred_check_branch
    %13 = sbr.rel (0) target = $region9
  $region8: #{dcgan_generator_forward.11} parent=0 // pred_region
    _
  $region9: #{dcgan_generator_forward.11} parent=0 // pred_fallthru
    _
  %v15 = vld [vmem:[%s0] sm:$0xff]
  %v16 = vld [vmem:[%s0 + $0x8] sm:$0xff]
  %v17 = vld [vmem:[%s0 + $0x10] sm:$0xf]
  %v18 = vld [vmem:[%s0 + $0x14] sm:$0xff]
  %v19 = vld [vmem:[%s0 + $0x1c] sm:$0xff]
  %v20 = vld [vmem:[%s0 + $0x24] sm:$0xf]
  %v21 = vld [vmem:[%s0 + $0x28] sm:$0xff]
  %v22 = vld [vmem:[%s0 + $0x30] sm:$0xff]
  %v23 = vld [vmem:[%s0 + $0x38] sm:$0xf]
  %v24 = vld [vmem:[%s0 + $0x3c] sm:$0xff]
  %v25 = vld [vmem:[%s0 + $0x44] sm:$0xff]
  %v26 = vld [vmem:[%s0 + $0x4c] sm:$0xf]
  %v27 = vld [vmem:[%s1] sm:$0xf]
  %v28 = vld [vmem:[%s1 + $0x4] sm:$0xf]
  %v29 = vld [vmem:[%s1 + $0x8] sm:$0xf]
  %v30 = vld [vmem:[%s1 + $0xc] sm:$0xf]
  %v31 = vld [vmem:[%s1 + $0x10] sm:$0xf]
  %v32 = vld [vmem:[%s1 + $0x14] sm:$0xf]
  %v33 = vld [vmem:[%s1 + $0x18] sm:$0xf]
  %v34 = vld [vmem:[%s1 + $0x1c] sm:$0xf]
  %v35 = vld [vmem:[%s1 + $0x20] sm:$0xf]
  %v36 = vld [vmem:[%s1 + $0x24] sm:$0xf]
  %v37 = vld [vmem:[%s1 + $0x28] sm:$0xf]
  %v38 = vld [vmem:[%s1 + $0x2c] sm:$0xf]
  %v39 = vld [vmem:[%s1 + $0x30] sm:$0xf]
  %v40 = vld [vmem:[%s1 + $0x34] sm:$0xf]
  %v41 = vld [vmem:[%s1 + $0x38] sm:$0xf]
  %v42 = vld [vmem:[%s1 + $0x3c] sm:$0xf]
  %v43 = vld [vmem:[%s1 + $0x40] sm:$0xf]
  %v44 = vld [vmem:[%s1 + $0x44] sm:$0xf]
  %v45 = vld [vmem:[%s1 + $0x48] sm:$0xf]
  %v46 = vld [vmem:[%s1 + $0x4c] sm:$0xf]
  %v47 = vld [vmem:[%s1 + $0x50] sm:$0xf]
  %v48 = vld [vmem:[%s1 + $0x54] sm:$0xf]
  %v49 = vld [vmem:[%s1 + $0x58] sm:$0xf]
  %v50 = vld [vmem:[%s1 + $0x5c] sm:$0xf]
  %v51 = vld [vmem:[%s1 + $0x60] sm:$0xf]
  %v52 = vld [vmem:[%s1 + $0x64] sm:$0xf]
  %v53 = vld [vmem:[%s1 + $0x68] sm:$0xf]
  %v54 = vld [vmem:[%s1 + $0x6c] sm:$0xf]
  %v55 = vld [vmem:[%s1 + $0x70] sm:$0xf]
  %v56 = vld [vmem:[%s1 + $0x74] sm:$0xf]
  %v57 = vld [vmem:[%s1 + $0x78] sm:$0xf]
  %v58 = vld [vmem:[%s1 + $0x7c] sm:$0xf]
  %v59 = vld [vmem:[%s1 + $0x80] sm:$0xf]
  %v60 = vld [vmem:[%s1 + $0x84] sm:$0xf]
  %v61 = vld [vmem:[%s1 + $0x88] sm:$0xf]
  %v62 = vld [vmem:[%s1 + $0x8c] sm:$0xf]
  %v63 = vld [vmem:[%s1 + $0x90] sm:$0xf]
  %v64 = vld [vmem:[%s1 + $0x94] sm:$0xf]
  %v65 = vld [vmem:[%s1 + $0x98] sm:$0xf]
  %v66 = vld [vmem:[%s1 + $0x9c] sm:$0xf]
  %v67 = vld [vmem:[%s1 + $0xa0] sm:$0xf]
  %v68 = vld [vmem:[%s1 + $0xa4] sm:$0xf]
  %v69 = vld [vmem:[%s1 + $0xa8] sm:$0xf]
  %v70 = vld [vmem:[%s1 + $0xac] sm:$0xf]
  %v71 = vld [vmem:[%s1 + $0xb0] sm:$0xf]
  %v72 = vld [vmem:[%s1 + $0xb4] sm:$0xf]
  %v73 = vld [vmem:[%s1 + $0xb8] sm:$0xf]
  %v74 = vld [vmem:[%s1 + $0xbc] sm:$0xf]
  %v75 = vld [vmem:[%s1 + $0xc0] sm:$0xf]
  %v76 = vld [vmem:[%s1 + $0xc4] sm:$0xf]
  %v77 = vld [vmem:[%s1 + $0xc8] sm:$0xf]
  %v78 = vld [vmem:[%s1 + $0xcc] sm:$0xf]
  %v79 = vld [vmem:[%s1 + $0xd0] sm:$0xf]
  %v80 = vld [vmem:[%s1 + $0xd4] sm:$0xf]
  %v81 = vld [vmem:[%s1 + $0xd8] sm:$0xf]
  %v82 = vld [vmem:[%s1 + $0xdc] sm:$0xf]
  %v83 = vld [vmem:[%s1 + $0xe0] sm:$0xf]
  %v84 = vld [vmem:[%s1 + $0xe4] sm:$0xf]
  %v85 = vld [vmem:[%s1 + $0xe8] sm:$0xf]
  %v86 = vld [vmem:[%s1 + $0xec] sm:$0xf]
  %v87 = vld [vmem:[%s1 + $0xf0] sm:$0xf]
  %v88 = vld [vmem:[%s1 + $0xf4] sm:$0xf]
  %v89 = vld [vmem:[%s1 + $0xf8] sm:$0xf]
  %v90 = vld [vmem:[%s1 + $0xfc] sm:$0xf]
  %v91 = vld [vmem:[%s1 + $0x100] sm:$0xf]
  %v92 = vld [vmem:[%s1 + $0x104] sm:$0xf]
  %v93 = vld [vmem:[%s1 + $0x108] sm:$0xf]
  %v94 = vld [vmem:[%s1 + $0x10c] sm:$0xf]
  %v95 = vld [vmem:[%s1 + $0x110] sm:$0xf]
  %v96 = vld [vmem:[%s1 + $0x114] sm:$0xf]
  %v97 = vld [vmem:[%s1 + $0x118] sm:$0xf]
  %v98 = vld [vmem:[%s1 + $0x11c] sm:$0xf]
  %v111 = vunpack.c.l.b16 %v15
  %v112 = vunpack.c.h.b16 %v15
  %v113 = vunpack.c.l.b16 %v16
  %v114 = vunpack.c.h.b16 %v16
  %v115 = vunpack.c.l.b16 %v17
  %v116 = vunpack.c.l.b16 %v18
  %v117 = vunpack.c.h.b16 %v18
  %v118 = vunpack.c.l.b16 %v19
  %v119 = vunpack.c.h.b16 %v19
  %v120 = vunpack.c.l.b16 %v20
  %v121 = vunpack.c.l.b16 %v21
  %v122 = vunpack.c.h.b16 %v21
  %v123 = vunpack.c.l.b16 %v22
  %v124 = vunpack.c.h.b16 %v22
  %v125 = vunpack.c.l.b16 %v23
  %v126 = vunpack.c.l.b16 %v24
  %v127 = vunpack.c.h.b16 %v24
  %v128 = vunpack.c.l.b16 %v25
  %v129 = vunpack.c.h.b16 %v25
  %v130 = vunpack.c.l.b16 %v26
  %v131 = vpack.c.b16 %v116, %v111
  %v132 = vpack.c.b16 %v117, %v112
  %v133 = vpack.c.b16 %v118, %v113
  %v134 = vpack.c.b16 %v119, %v114
  %v135 = vpack.c.b16 %v120, %v115
  %v136 = vpack.c.b16 %v126, %v121
  %v137 = vpack.c.b16 %v127, %v122
  %v138 = vpack.c.b16 %v128, %v123
  %v139 = vpack.c.b16 %v129, %v124
  %v140 = vpack.c.b16 %v130, %v125
  %v221 = vunpack.c.l.b16 %v27
  %v222 = vunpack.c.l.b16 %v28
  %v223 = vunpack.c.l.b16 %v29
  %v224 = vunpack.c.l.b16 %v30
  %v225 = vunpack.c.l.b16 %v31
  %v226 = vunpack.c.l.b16 %v32
  %v227 = vunpack.c.l.b16 %v33
  %v228 = vunpack.c.l.b16 %v34
  %v229 = vunpack.c.l.b16 %v35
  %v230 = vunpack.c.l.b16 %v36
  %v231 = vunpack.c.l.b16 %v37
  %v232 = vunpack.c.l.b16 %v38
  %v233 = vunpack.c.l.b16 %v39
  %v234 = vunpack.c.l.b16 %v40
  %v235 = vunpack.c.l.b16 %v41
  %v236 = vunpack.c.l.b16 %v42
  %v237 = vunpack.c.l.b16 %v43
  %v238 = vunpack.c.l.b16 %v44
  %v239 = vunpack.c.l.b16 %v45
  %v240 = vunpack.c.l.b16 %v46
  %v241 = vunpack.c.l.b16 %v47
  %v242 = vunpack.c.l.b16 %v48
  %v243 = vunpack.c.l.b16 %v49
  %v244 = vunpack.c.l.b16 %v50
  %v245 = vunpack.c.l.b16 %v51
  %v246 = vunpack.c.l.b16 %v52
  %v247 = vunpack.c.l.b16 %v53
  %v248 = vunpack.c.l.b16 %v54
  %v249 = vunpack.c.l.b16 %v55
  %v250 = vunpack.c.l.b16 %v56
  %v251 = vunpack.c.l.b16 %v57
  %v252 = vunpack.c.l.b16 %v58
  %v253 = vunpack.c.l.b16 %v59
  %v254 = vunpack.c.l.b16 %v60
  %v255 = vunpack.c.l.b16 %v61
  %v256 = vunpack.c.l.b16 %v62
  %v257 = vunpack.c.l.b16 %v63
  %v258 = vunpack.c.l.b16 %v64
  %v259 = vunpack.c.l.b16 %v65
  %v260 = vunpack.c.l.b16 %v66
  %v261 = vunpack.c.l.b16 %v67
  %v262 = vunpack.c.l.b16 %v68
  %v263 = vunpack.c.l.b16 %v69
  %v264 = vunpack.c.l.b16 %v70
  %v265 = vunpack.c.l.b16 %v71
  %v266 = vunpack.c.l.b16 %v72
  %v267 = vunpack.c.l.b16 %v73
  %v268 = vunpack.c.l.b16 %v74
  %v269 = vunpack.c.l.b16 %v75
  %v270 = vunpack.c.l.b16 %v76
  %v271 = vunpack.c.l.b16 %v77
  %v272 = vunpack.c.l.b16 %v78
  %v273 = vunpack.c.l.b16 %v79
  %v274 = vunpack.c.l.b16 %v80
  %v275 = vunpack.c.l.b16 %v81
  %v276 = vunpack.c.l.b16 %v82
  %v277 = vunpack.c.l.b16 %v83
  %v278 = vunpack.c.l.b16 %v84
  %v279 = vunpack.c.l.b16 %v85
  %v280 = vunpack.c.l.b16 %v86
  %v281 = vunpack.c.l.b16 %v87
  %v282 = vunpack.c.l.b16 %v88
  %v283 = vunpack.c.l.b16 %v89
  %v284 = vunpack.c.l.b16 %v90
  %v285 = vunpack.c.l.b16 %v91
  %v286 = vunpack.c.l.b16 %v92
  %v287 = vunpack.c.l.b16 %v93
  %v288 = vunpack.c.l.b16 %v94
  %v289 = vunpack.c.l.b16 %v95
  %v290 = vunpack.c.l.b16 %v96
  %v291 = vunpack.c.l.b16 %v97
  %v292 = vunpack.c.l.b16 %v98
  %v293 = vpack.c.b16 %v222, %v221
  %v294 = vpack.c.b16 %v224, %v223
  %v295 = vpack.c.b16 %v226, %v225
  %v296 = vpack.c.b16 %v228, %v227
  %v297 = vpack.c.b16 %v230, %v229
  %v298 = vpack.c.b16 %v232, %v231
  %v299 = vpack.c.b16 %v234, %v233
  %v300 = vpack.c.b16 %v236, %v235
  %v301 = vpack.c.b16 %v238, %v237
  %v302 = vpack.c.b16 %v240, %v239
  %v303 = vpack.c.b16 %v242, %v241
  %v304 = vpack.c.b16 %v244, %v243
  %v305 = vpack.c.b16 %v246, %v245
  %v306 = vpack.c.b16 %v248, %v247
  %v307 = vpack.c.b16 %v250, %v249
  %v308 = vpack.c.b16 %v252, %v251
  %v309 = vpack.c.b16 %v254, %v253
  %v310 = vpack.c.b16 %v256, %v255
  %v311 = vpack.c.b16 %v258, %v257
  %v312 = vpack.c.b16 %v260, %v259
  %v313 = vpack.c.b16 %v262, %v261
  %v314 = vpack.c.b16 %v264, %v263
  %v315 = vpack.c.b16 %v266, %v265
  %v316 = vpack.c.b16 %v268, %v267
  %v317 = vpack.c.b16 %v270, %v269
  %v318 = vpack.c.b16 %v272, %v271
  %v319 = vpack.c.b16 %v274, %v273
  %v320 = vpack.c.b16 %v276, %v275
  %v321 = vpack.c.b16 %v278, %v277
  %v322 = vpack.c.b16 %v280, %v279
  %v323 = vpack.c.b16 %v282, %v281
  %v324 = vpack.c.b16 %v284, %v283
  %v325 = vpack.c.b16 %v286, %v285
  %v326 = vpack.c.b16 %v288, %v287
  %v327 = vpack.c.b16 %v290, %v289
  %v328 = vpack.c.b16 %v292, %v291
  %vm365 = vcmask 523264
  %v367 = vsel %vm365, %v135, 0
  %v370 = vsel %vm365, %v140, 0
  %372 = vmatprep.subr.bf16.mxu0 0
  %373 = vmatpush1.bf16.msra.mxu0 %v300
  %374 = vmatprep.subr.bf16.mxu0 0
  %375 = vmatpush1.bf16.msra.mxu0 %v299
  %376 = vmatprep.subr.bf16.mxu0 0
  %377 = vmatpush1.bf16.msra.mxu0 %v298
  %378 = vmatprep.subr.bf16.mxu0 0
  %379 = vmatpush1.bf16.msra.mxu0 %v297
  %380 = vmatprep.subr.bf16.mxu0 0
  %381 = vmatpush1.bf16.msra.mxu0 %v296
  %382 = vmatprep.subr.bf16.mxu0 0
  %383 = vmatpush1.bf16.msra.mxu0 %v295
  %384 = vmatprep.subr.bf16.mxu0 0
  %385 = vmatpush1.bf16.msra.mxu0 %v294
  %386 = vmatprep.subr.bf16.mxu0 0
  %387 = vmatpush1.bf16.msra.mxu0 %v293
  %388 = vmatprep.subr.bf16.mxu0 0
  %389 = vmatpush2.bf16.msra.mxu0 %v308
  %390 = vmatprep.subr.bf16.mxu0 0
  %391 = vmatpush2.bf16.msra.mxu0 %v307
  %392 = vmatprep.subr.bf16.mxu0 0
  %393 = vmatpush2.bf16.msra.mxu0 %v306
  %394 = vmatprep.subr.bf16.mxu0 0
  %395 = vmatpush2.bf16.msra.mxu0 %v305
  %396 = vmatprep.subr.bf16.mxu0 0
  %397 = vmatpush2.bf16.msra.mxu0 %v304
  %398 = vmatprep.subr.bf16.mxu0 0
  %399 = vmatpush2.bf16.msra.mxu0 %v303
  %400 = vmatprep.subr.bf16.mxu0 0
  %401 = vmatpush2.bf16.msra.mxu0 %v302
  %402 = vmatprep.subr.bf16.mxu0 0
  %403 = vmatpush2.bf16.msra.mxu0 %v301
  %404 = vmatprep.mubr.bf16.mxu0 %v132
  %405 = vmatmul.mubr.bf16.gmra.mxu0 %v131
  %v406 = vpop.f32.mrf.mxu0
  %v407 = vadd.f32 0.0, %v406
  %v408 = vpop.f32.mrf.mxu0
  %v409 = vpop.f32.mrf.mxu0
  %v410 = vadd.f32 0.0, %v409
  %v411 = vpop.f32.mrf.mxu0
  %412 = vmatprep.mubr.bf16.mxu0 %v137
  %413 = vmatmul.mubr.bf16.gmra.mxu0 %v136
  %v414 = vpop.f32.mrf.mxu0
  %v415 = vadd.f32 0.0, %v414
  %v416 = vpop.f32.mrf.mxu0
  %v417 = vpop.f32.mrf.mxu0
  %v418 = vadd.f32 0.0, %v417
  %v419 = vpop.f32.mrf.mxu0
  %420 = vdwg.mxu0
  %421 = vmatprep.subr.bf16.mxu0 0
  %422 = vmatpush1.bf16.msra.mxu0 %v316
  %423 = vmatprep.subr.bf16.mxu0 0
  %424 = vmatpush1.bf16.msra.mxu0 %v315
  %425 = vmatprep.subr.bf16.mxu0 0
  %426 = vmatpush1.bf16.msra.mxu0 %v314
  %427 = vmatprep.subr.bf16.mxu0 0
  %428 = vmatpush1.bf16.msra.mxu0 %v313
  %429 = vmatprep.subr.bf16.mxu0 0
  %430 = vmatpush1.bf16.msra.mxu0 %v312
  %431 = vmatprep.subr.bf16.mxu0 0
  %432 = vmatpush1.bf16.msra.mxu0 %v311
  %433 = vmatprep.subr.bf16.mxu0 0
  %434 = vmatpush1.bf16.msra.mxu0 %v310
  %435 = vmatprep.subr.bf16.mxu0 0
  %436 = vmatpush1.bf16.msra.mxu0 %v309
  %437 = vmatprep.subr.bf16.mxu0 0
  %438 = vmatpush2.bf16.msra.mxu0 %v324
  %439 = vmatprep.subr.bf16.mxu0 0
  %440 = vmatpush2.bf16.msra.mxu0 %v323
  %441 = vmatprep.subr.bf16.mxu0 0
  %442 = vmatpush2.bf16.msra.mxu0 %v322
  %443 = vmatprep.subr.bf16.mxu0 0
  %444 = vmatpush2.bf16.msra.mxu0 %v321
  %445 = vmatprep.subr.bf16.mxu0 0
  %446 = vmatpush2.bf16.msra.mxu0 %v320
  %447 = vmatprep.subr.bf16.mxu0 0
  %448 = vmatpush2.bf16.msra.mxu0 %v319
  %449 = vmatprep.subr.bf16.mxu0 0
  %450 = vmatpush2.bf16.msra.mxu0 %v318
  %451 = vmatprep.subr.bf16.mxu0 0
  %452 = vmatpush2.bf16.msra.mxu0 %v317
  %453 = vmatprep.mubr.bf16.mxu0 %v134
  %454 = vmatmul.mubr.bf16.gmra.mxu0 %v133
  %v455 = vpop.f32.mrf.mxu0
  %v456 = vadd.f32 %v407, %v455
  %v457 = vpop.f32.mrf.mxu0
  %v458 = vpop.f32.mrf.mxu0
  %v459 = vadd.f32 %v410, %v458
  %v460 = vpop.f32.mrf.mxu0
  %461 = vmatprep.mubr.bf16.mxu0 %v139
  %462 = vmatmul.mubr.bf16.gmra.mxu0 %v138
  %v463 = vpop.f32.mrf.mxu0
  %v464 = vadd.f32 %v415, %v463
  %v465 = vpop.f32.mrf.mxu0
  %v466 = vpop.f32.mrf.mxu0
  %v467 = vadd.f32 %v418, %v466
  %v468 = vpop.f32.mrf.mxu0
  %469 = vdwg.mxu0
  %470 = vmatprep.subr.bf16.mxu0 0
  %471 = vmatpush1.bf16.msra.mxu0 0
  %472 = vmatprep.subr.bf16.mxu0 0
  %473 = vmatpush1.bf16.msra.mxu0 0
  %474 = vmatprep.subr.bf16.mxu0 0
  %475 = vmatpush1.bf16.msra.mxu0 0
  %476 = vmatprep.subr.bf16.mxu0 0
  %477 = vmatpush1.bf16.msra.mxu0 0
  %478 = vmatprep.subr.bf16.mxu0 0
  %479 = vmatpush1.bf16.msra.mxu0 %v328
  %480 = vmatprep.subr.bf16.mxu0 0
  %481 = vmatpush1.bf16.msra.mxu0 %v327
  %482 = vmatprep.subr.bf16.mxu0 0
  %483 = vmatpush1.bf16.msra.mxu0 %v326
  %484 = vmatprep.subr.bf16.mxu0 0
  %485 = vmatpush1.bf16.msra.mxu0 %v325
  %486 = vmatprep.subr.bf16.mxu0 0
  %487 = vmatpush2.bf16.msra.mxu0 0
  %488 = vmatprep.subr.bf16.mxu0 0
  %489 = vmatpush2.bf16.msra.mxu0 0
  %490 = vmatprep.subr.bf16.mxu0 0
  %491 = vmatpush2.bf16.msra.mxu0 0
  %492 = vmatprep.subr.bf16.mxu0 0
  %493 = vmatpush2.bf16.msra.mxu0 0
  %494 = vmatprep.subr.bf16.mxu0 0
  %495 = vmatpush2.bf16.msra.mxu0 0
  %496 = vmatprep.subr.bf16.mxu0 0
  %497 = vmatpush2.bf16.msra.mxu0 0
  %498 = vmatprep.subr.bf16.mxu0 0
  %499 = vmatpush2.bf16.msra.mxu0 0
  %500 = vmatprep.subr.bf16.mxu0 0
  %501 = vmatpush2.bf16.msra.mxu0 0
  %502 = vmatprep.mubr.bf16.mxu0 0
  %503 = vmatmul.mubr.bf16.gmra.mxu0 %v367
  %v504 = vpop.f32.mrf.mxu0
  %v505 = vadd.f32 %v456, %v504
  %v506 = vpop.f32.mrf.mxu0
  %v507 = vpop.f32.mrf.mxu0
  %v508 = vadd.f32 %v459, %v507
  %v509 = vpop.f32.mrf.mxu0
  %510 = vmatprep.mubr.bf16.mxu0 0
  %511 = vmatmul.mubr.bf16.gmra.mxu0 %v370
  %v512 = vpop.f32.mrf.mxu0
  %v513 = vadd.f32 %v464, %v512
  %v514 = vpop.f32.mrf.mxu0
  %v515 = vpop.f32.mrf.mxu0
  %v516 = vadd.f32 %v467, %v515
  %v517 = vpop.f32.mrf.mxu0
  %518 = vdwg.mxu0
  %519 = vst [vmem:[%s2] sm:$0xff] %v505
  %520 = vst [vmem:[%s2 + $0x8] sm:$0xff] %v508
  %521 = vst [vmem:[%s2 + $0x10] sm:$0xff] %v513
  %522 = vst [vmem:[%s2 + $0x18] sm:$0xff] %v516
  %v523 = vadd.f32 %v505, %v508
  %v524 = vadd.f32 %v523, %v513
  %v525 = vadd.f32 %v524, %v516
  %v526 = vrot.slane %v525, 4
  %v527 = vadd.f32 %v525, %v526
  %v528 = vrot.slane %v527, 2
  %v529 = vadd.f32 %v527, %v528
  %v530 = vrot.slane %v529, 1
  %v531 = vadd.f32 %v529, %v530
  %v532 = vmul.f32 %v505, %v505
  %v533 = vmul.f32 %v508, %v508
  %v534 = vmul.f32 %v513, %v513
  %v535 = vmul.f32 %v516, %v516
  %v536 = vadd.f32 %v532, %v533
  %v537 = vadd.f32 %v536, %v534
  %v538 = vadd.f32 %v537, %v535
  %v539 = vrot.slane %v538, 4
  %v540 = vadd.f32 %v538, %v539
  %v541 = vrot.slane %v540, 2
  %v542 = vadd.f32 %v540, %v541
  %v543 = vrot.slane %v542, 1
  %v544 = vadd.f32 %v542, %v543
  %545 = vst [vmem:[%s3] sm:$0xff] %v531
  %546 = vst [vmem:[%s4] sm:$0xff] %v544
  // Predicated region
  $region10: #{dcgan_generator_forward.11} parent=0 // pred_check
    _
  $region11: #{dcgan_generator_forward.11} parent=0 // pred_check_branch
    %548 = sbr.rel (0) target = $region13
  $region12: #{dcgan_generator_forward.11} parent=0 // pred_region
    _
  $region13: #{dcgan_generator_forward.11} parent=0 // pred_fallthru
    _
  // Predicated region
  $region14: #{dcgan_generator_forward.11} parent=0 // pred_check
    _
  $region15: #{dcgan_generator_forward.11} parent=0 // pred_check_branch
    %550 = sbr.rel (0) target = $region17
  $region16: #{dcgan_generator_forward.11} parent=0 // pred_region
    _
  $region17: #{dcgan_generator_forward.11} parent=0 // pred_fallthru
    _
  // Predicated region
  $region18: #{dcgan_generator_forward.11} parent=0 // pred_check
    _
  $region19: #{dcgan_generator_forward.11} parent=0 // pred_check_branch
    %552 = sbr.rel (0) target = $region21
  $region20: #{dcgan_generator_forward.11} parent=0 // pred_region
    _
  $region21: #{dcgan_generator_forward.11} parent=0 // pred_fallthru
    _
  // Predicated region
  $region22: #{dcgan_generator_forward.11} parent=0 // pred_check
    _
  $region23: #{dcgan_generator_forward.11} parent=0 // pred_check_branch
    %554 = sbr.rel (0) target = $region25
  $region24: #{dcgan_generator_forward.11} parent=0 // pred_region
    _
  $region25: #{dcgan_generator_forward.11} parent=0 // pred_fallthru
    _
  // Predicated region
  $region26: #{dcgan_generator_forward.11} parent=0 // pred_check
    _
  $region27: #{dcgan_generator_forward.11} parent=0 // pred_check_branch
    %556 = sbr.rel (0) target = $region29
  $region28: #{dcgan_generator_forward.11} parent=0 // pred_region
    _
  $region29: #{dcgan_generator_forward.11} parent=0 // pred_fallthru
    _
  // Predicated region
  $region30: #{dcgan_generator_forward.11} parent=0 // pred_check
    _
  $region31: #{dcgan_generator_forward.11} parent=0 // pred_check_branch
    %558 = sbr.rel (0) target = $region33
  $region32: #{dcgan_generator_forward.11} parent=0 // pred_region
    _
  $region33: #{dcgan_generator_forward.11} parent=0 // pred_fallthru
    _

// kernel: tile.53
$region0: #{tile.53}
  #allocation0 [shape = 's32[1]{0}', space=sflag, size = 0x4, scoped, tag = 'scoped memory for tile.53']
  %s0 = inlined_call_operand.vmem [shape: f32[32], index: 0, kind: input, shape index: {}]
  %s1 = inlined_call_operand.vmem [shape: f32[4,32], index: 1, kind: output, shape index: {}]
  // Predicated region
  $region2: #{tile.53} parent=0 // pred_check
    _
  $region3: #{tile.53} parent=0 // pred_check_branch
    %3 = sbr.rel (0) target = $region5
  $region4: #{tile.53} parent=0 // pred_region
    _
  $region5: #{tile.53} parent=0 // pred_fallthru
    _
  %v4 = vld [vmem:[%s0] ss:$0 sm:$0xff]
  %5 = vst [vmem:[%s1] sm:$0xf] %v4

// kernel: dcgan_generator_forward.12
$region0: #{dcgan_generator_forward.12}
  #allocation0 [shape = 'u32[]', space=smem, size = 0x4, offset = 0x4, fixed_abs, tag = 'smem constant byte address 0x4 - core index']
  #allocation1 [shape = 'u32[144,128]{1,0:T(1,128)}', space=vmem, size = 0x12000, scoped, tag = 'internal scratch']
  %s0 = inlined_call_operand.vmem [shape: f32[32,128], index: 0, kind: input, shape index: {}, may-alias: {0,3}]
  %s1 = inlined_call_operand.vmem [shape: f32[1,128], index: 1, kind: input, shape index: {}]
  %s2 = inlined_call_operand.vmem [shape: f32[1,128], index: 2, kind: input, shape index: {}]
  %s3 = inlined_call_operand.vmem [shape: f32[32,128], index: 3, kind: output, shape index: {}, may-alias: {0,3}]
  %s4 = sld [smem:[#allocation0]]
  $region22: #{dcgan_generator_forward.12} parent=0
    _
  %s6 = ssub.s32 1, %s4
  %s7 = scalar_select 0, %s6, %s4
  // Predicated region
  $region2: #{dcgan_generator_forward.12} parent=0 // pred_check
    _
  $region3: #{dcgan_generator_forward.12} parent=0 // pred_check_branch
    %9 = sbr.rel (0) target = $region5
  $region4: #{dcgan_generator_forward.12} parent=0 // pred_region
    _
  $region5: #{dcgan_generator_forward.12} parent=0 // pred_fallthru
    _
  // Predicated region
  $region6: #{dcgan_generator_forward.12} parent=0 // pred_check
    _
  $region7: #{dcgan_generator_forward.12} parent=0 // pred_check_branch
    %11 = sbr.rel (0) target = $region9
  $region8: #{dcgan_generator_forward.12} parent=0 // pred_region
    _
  $region9: #{dcgan_generator_forward.12} parent=0 // pred_fallthru
    _
  // Predicated region
  $region10: #{dcgan_generator_forward.12} parent=0 // pred_check
    _
  $region11: #{dcgan_generator_forward.12} parent=0 // pred_check_branch
    %13 = sbr.rel (0) target = $region13
  $region12: #{dcgan_generator_forward.12} parent=0 // pred_region
    _
  $region13: #{dcgan_generator_forward.12} parent=0 // pred_fallthru
    _
  %v14 = vld [vmem:[%s0] sm:$0xff]
  %v15 = vld [vmem:[%s0 + $0x8] sm:$0xff]
  %v16 = vld [vmem:[%s0 + $0x10] sm:$0xff]
  %v17 = vld [vmem:[%s0 + $0x18] sm:$0xff]
  %v18 = vld [vmem:[%s1] sm:$0x1]
  %v20 = vlaneseq
  %v21 = vshrl.u32 %v20, 7
  %v22 = vsub.s32 0, %v21
  %v23 = vrot.slane %v18, %v22
  %v25 = vmul.f32 %v14, %v23
  %v26 = vmul.f32 %v15, %v23
  %v27 = vmul.f32 %v16, %v23
  %v28 = vmul.f32 %v17, %v23
  %v29 = vld [vmem:[%s2] sm:$0x1]
  %v31 = vlaneseq
  %v32 = vshrl.u32 %v31, 7
  %v33 = vsub.s32 0, %v32
  %v34 = vrot.slane %v29, %v33
  %v36 = vadd.f32 %v25, %v34
  %v37 = vadd.f32 %v26, %v34
  %v38 = vadd.f32 %v27, %v34
  %v39 = vadd.f32 %v28, %v34
  %v40 = vmax.f32 %v36, 0.0
  %v41 = vmax.f32 %v37, 0.0
  %v42 = vmax.f32 %v38, 0.0
  %v43 = vmax.f32 %v39, 0.0
  %44 = vst [vmem:[%s3] sm:$0xff] %v40
  %45 = vst [vmem:[%s3 + $0x8] sm:$0xff] %v41
  %46 = vst [vmem:[%s3 + $0x10] sm:$0xff] %v42
  %47 = vst [vmem:[%s3 + $0x18] sm:$0xff] %v43
  // Predicated region
  $region14: #{dcgan_generator_forward.12} parent=0 // pred_check
    _
  $region15: #{dcgan_generator_forward.12} parent=0 // pred_check_branch
    %49 = sbr.rel (0) target = $region17
  $region16: #{dcgan_generator_forward.12} parent=0 // pred_region
    _
  $region17: #{dcgan_generator_forward.12} parent=0 // pred_fallthru
    _
  // Predicated region
  $region18: #{dcgan_generator_forward.12} parent=0 // pred_check
    _
  $region19: #{dcgan_generator_forward.12} parent=0 // pred_check_branch
    %51 = sbr.rel (0) target = $region21
  $region20: #{dcgan_generator_forward.12} parent=0 // pred_region
    _
  $region21: #{dcgan_generator_forward.12} parent=0 // pred_fallthru
    _

// kernel: dcgan_generator_forward.13
$region0: #{dcgan_generator_forward.13}
  #allocation0 [shape = 'u32[]', space=smem, size = 0x4, offset = 0x4, fixed_abs, tag = 'smem constant byte address 0x4 - core index']
  #allocation1 [shape = 'u32[144,128]{1,0:T(1,128)}', space=vmem, size = 0x12000, scoped, tag = 'internal scratch']
  %s0 = inlined_call_operand.vmem [shape: bf16[128,288], index: 0, kind: input, shape index: {}]
  %s1 = inlined_call_operand.vmem [shape: bf16[288,128], index: 1, kind: input, shape index: {}]
  %s2 = inlined_call_operand.vmem [shape: f32[128,128], index: 2, kind: output, shape index: {0}]
  %s3 = inlined_call_operand.vmem [shape: f32[8,128], index: 3, kind: output, shape index: {1}]
  %s4 = inlined_call_operand.vmem [shape: f32[8,128], index: 4, kind: output, shape index: {2}]
  %5 = xla_tuple %s2, %s3, %s4
  %s6 = sld [smem:[#allocation0]]
  $region34: #{dcgan_generator_forward.13} parent=0
    _
  %s8 = ssub.s32 1, %s6
  %s9 = scalar_select 0, %s8, %s6
  // Predicated region
  $region2: #{dcgan_generator_forward.13} parent=0 // pred_check
    _
  $region3: #{dcgan_generator_forward.13} parent=0 // pred_check_branch
    %11 = sbr.rel (0) target = $region5
  $region4: #{dcgan_generator_forward.13} parent=0 // pred_region
    _
  $region5: #{dcgan_generator_forward.13} parent=0 // pred_fallthru
    _
  // Predicated region
  $region6: #{dcgan_generator_forward.13} parent=0 // pred_check
    _
  $region7: #{dcgan_generator_forward.13} parent=0 // pred_check_branch
    %13 = sbr.rel (0) target = $region9
  $region8: #{dcgan_generator_forward.13} parent=0 // pred_region
    _
  $region9: #{dcgan_generator_forward.13} parent=0 // pred_fallthru
    _
  %v15 = vld [vmem:[%s0] sm:$0xff]
  %v16 = vld [vmem:[%s0 + $0x8] sm:$0xf]
  %v17 = vld [vmem:[%s0 + $0xc] sm:$0xff]
  %v18 = vld [vmem:[%s0 + $0x14] sm:$0xf]
  %v19 = vld [vmem:[%s0 + $0x18] sm:$0xff]
  %v20 = vld [vmem:[%s0 + $0x20] sm:$0xf]
  %v21 = vld [vmem:[%s0 + $0x24] sm:$0xff]
  %v22 = vld [vmem:[%s0 + $0x2c] sm:$0xf]
  %v23 = vld [vmem:[%s0 + $0x30] sm:$0xff]
  %v24 = vld [vmem:[%s0 + $0x38] sm:$0xf]
  %v25 = vld [vmem:[%s0 + $0x3c] sm:$0xff]
  %v26 = vld [vmem:[%s0 + $0x44] sm:$0xf]
  %v27 = vld [vmem:[%s0 + $0x48] sm:$0xff]
  %v28 = vld [vmem:[%s0 + $0x50] sm:$0xf]
  %v29 = vld [vmem:[%s0 + $0x54] sm:$0xff]
  %v30 = vld [vmem:[%s0 + $0x5c] sm:$0xf]
  %v31 = vld [vmem:[%s0 + $0x60] sm:$0xff]
  %v32 = vld [vmem:[%s0 + $0x68] sm:$0xf]
  %v33 = vld [vmem:[%s0 + $0x6c] sm:$0xff]
  %v34 = vld [vmem:[%s0 + $0x74] sm:$0xf]
  %v35 = vld [vmem:[%s0 + $0x78] sm:$0xff]
  %v36 = vld [vmem:[%s0 + $0x80] sm:$0xf]
  %v37 = vld [vmem:[%s0 + $0x84] sm:$0xff]
  %v38 = vld [vmem:[%s0 + $0x8c] sm:$0xf]
  %v39 = vld [vmem:[%s0 + $0x90] sm:$0xff]
  %v40 = vld [vmem:[%s0 + $0x98] sm:$0xf]
  %v41 = vld [vmem:[%s0 + $0x9c] sm:$0xff]
  %v42 = vld [vmem:[%s0 + $0xa4] sm:$0xf]
  %v43 = vld [vmem:[%s0 + $0xa8] sm:$0xff]
  %v44 = vld [vmem:[%s0 + $0xb0] sm:$0xf]
  %v45 = vld [vmem:[%s0 + $0xb4] sm:$0xff]
  %v46 = vld [vmem:[%s0 + $0xbc] sm:$0xf]
  %v47 = vld [vmem:[%s1] sm:$0xf]
  %v48 = vld [vmem:[%s1 + $0x4] sm:$0xf]
  %v49 = vld [vmem:[%s1 + $0x8] sm:$0xf]
  %v50 = vld [vmem:[%s1 + $0xc] sm:$0xf]
  %v51 = vld [vmem:[%s1 + $0x10] sm:$0xf]
  %v52 = vld [vmem:[%s1 + $0x14] sm:$0xf]
  %v53 = vld [vmem:[%s1 + $0x18] sm:$0xf]
  %v54 = vld [vmem:[%s1 + $0x1c] sm:$0xf]
  %v55 = vld [vmem:[%s1 + $0x20] sm:$0xf]
  %v56 = vld [vmem:[%s1 + $0x24] sm:$0xf]
  %v57 = vld [vmem:[%s1 + $0x28] sm:$0xf]
  %v58 = vld [vmem:[%s1 + $0x2c] sm:$0xf]
  %v59 = vld [vmem:[%s1 + $0x30] sm:$0xf]
  %v60 = vld [vmem:[%s1 + $0x34] sm:$0xf]
  %v61 = vld [vmem:[%s1 + $0x38] sm:$0xf]
  %v62 = vld [vmem:[%s1 + $0x3c] sm:$0xf]
  %v63 = vld [vmem:[%s1 + $0x40] sm:$0xf]
  %v64 = vld [vmem:[%s1 + $0x44] sm:$0xf]
  %v65 = vld [vmem:[%s1 + $0x48] sm:$0xf]
  %v66 = vld [vmem:[%s1 + $0x4c] sm:$0xf]
  %v67 = vld [vmem:[%s1 + $0x50] sm:$0xf]
  %v68 = vld [vmem:[%s1 + $0x54] sm:$0xf]
  %v69 = vld [vmem:[%s1 + $0x58] sm:$0xf]
  %v70 = vld [vmem:[%s1 + $0x5c] sm:$0xf]
  %v71 = vld [vmem:[%s1 + $0x60] sm:$0xf]
  %v72 = vld [vmem:[%s1 + $0x64] sm:$0xf]
  %v73 = vld [vmem:[%s1 + $0x68] sm:$0xf]
  %v74 = vld [vmem:[%s1 + $0x6c] sm:$0xf]
  %v75 = vld [vmem:[%s1 + $0x70] sm:$0xf]
  %v76 = vld [vmem:[%s1 + $0x74] sm:$0xf]
  %v77 = vld [vmem:[%s1 + $0x78] sm:$0xf]
  %v78 = vld [vmem:[%s1 + $0x7c] sm:$0xf]
  %v79 = vld [vmem:[%s1 + $0x80] sm:$0xf]
  %v80 = vld [vmem:[%s1 + $0x84] sm:$0xf]
  %v81 = vld [vmem:[%s1 + $0x88] sm:$0xf]
  %v82 = vld [vmem:[%s1 + $0x8c] sm:$0xf]
  %v115 = vunpack.c.l.b16 %v15
  %v116 = vunpack.c.h.b16 %v15
  %v117 = vunpack.c.l.b16 %v16
  %v118 = vunpack.c.l.b16 %v17
  %v119 = vunpack.c.h.b16 %v17
  %v120 = vunpack.c.l.b16 %v18
  %v121 = vunpack.c.l.b16 %v19
  %v122 = vunpack.c.h.b16 %v19
  %v123 = vunpack.c.l.b16 %v20
  %v124 = vunpack.c.l.b16 %v21
  %v125 = vunpack.c.h.b16 %v21
  %v126 = vunpack.c.l.b16 %v22
  %v127 = vunpack.c.l.b16 %v23
  %v128 = vunpack.c.h.b16 %v23
  %v129 = vunpack.c.l.b16 %v24
  %v130 = vunpack.c.l.b16 %v25
  %v131 = vunpack.c.h.b16 %v25
  %v132 = vunpack.c.l.b16 %v26
  %v133 = vunpack.c.l.b16 %v27
  %v134 = vunpack.c.h.b16 %v27
  %v135 = vunpack.c.l.b16 %v28
  %v136 = vunpack.c.l.b16 %v29
  %v137 = vunpack.c.h.b16 %v29
  %v138 = vunpack.c.l.b16 %v30
  %v139 = vunpack.c.l.b16 %v31
  %v140 = vunpack.c.h.b16 %v31
  %v141 = vunpack.c.l.b16 %v32
  %v142 = vunpack.c.l.b16 %v33
  %v143 = vunpack.c.h.b16 %v33
  %v144 = vunpack.c.l.b16 %v34
  %v145 = vunpack.c.l.b16 %v35
  %v146 = vunpack.c.h.b16 %v35
  %v147 = vunpack.c.l.b16 %v36
  %v148 = vunpack.c.l.b16 %v37
  %v149 = vunpack.c.h.b16 %v37
  %v150 = vunpack.c.l.b16 %v38
  %v151 = vunpack.c.l.b16 %v39
  %v152 = vunpack.c.h.b16 %v39
  %v153 = vunpack.c.l.b16 %v40
  %v154 = vunpack.c.l.b16 %v41
  %v155 = vunpack.c.h.b16 %v41
  %v156 = vunpack.c.l.b16 %v42
  %v157 = vunpack.c.l.b16 %v43
  %v158 = vunpack.c.h.b16 %v43
  %v159 = vunpack.c.l.b16 %v44
  %v160 = vunpack.c.l.b16 %v45
  %v161 = vunpack.c.h.b16 %v45
  %v162 = vunpack.c.l.b16 %v46
  %v163 = vpack.c.b16 %v118, %v115
  %v164 = vpack.c.b16 %v119, %v116
  %v165 = vpack.c.b16 %v120, %v117
  %v166 = vpack.c.b16 %v124, %v121
  %v167 = vpack.c.b16 %v125, %v122
  %v168 = vpack.c.b16 %v126, %v123
  %v169 = vpack.c.b16 %v130, %v127
  %v170 = vpack.c.b16 %v131, %v128
  %v171 = vpack.c.b16 %v132, %v129
  %v172 = vpack.c.b16 %v136, %v133
  %v173 = vpack.c.b16 %v137, %v134
  %v174 = vpack.c.b16 %v138, %v135
  %v175 = vpack.c.b16 %v142, %v139
  %v176 = vpack.c.b16 %v143, %v140
  %v177 = vpack.c.b16 %v144, %v141
  %v178 = vpack.c.b16 %v148, %v145
  %v179 = vpack.c.b16 %v149, %v146
  %v180 = vpack.c.b16 %v150, %v147
  %v181 = vpack.c.b16 %v154, %v151
  %v182 = vpack.c.b16 %v155, %v152
  %v183 = vpack.c.b16 %v156, %v153
  %v184 = vpack.c.b16 %v160, %v157
  %v185 = vpack.c.b16 %v161, %v158
  %v186 = vpack.c.b16 %v162, %v159
  %v239 = vunpack.c.l.b16 %v47
  %v240 = vunpack.c.l.b16 %v48
  %v241 = vunpack.c.l.b16 %v49
  %v242 = vunpack.c.l.b16 %v50
  %v243 = vunpack.c.l.b16 %v51
  %v244 = vunpack.c.l.b16 %v52
  %v245 = vunpack.c.l.b16 %v53
  %v246 = vunpack.c.l.b16 %v54
  %v247 = vunpack.c.l.b16 %v55
  %v248 = vunpack.c.l.b16 %v56
  %v249 = vunpack.c.l.b16 %v57
  %v250 = vunpack.c.l.b16 %v58
  %v251 = vunpack.c.l.b16 %v59
  %v252 = vunpack.c.l.b16 %v60
  %v253 = vunpack.c.l.b16 %v61
  %v254 = vunpack.c.l.b16 %v62
  %v255 = vunpack.c.l.b16 %v63
  %v256 = vunpack.c.l.b16 %v64
  %v257 = vunpack.c.l.b16 %v65
  %v258 = vunpack.c.l.b16 %v66
  %v259 = vunpack.c.l.b16 %v67
  %v260 = vunpack.c.l.b16 %v68
  %v261 = vunpack.c.l.b16 %v69
  %v262 = vunpack.c.l.b16 %v70
  %v263 = vunpack.c.l.b16 %v71
  %v264 = vunpack.c.l.b16 %v72
  %v265 = vunpack.c.l.b16 %v73
  %v266 = vunpack.c.l.b16 %v74
  %v267 = vunpack.c.l.b16 %v75
  %v268 = vunpack.c.l.b16 %v76
  %v269 = vunpack.c.l.b16 %v77
  %v270 = vunpack.c.l.b16 %v78
  %v271 = vunpack.c.l.b16 %v79
  %v272 = vunpack.c.l.b16 %v80
  %v273 = vunpack.c.l.b16 %v81
  %v274 = vunpack.c.l.b16 %v82
  %v275 = vpack.c.b16 %v240, %v239
  %v276 = vpack.c.b16 %v242, %v241
  %v277 = vpack.c.b16 %v244, %v243
  %v278 = vpack.c.b16 %v246, %v245
  %v279 = vpack.c.b16 %v248, %v247
  %v280 = vpack.c.b16 %v250, %v249
  %v281 = vpack.c.b16 %v252, %v251
  %v282 = vpack.c.b16 %v254, %v253
  %v283 = vpack.c.b16 %v256, %v255
  %v284 = vpack.c.b16 %v258, %v257
  %v285 = vpack.c.b16 %v260, %v259
  %v286 = vpack.c.b16 %v262, %v261
  %v287 = vpack.c.b16 %v264, %v263
  %v288 = vpack.c.b16 %v266, %v265
  %v289 = vpack.c.b16 %v268, %v267
  %v290 = vpack.c.b16 %v270, %v269
  %v291 = vpack.c.b16 %v272, %v271
  %v292 = vpack.c.b16 %v274, %v273
  %vm311 = vcmask 261120
  %v313 = vsel %vm311, %v165, 0
  %v316 = vsel %vm311, %v168, 0
  %v319 = vsel %vm311, %v171, 0
  %v322 = vsel %vm311, %v174, 0
  %v325 = vsel %vm311, %v177, 0
  %v328 = vsel %vm311, %v180, 0
  %v331 = vsel %vm311, %v183, 0
  %v334 = vsel %vm311, %v186, 0
  %336 = vmatprep.subr.bf16.mxu0 0
  %337 = vmatpush1.bf16.msra.mxu0 %v282
  %338 = vmatprep.subr.bf16.mxu0 0
  %339 = vmatpush1.bf16.msra.mxu0 %v281
  %340 = vmatprep.subr.bf16.mxu0 0
  %341 = vmatpush1.bf16.msra.mxu0 %v280
  %342 = vmatprep.subr.bf16.mxu0 0
  %343 = vmatpush1.bf16.msra.mxu0 %v279
  %344 = vmatprep.subr.bf16.mxu0 0
  %345 = vmatpush1.bf16.msra.mxu0 %v278
  %346 = vmatprep.subr.bf16.mxu0 0
  %347 = vmatpush1.bf16.msra.mxu0 %v277
  %348 = vmatprep.subr.bf16.mxu0 0
  %349 = vmatpush1.bf16.msra.mxu0 %v276
  %350 = vmatprep.subr.bf16.mxu0 0
  %351 = vmatpush1.bf16.msra.mxu0 %v275
  %352 = vmatprep.subr.bf16.mxu0 0
  %353 = vmatpush2.bf16.msra.mxu0 %v290
  %354 = vmatprep.subr.bf16.mxu0 0
  %355 = vmatpush2.bf16.msra.mxu0 %v289
  %356 = vmatprep.subr.bf16.mxu0 0
  %357 = vmatpush2.bf16.msra.mxu0 %v288
  %358 = vmatprep.subr.bf16.mxu0 0
  %359 = vmatpush2.bf16.msra.mxu0 %v287
  %360 = vmatprep.subr.bf16.mxu0 0
  %361 = vmatpush2.bf16.msra.mxu0 %v286
  %362 = vmatprep.subr.bf16.mxu0 0
  %363 = vmatpush2.bf16.msra.mxu0 %v285
  %364 = vmatprep.subr.bf16.mxu0 0
  %365 = vmatpush2.bf16.msra.mxu0 %v284
  %366 = vmatprep.subr.bf16.mxu0 0
  %367 = vmatpush2.bf16.msra.mxu0 %v283
  %368 = vmatprep.mubr.bf16.mxu0 %v164
  %369 = vmatmul.mubr.bf16.gmra.mxu0 %v163
  %v370 = vpop.f32.mrf.mxu0
  %v371 = vadd.f32 0.0, %v370
  %v372 = vpop.f32.mrf.mxu0
  %v373 = vpop.f32.mrf.mxu0
  %v374 = vadd.f32 0.0, %v373
  %v375 = vpop.f32.mrf.mxu0
  %376 = vmatprep.mubr.bf16.mxu0 %v167
  %377 = vmatmul.mubr.bf16.gmra.mxu0 %v166
  %v378 = vpop.f32.mrf.mxu0
  %v379 = vadd.f32 0.0, %v378
  %v380 = vpop.f32.mrf.mxu0
  %v381 = vpop.f32.mrf.mxu0
  %v382 = vadd.f32 0.0, %v381
  %v383 = vpop.f32.mrf.mxu0
  %384 = vmatprep.mubr.bf16.mxu0 %v170
  %385 = vmatmul.mubr.bf16.gmra.mxu0 %v169
  %v386 = vpop.f32.mrf.mxu0
  %v387 = vadd.f32 0.0, %v386
  %v388 = vpop.f32.mrf.mxu0
  %v389 = vpop.f32.mrf.mxu0
  %v390 = vadd.f32 0.0, %v389
  %v391 = vpop.f32.mrf.mxu0
  %392 = vmatprep.mubr.bf16.mxu0 %v173
  %393 = vmatmul.mubr.bf16.gmra.mxu0 %v172
  %v394 = vpop.f32.mrf.mxu0
  %v395 = vadd.f32 0.0, %v394
  %v396 = vpop.f32.mrf.mxu0
  %v397 = vpop.f32.mrf.mxu0
  %v398 = vadd.f32 0.0, %v397
  %v399 = vpop.f32.mrf.mxu0
  %400 = vmatprep.mubr.bf16.mxu0 %v176
  %401 = vmatmul.mubr.bf16.gmra.mxu0 %v175
  %v402 = vpop.f32.mrf.mxu0
  %v403 = vadd.f32 0.0, %v402
  %v404 = vpop.f32.mrf.mxu0
  %v405 = vpop.f32.mrf.mxu0
  %v406 = vadd.f32 0.0, %v405
  %v407 = vpop.f32.mrf.mxu0
  %408 = vmatprep.mubr.bf16.mxu0 %v179
  %409 = vmatmul.mubr.bf16.gmra.mxu0 %v178
  %v410 = vpop.f32.mrf.mxu0
  %v411 = vadd.f32 0.0, %v410
  %v412 = vpop.f32.mrf.mxu0
  %v413 = vpop.f32.mrf.mxu0
  %v414 = vadd.f32 0.0, %v413
  %v415 = vpop.f32.mrf.mxu0
  %416 = vmatprep.mubr.bf16.mxu0 %v182
  %417 = vmatmul.mubr.bf16.gmra.mxu0 %v181
  %v418 = vpop.f32.mrf.mxu0
  %v419 = vadd.f32 0.0, %v418
  %v420 = vpop.f32.mrf.mxu0
  %v421 = vpop.f32.mrf.mxu0
  %v422 = vadd.f32 0.0, %v421
  %v423 = vpop.f32.mrf.mxu0
  %424 = vmatprep.mubr.bf16.mxu0 %v185
  %425 = vmatmul.mubr.bf16.gmra.mxu0 %v184
  %v426 = vpop.f32.mrf.mxu0
  %v427 = vadd.f32 0.0, %v426
  %v428 = vpop.f32.mrf.mxu0
  %v429 = vpop.f32.mrf.mxu0
  %v430 = vadd.f32 0.0, %v429
  %v431 = vpop.f32.mrf.mxu0
  %432 = vdwg.mxu0
  %433 = vmatprep.subr.bf16.mxu0 0
  %434 = vmatpush1.bf16.msra.mxu0 0
  %435 = vmatprep.subr.bf16.mxu0 0
  %436 = vmatpush1.bf16.msra.mxu0 0
  %437 = vmatprep.subr.bf16.mxu0 0
  %438 = vmatpush1.bf16.msra.mxu0 0
  %439 = vmatprep.subr.bf16.mxu0 0
  %440 = vmatpush1.bf16.msra.mxu0 0
  %441 = vmatprep.subr.bf16.mxu0 0
  %442 = vmatpush1.bf16.msra.mxu0 0
  %443 = vmatprep.subr.bf16.mxu0 0
  %444 = vmatpush1.bf16.msra.mxu0 0
  %445 = vmatprep.subr.bf16.mxu0 0
  %446 = vmatpush1.bf16.msra.mxu0 %v292
  %447 = vmatprep.subr.bf16.mxu0 0
  %448 = vmatpush1.bf16.msra.mxu0 %v291
  %449 = vmatprep.subr.bf16.mxu0 0
  %450 = vmatpush2.bf16.msra.mxu0 0
  %451 = vmatprep.subr.bf16.mxu0 0
  %452 = vmatpush2.bf16.msra.mxu0 0
  %453 = vmatprep.subr.bf16.mxu0 0
  %454 = vmatpush2.bf16.msra.mxu0 0
  %455 = vmatprep.subr.bf16.mxu0 0
  %456 = vmatpush2.bf16.msra.mxu0 0
  %457 = vmatprep.subr.bf16.mxu0 0
  %458 = vmatpush2.bf16.msra.mxu0 0
  %459 = vmatprep.subr.bf16.mxu0 0
  %460 = vmatpush2.bf16.msra.mxu0 0
  %461 = vmatprep.subr.bf16.mxu0 0
  %462 = vmatpush2.bf16.msra.mxu0 0
  %463 = vmatprep.subr.bf16.mxu0 0
  %464 = vmatpush2.bf16.msra.mxu0 0
  %465 = vmatprep.mubr.bf16.mxu0 0
  %466 = vmatmul.mubr.bf16.gmra.mxu0 %v313
  %v467 = vpop.f32.mrf.mxu0
  %v468 = vadd.f32 %v371, %v467
  %v469 = vpop.f32.mrf.mxu0
  %v470 = vpop.f32.mrf.mxu0
  %v471 = vadd.f32 %v374, %v470
  %v472 = vpop.f32.mrf.mxu0
  %473 = vmatprep.mubr.bf16.mxu0 0
  %474 = vmatmul.mubr.bf16.gmra.mxu0 %v316
  %v475 = vpop.f32.mrf.mxu0
  %v476 = vadd.f32 %v379, %v475
  %v477 = vpop.f32.mrf.mxu0
  %v478 = vpop.f32.mrf.mxu0
  %v479 = vadd.f32 %v382, %v478
  %v480 = vpop.f32.mrf.mxu0
  %481 = vmatprep.mubr.bf16.mxu0 0
  %482 = vmatmul.mubr.bf16.gmra.mxu0 %v319
  %v483 = vpop.f32.mrf.mxu0
  %v484 = vadd.f32 %v387, %v483
  %v485 = vpop.f32.mrf.mxu0
  %v486 = vpop.f32.mrf.mxu0
  %v487 = vadd.f32 %v390, %v486
  %v488 = vpop.f32.mrf.mxu0
  %489 = vmatprep.mubr.bf16.mxu0 0
  %490 = vmatmul.mubr.bf16.gmra.mxu0 %v322
  %v491 = vpop.f32.mrf.mxu0
  %v492 = vadd.f32 %v395, %v491
  %v493 = vpop.f32.mrf.mxu0
  %v494 = vpop.f32.mrf.mxu0
  %v495 = vadd.f32 %v398, %v494
  %v496 = vpop.f32.mrf.mxu0
  %497 = vmatprep.mubr.bf16.mxu0 0
  %498 = vmatmul.mubr.bf16.gmra.mxu0 %v325
  %v499 = vpop.f32.mrf.mxu0
  %v500 = vadd.f32 %v403, %v499
  %v501 = vpop.f32.mrf.mxu0
  %v502 = vpop.f32.mrf.mxu0
  %v503 = vadd.f32 %v406, %v502
  %v504 = vpop.f32.mrf.mxu0
  %505 = vmatprep.mubr.bf16.mxu0 0
  %506 = vmatmul.mubr.bf16.gmra.mxu0 %v328
  %v507 = vpop.f32.mrf.mxu0
  %v508 = vadd.f32 %v411, %v507
  %v509 = vpop.f32.mrf.mxu0
  %v510 = vpop.f32.mrf.mxu0
  %v511 = vadd.f32 %v414, %v510
  %v512 = vpop.f32.mrf.mxu0
  %513 = vmatprep.mubr.bf16.mxu0 0
  %514 = vmatmul.mubr.bf16.gmra.mxu0 %v331
  %v515 = vpop.f32.mrf.mxu0
  %v516 = vadd.f32 %v419, %v515
  %v517 = vpop.f32.mrf.mxu0
  %v518 = vpop.f32.mrf.mxu0
  %v519 = vadd.f32 %v422, %v518
  %v520 = vpop.f32.mrf.mxu0
  %521 = vmatprep.mubr.bf16.mxu0 0
  %522 = vmatmul.mubr.bf16.gmra.mxu0 %v334
  %v523 = vpop.f32.mrf.mxu0
  %v524 = vadd.f32 %v427, %v523
  %v525 = vpop.f32.mrf.mxu0
  %v526 = vpop.f32.mrf.mxu0
  %v527 = vadd.f32 %v430, %v526
  %v528 = vpop.f32.mrf.mxu0
  %529 = vdwg.mxu0
  %530 = vst [vmem:[%s2] sm:$0xff] %v468
  %531 = vst [vmem:[%s2 + $0x8] sm:$0xff] %v471
  %532 = vst [vmem:[%s2 + $0x10] sm:$0xff] %v476
  %533 = vst [vmem:[%s2 + $0x18] sm:$0xff] %v479
  %534 = vst [vmem:[%s2 + $0x20] sm:$0xff] %v484
  %535 = vst [vmem:[%s2 + $0x28] sm:$0xff] %v487
  %536 = vst [vmem:[%s2 + $0x30] sm:$0xff] %v492
  %537 = vst [vmem:[%s2 + $0x38] sm:$0xff] %v495
  %538 = vst [vmem:[%s2 + $0x40] sm:$0xff] %v500
  %539 = vst [vmem:[%s2 + $0x48] sm:$0xff] %v503
  %540 = vst [vmem:[%s2 + $0x50] sm:$0xff] %v508
  %541 = vst [vmem:[%s2 + $0x58] sm:$0xff] %v511
  %542 = vst [vmem:[%s2 + $0x60] sm:$0xff] %v516
  %543 = vst [vmem:[%s2 + $0x68] sm:$0xff] %v519
  %544 = vst [vmem:[%s2 + $0x70] sm:$0xff] %v524
  %545 = vst [vmem:[%s2 + $0x78] sm:$0xff] %v527
  %v546 = vadd.f32 %v468, %v471
  %v547 = vadd.f32 %v546, %v476
  %v548 = vadd.f32 %v547, %v479
  %v549 = vadd.f32 %v548, %v484
  %v550 = vadd.f32 %v549, %v487
  %v551 = vadd.f32 %v550, %v492
  %v552 = vadd.f32 %v551, %v495
  %v553 = vadd.f32 %v552, %v500
  %v554 = vadd.f32 %v553, %v503
  %v555 = vadd.f32 %v554, %v508
  %v556 = vadd.f32 %v555, %v511
  %v557 = vadd.f32 %v556, %v516
  %v558 = vadd.f32 %v557, %v519
  %v559 = vadd.f32 %v558, %v524
  %v560 = vadd.f32 %v559, %v527
  %v561 = vrot.slane %v560, 4
  %v562 = vadd.f32 %v560, %v561
  %v563 = vrot.slane %v562, 2
  %v564 = vadd.f32 %v562, %v563
  %v565 = vrot.slane %v564, 1
  %v566 = vadd.f32 %v564, %v565
  %v567 = vmul.f32 %v468, %v468
  %v568 = vmul.f32 %v471, %v471
  %v569 = vmul.f32 %v476, %v476
  %v570 = vmul.f32 %v479, %v479
  %v571 = vmul.f32 %v484, %v484
  %v572 = vmul.f32 %v487, %v487
  %v573 = vmul.f32 %v492, %v492
  %v574 = vmul.f32 %v495, %v495
  %v575 = vmul.f32 %v500, %v500
  %v576 = vmul.f32 %v503, %v503
  %v577 = vmul.f32 %v508, %v508
  %v578 = vmul.f32 %v511, %v511
  %v579 = vmul.f32 %v516, %v516
  %v580 = vmul.f32 %v519, %v519
  %v581 = vmul.f32 %v524, %v524
  %v582 = vmul.f32 %v527, %v527
  %v583 = vadd.f32 %v567, %v568
  %v584 = vadd.f32 %v583, %v569
  %v585 = vadd.f32 %v584, %v570
  %v586 = vadd.f32 %v585, %v571
  %v587 = vadd.f32 %v586, %v572
  %v588 = vadd.f32 %v587, %v573
  %v589 = vadd.f32 %v588, %v574
  %v590 = vadd.f32 %v589, %v575
  %v591 = vadd.f32 %v590, %v576
  %v592 = vadd.f32 %v591, %v577
  %v593 = vadd.f32 %v592, %v578
  %v594 = vadd.f32 %v593, %v579
  %v595 = vadd.f32 %v594, %v580
  %v596 = vadd.f32 %v595, %v581
  %v597 = vadd.f32 %v596, %v582
  %v598 = vrot.slane %v597, 4
  %v599 = vadd.f32 %v597, %v598
  %v600 = vrot.slane %v599, 2
  %v601 = vadd.f32 %v599, %v600
  %v602 = vrot.slane %v601, 1
  %v603 = vadd.f32 %v601, %v602
  %604 = vst [vmem:[%s3] sm:$0xff] %v566
  %605 = vst [vmem:[%s4] sm:$0xff] %v603
  // Predicated region
  $region10: #{dcgan_generator_forward.13} parent=0 // pred_check
    _
  $region11: #{dcgan_generator_forward.13} parent=0 // pred_check_branch
    %607 = sbr.rel (0) target = $region13
  $region12: #{dcgan_generator_forward.13} parent=0 // pred_region
    _
  $region13: #{dcgan_generator_forward.13} parent=0 // pred_fallthru
    _
  // Predicated region
  $region14: #{dcgan_generator_forward.13} parent=0 // pred_check
    _
  $region15: #{dcgan_generator_forward.13} parent=0 // pred_check_branch
    %609 = sbr.rel (0) target = $region17
  $region16: #{dcgan_generator_forward.13} parent=0 // pred_region
    _
  $region17: #{dcgan_generator_forward.13} parent=0 // pred_fallthru
    _
  // Predicated region
  $region18: #{dcgan_generator_forward.13} parent=0 // pred_check
    _
  $region19: #{dcgan_generator_forward.13} parent=0 // pred_check_branch
    %611 = sbr.rel (0) target = $region21
  $region20: #{dcgan_generator_forward.13} parent=0 // pred_region
    _
  $region21: #{dcgan_generator_forward.13} parent=0 // pred_fallthru
    _
  // Predicated region
  $region22: #{dcgan_generator_forward.13} parent=0 // pred_check
    _
  $region23: #{dcgan_generator_forward.13} parent=0 // pred_check_branch
    %613 = sbr.rel (0) target = $region25
  $region24: #{dcgan_generator_forward.13} parent=0 // pred_region
    _
  $region25: #{dcgan_generator_forward.13} parent=0 // pred_fallthru
    _
  // Predicated region
  $region26: #{dcgan_generator_forward.13} parent=0 // pred_check
    _
  $region27: #{dcgan_generator_forward.13} parent=0 // pred_check_branch
    %615 = sbr.rel (0) target = $region29
  $region28: #{dcgan_generator_forward.13} parent=0 // pred_region
    _
  $region29: #{dcgan_generator_forward.13} parent=0 // pred_fallthru
    _
  // Predicated region
  $region30: #{dcgan_generator_forward.13} parent=0 // pred_check
    _
  $region31: #{dcgan_generator_forward.13} parent=0 // pred_check_branch
    %617 = sbr.rel (0) target = $region33
  $region32: #{dcgan_generator_forward.13} parent=0 // pred_region
    _
  $region33: #{dcgan_generator_forward.13} parent=0 // pred_fallthru
    _

// kernel: tile.68
$region0: #{tile.68}
  #allocation0 [shape = 's32[1]{0}', space=sflag, size = 0x4, scoped, tag = 'scoped memory for tile.68']
  %s0 = inlined_call_operand.vmem [shape: f32[16], index: 0, kind: input, shape index: {}]
  %s1 = inlined_call_operand.vmem [shape: f32[4,16], index: 1, kind: output, shape index: {}]
  // Predicated region
  $region2: #{tile.68} parent=0 // pred_check
    _
  $region3: #{tile.68} parent=0 // pred_check_branch
    %3 = sbr.rel (0) target = $region5
  $region4: #{tile.68} parent=0 // pred_region
    _
  $region5: #{tile.68} parent=0 // pred_fallthru
    _
  %v4 = vld [vmem:[%s0] ss:$0 sm:$0xff]
  %5 = vst [vmem:[%s1] sm:$0xf] %v4

// kernel: tile.69
$region0: #{tile.69}
  %s0 = inlined_call_operand.vmem [shape: f32[4,16], index: 0, kind: input, shape index: {}]
  %s1 = inlined_call_operand.vmem [shape: f32[64], index: 1, kind: output, shape index: {}]
  $region1: #{tile.69} parent=0
    #allocation0 [shape = 'u8[4096]{0}', space=vmem, size = 0x1000, scoped, tag = 'scoped mem for output reshape']
    #allocation1 [shape = 'u8[4096]{0}', space=vmem, size = 0x1000, scoped, tag = 'scoped mem for input reshape']
    %s3 = sshll.u32 1, 4
    %s4 = ssub.s32 %s3, 1
    %v5 = vld [vmem:[%s0] sm:%s4]
    %6 = vst [vmem:[#allocation1] sm:%s4] %v5
    %v7 = vld [vmem:[#allocation1] sm:$0x1]
    %vm8 = vcmask 130048
    %9 = vst.msk [vmem:[#allocation0] sm:$0x1] %vm8, %v7
    %s10 = scalar_lea.vmem [#allocation1], 3
    %v11 = vld [vmem:[%s10] sm:$0x1]
    %12 = vrot.lane.b32.xlu0 %v11, 48
    %v13 = vpop.permute.xlu0 %12
    %vm14 = vcmask 523648
    %15 = vst.msk [vmem:[#allocation0] sm:$0x1] %vm14, %v13
    %s16 = scalar_lea.vmem [#allocation1], 2
    %v17 = vld [vmem:[%s16] sm:$0x1]
    %18 = vrot.lane.b32.xlu0 %v17, 32
    %v19 = vpop.permute.xlu0 %18
    %vm20 = vcmask 392448
    %21 = vst.msk [vmem:[#allocation0] sm:$0x1] %vm20, %v19
    %s22 = scalar_lea.vmem [#allocation1], 1
    %v23 = vld [vmem:[%s22] sm:$0x1]
    %24 = vrot.lane.b32.xlu0 %v23, 16
    %v25 = vpop.permute.xlu0 %24
    %vm26 = vcmask 261248
    %27 = vst.msk [vmem:[#allocation0] sm:$0x1] %vm26, %v25
    %s29 = sshll.u32 1, 1
    %s30 = ssub.s32 %s29, 1
    %v32 = vld [vmem:[#allocation0] sm:%s30]
    %s33 = sshll.u32 1, 1
    %s34 = ssub.s32 %s33, 1
    %35 = vst [vmem:[%s1] sm:%s34] %v32

// kernel: dcgan_generator_forward.14
$region0: #{dcgan_generator_forward.14}
  #allocation0 [shape = 'u32[]', space=smem, size = 0x4, offset = 0x4, fixed_abs, tag = 'smem constant byte address 0x4 - core index']
  #allocation1 [shape = 'u32[144,128]{1,0:T(1,128)}', space=vmem, size = 0x12000, scoped, tag = 'internal scratch']
  %s0 = inlined_call_operand.vmem [shape: f32[128,128], index: 0, kind: input, shape index: {}, may-alias: {0,3}]
  %s1 = inlined_call_operand.vmem [shape: f32[1,128], index: 1, kind: input, shape index: {}]
  %s2 = inlined_call_operand.vmem [shape: f32[1,128], index: 2, kind: input, shape index: {}]
  %s3 = inlined_call_operand.vmem [shape: f32[128,128], index: 3, kind: output, shape index: {}, may-alias: {0,3}]
  %s4 = sld [smem:[#allocation0]]
  $region22: #{dcgan_generator_forward.14} parent=0
    _
  %s6 = ssub.s32 1, %s4
  %s7 = scalar_select 0, %s6, %s4
  // Predicated region
  $region2: #{dcgan_generator_forward.14} parent=0 // pred_check
    _
  $region3: #{dcgan_generator_forward.14} parent=0 // pred_check_branch
    %9 = sbr.rel (0) target = $region5
  $region4: #{dcgan_generator_forward.14} parent=0 // pred_region
    _
  $region5: #{dcgan_generator_forward.14} parent=0 // pred_fallthru
    _
  // Predicated region
  $region6: #{dcgan_generator_forward.14} parent=0 // pred_check
    _
  $region7: #{dcgan_generator_forward.14} parent=0 // pred_check_branch
    %11 = sbr.rel (0) target = $region9
  $region8: #{dcgan_generator_forward.14} parent=0 // pred_region
    _
  $region9: #{dcgan_generator_forward.14} parent=0 // pred_fallthru
    _
  // Predicated region
  $region10: #{dcgan_generator_forward.14} parent=0 // pred_check
    _
  $region11: #{dcgan_generator_forward.14} parent=0 // pred_check_branch
    %13 = sbr.rel (0) target = $region13
  $region12: #{dcgan_generator_forward.14} parent=0 // pred_region
    _
  $region13: #{dcgan_generator_forward.14} parent=0 // pred_fallthru
    _
  %v14 = vld [vmem:[%s0] sm:$0xff]
  %v15 = vld [vmem:[%s0 + $0x8] sm:$0xff]
  %v16 = vld [vmem:[%s0 + $0x10] sm:$0xff]
  %v17 = vld [vmem:[%s0 + $0x18] sm:$0xff]
  %v18 = vld [vmem:[%s0 + $0x20] sm:$0xff]
  %v19 = vld [vmem:[%s0 + $0x28] sm:$0xff]
  %v20 = vld [vmem:[%s0 + $0x30] sm:$0xff]
  %v21 = vld [vmem:[%s0 + $0x38] sm:$0xff]
  %v22 = vld [vmem:[%s0 + $0x40] sm:$0xff]
  %v23 = vld [vmem:[%s0 + $0x48] sm:$0xff]
  %v24 = vld [vmem:[%s0 + $0x50] sm:$0xff]
  %v25 = vld [vmem:[%s0 + $0x58] sm:$0xff]
  %v26 = vld [vmem:[%s0 + $0x60] sm:$0xff]
  %v27 = vld [vmem:[%s0 + $0x68] sm:$0xff]
  %v28 = vld [vmem:[%s0 + $0x70] sm:$0xff]
  %v29 = vld [vmem:[%s0 + $0x78] sm:$0xff]
  %v30 = vld [vmem:[%s1] sm:$0x1]
  %v32 = vlaneseq
  %v33 = vshrl.u32 %v32, 7
  %v34 = vsub.s32 0, %v33
  %v35 = vrot.slane %v30, %v34
  %v37 = vmul.f32 %v14, %v35
  %v38 = vmul.f32 %v15, %v35
  %v39 = vmul.f32 %v16, %v35
  %v40 = vmul.f32 %v17, %v35
  %v41 = vmul.f32 %v18, %v35
  %v42 = vmul.f32 %v19, %v35
  %v43 = vmul.f32 %v20, %v35
  %v44 = vmul.f32 %v21, %v35
  %v45 = vmul.f32 %v22, %v35
  %v46 = vmul.f32 %v23, %v35
  %v47 = vmul.f32 %v24, %v35
  %v48 = vmul.f32 %v25, %v35
  %v49 = vmul.f32 %v26, %v35
  %v50 = vmul.f32 %v27, %v35
  %v51 = vmul.f32 %v28, %v35
  %v52 = vmul.f32 %v29, %v35
  %v53 = vld [vmem:[%s2] sm:$0x1]
  %v55 = vlaneseq
  %v56 = vshrl.u32 %v55, 7
  %v57 = vsub.s32 0, %v56
  %v58 = vrot.slane %v53, %v57
  %v60 = vadd.f32 %v37, %v58
  %v61 = vadd.f32 %v38, %v58
  %v62 = vadd.f32 %v39, %v58
  %v63 = vadd.f32 %v40, %v58
  %v64 = vadd.f32 %v41, %v58
  %v65 = vadd.f32 %v42, %v58
  %v66 = vadd.f32 %v43, %v58
  %v67 = vadd.f32 %v44, %v58
  %v68 = vadd.f32 %v45, %v58
  %v69 = vadd.f32 %v46, %v58
  %v70 = vadd.f32 %v47, %v58
  %v71 = vadd.f32 %v48, %v58
  %v72 = vadd.f32 %v49, %v58
  %v73 = vadd.f32 %v50, %v58
  %v74 = vadd.f32 %v51, %v58
  %v75 = vadd.f32 %v52, %v58
  %v76 = vmax.f32 %v60, 0.0
  %v77 = vmax.f32 %v61, 0.0
  %v78 = vmax.f32 %v62, 0.0
  %v79 = vmax.f32 %v63, 0.0
  %v80 = vmax.f32 %v64, 0.0
  %v81 = vmax.f32 %v65, 0.0
  %v82 = vmax.f32 %v66, 0.0
  %v83 = vmax.f32 %v67, 0.0
  %v84 = vmax.f32 %v68, 0.0
  %v85 = vmax.f32 %v69, 0.0
  %v86 = vmax.f32 %v70, 0.0
  %v87 = vmax.f32 %v71, 0.0
  %v88 = vmax.f32 %v72, 0.0
  %v89 = vmax.f32 %v73, 0.0
  %v90 = vmax.f32 %v74, 0.0
  %v91 = vmax.f32 %v75, 0.0
  %92 = vst [vmem:[%s3] sm:$0xff] %v76
  %93 = vst [vmem:[%s3 + $0x8] sm:$0xff] %v77
  %94 = vst [vmem:[%s3 + $0x10] sm:$0xff] %v78
  %95 = vst [vmem:[%s3 + $0x18] sm:$0xff] %v79
  %96 = vst [vmem:[%s3 + $0x20] sm:$0xff] %v80
  %97 = vst [vmem:[%s3 + $0x28] sm:$0xff] %v81
  %98 = vst [vmem:[%s3 + $0x30] sm:$0xff] %v82
  %99 = vst [vmem:[%s3 + $0x38] sm:$0xff] %v83
  %100 = vst [vmem:[%s3 + $0x40] sm:$0xff] %v84
  %101 = vst [vmem:[%s3 + $0x48] sm:$0xff] %v85
  %102 = vst [vmem:[%s3 + $0x50] sm:$0xff] %v86
  %103 = vst [vmem:[%s3 + $0x58] sm:$0xff] %v87
  %104 = vst [vmem:[%s3 + $0x60] sm:$0xff] %v88
  %105 = vst [vmem:[%s3 + $0x68] sm:$0xff] %v89
  %106 = vst [vmem:[%s3 + $0x70] sm:$0xff] %v90
  %107 = vst [vmem:[%s3 + $0x78] sm:$0xff] %v91
  // Predicated region
  $region14: #{dcgan_generator_forward.14} parent=0 // pred_check
    _
  $region15: #{dcgan_generator_forward.14} parent=0 // pred_check_branch
    %109 = sbr.rel (0) target = $region17
  $region16: #{dcgan_generator_forward.14} parent=0 // pred_region
    _
  $region17: #{dcgan_generator_forward.14} parent=0 // pred_fallthru
    _
  // Predicated region
  $region18: #{dcgan_generator_forward.14} parent=0 // pred_check
    _
  $region19: #{dcgan_generator_forward.14} parent=0 // pred_check_branch
    %111 = sbr.rel (0) target = $region21
  $region20: #{dcgan_generator_forward.14} parent=0 // pred_region
    _
  $region21: #{dcgan_generator_forward.14} parent=0 // pred_fallthru
    _

// kernel: tile.78
$region0: #{tile.78}
  #allocation0 [shape = 's32[1]{0}', space=sflag, size = 0x4, scoped, tag = 'scoped memory for tile.78']
  %s0 = inlined_call_operand.vmem [shape: f32[8], index: 0, kind: input, shape index: {}]
  %s1 = inlined_call_operand.vmem [shape: f32[4,8], index: 1, kind: output, shape index: {}]
  // Predicated region
  $region2: #{tile.78} parent=0 // pred_check
    _
  $region3: #{tile.78} parent=0 // pred_check_branch
    %3 = sbr.rel (0) target = $region5
  $region4: #{tile.78} parent=0 // pred_region
    _
  $region5: #{tile.78} parent=0 // pred_fallthru
    _
  %v4 = vld [vmem:[%s0] ss:$0 sm:$0xff]
  %5 = vst [vmem:[%s1] sm:$0xf] %v4

// kernel: tile.79
$region0: #{tile.79}
  %s0 = inlined_call_operand.vmem [shape: f32[4,8], index: 0, kind: input, shape index: {}]
  %s1 = inlined_call_operand.vmem [shape: f32[32], index: 1, kind: output, shape index: {}]
  $region1: #{tile.79} parent=0
    #allocation0 [shape = 'u8[4096]{0}', space=vmem, size = 0x1000, scoped, tag = 'scoped mem for output reshape']
    #allocation1 [shape = 'u8[4096]{0}', space=vmem, size = 0x1000, scoped, tag = 'scoped mem for input reshape']
    %s3 = sshll.u32 1, 4
    %s4 = ssub.s32 %s3, 1
    %v5 = vld [vmem:[%s0] sm:%s4]
    %6 = vst [vmem:[#allocation1] sm:%s4] %v5
    %v7 = vld [vmem:[#allocation1] sm:$0x1]
    %vm8 = vcmask 64512
    %9 = vst.msk [vmem:[#allocation0] sm:$0x1] %vm8, %v7
    %s10 = scalar_lea.vmem [#allocation1], 3
    %v11 = vld [vmem:[%s10] sm:$0x1]
    %12 = vrot.lane.b32.xlu0 %v11, 24
    %v13 = vpop.permute.xlu0 %12
    %vm14 = vcmask 261312
    %15 = vst.msk [vmem:[#allocation0] sm:$0x1] %vm14, %v13
    %s16 = scalar_lea.vmem [#allocation1], 2
    %v17 = vld [vmem:[%s16] sm:$0x1]
    %18 = vrot.lane.b32.xlu0 %v17, 16
    %v19 = vpop.permute.xlu0 %18
    %vm20 = vcmask 195712
    %21 = vst.msk [vmem:[#allocation0] sm:$0x1] %vm20, %v19
    %s22 = scalar_lea.vmem [#allocation1], 1
    %v23 = vld [vmem:[%s22] sm:$0x1]
    %24 = vrot.lane.b32.xlu0 %v23, 8
    %v25 = vpop.permute.xlu0 %24
    %vm26 = vcmask 130112
    %27 = vst.msk [vmem:[#allocation0] sm:$0x1] %vm26, %v25
    %s29 = sshll.u32 1, 1
    %s30 = ssub.s32 %s29, 1
    %v32 = vld [vmem:[#allocation0] sm:%s30]
    %s33 = sshll.u32 1, 1
    %s34 = ssub.s32 %s33, 1
    %35 = vst [vmem:[%s1] sm:%s34] %v32

// kernel: dcgan_generator_forward.15
$region0: #{dcgan_generator_forward.15}
  #allocation0 [shape = 'u32[]', space=smem, size = 0x4, offset = 0x4, fixed_abs, tag = 'smem constant byte address 0x4 - core index']
  #allocation1 [shape = 'u32[144,128]{1,0:T(1,128)}', space=vmem, size = 0x12000, scoped, tag = 'internal scratch']
  %s0 = inlined_call_operand.vmem [shape: bf16[512,144], index: 0, kind: input, shape index: {}]
  %s1 = inlined_call_operand.vmem [shape: bf16[144,128], index: 1, kind: input, shape index: {}]
  %s2 = inlined_call_operand.vmem [shape: f32[512,128], index: 2, kind: output, shape index: {0}]
  %s3 = inlined_call_operand.vmem [shape: f32[8,128], index: 3, kind: output, shape index: {1}]
  %s4 = inlined_call_operand.vmem [shape: f32[8,128], index: 4, kind: output, shape index: {2}]
  %5 = xla_tuple %s2, %s3, %s4
  %s6 = sld [smem:[#allocation0]]
  $region34: #{dcgan_generator_forward.15} parent=0
    _
  %s8 = ssub.s32 1, %s6
  %s9 = scalar_select 0, %s8, %s6
  // Predicated region
  $region2: #{dcgan_generator_forward.15} parent=0 // pred_check
    _
  $region3: #{dcgan_generator_forward.15} parent=0 // pred_check_branch
    %11 = sbr.rel (0) target = $region5
  $region4: #{dcgan_generator_forward.15} parent=0 // pred_region
    _
  $region5: #{dcgan_generator_forward.15} parent=0 // pred_fallthru
    _
  // Predicated region
  $region6: #{dcgan_generator_forward.15} parent=0 // pred_check
    _
  $region7: #{dcgan_generator_forward.15} parent=0 // pred_check_branch
    %13 = sbr.rel (0) target = $region9
  $region8: #{dcgan_generator_forward.15} parent=0 // pred_region
    _
  $region9: #{dcgan_generator_forward.15} parent=0 // pred_fallthru
    _
  %v15 = vld [vmem:[%s0] sm:$0xff]
  %v16 = vld [vmem:[%s0 + $0x8] sm:$0xff]
  %v17 = vld [vmem:[%s0 + $0x10] sm:$0xff]
  %v18 = vld [vmem:[%s0 + $0x18] sm:$0xff]
  %v19 = vld [vmem:[%s0 + $0x20] sm:$0xff]
  %v20 = vld [vmem:[%s0 + $0x28] sm:$0xff]
  %v21 = vld [vmem:[%s0 + $0x30] sm:$0xff]
  %v22 = vld [vmem:[%s0 + $0x38] sm:$0xff]
  %v23 = vld [vmem:[%s0 + $0x40] sm:$0xff]
  %v24 = vld [vmem:[%s0 + $0x48] sm:$0xff]
  %v25 = vld [vmem:[%s0 + $0x50] sm:$0xff]
  %v26 = vld [vmem:[%s0 + $0x58] sm:$0xff]
  %v27 = vld [vmem:[%s0 + $0x60] sm:$0xff]
  %v28 = vld [vmem:[%s0 + $0x68] sm:$0xff]
  %v29 = vld [vmem:[%s0 + $0x70] sm:$0xff]
  %v30 = vld [vmem:[%s0 + $0x78] sm:$0xff]
  %v31 = vld [vmem:[%s0 + $0x80] sm:$0xff]
  %v32 = vld [vmem:[%s0 + $0x88] sm:$0xff]
  %v33 = vld [vmem:[%s0 + $0x90] sm:$0xff]
  %v34 = vld [vmem:[%s0 + $0x98] sm:$0xff]
  %v35 = vld [vmem:[%s0 + $0xa0] sm:$0xff]
  %v36 = vld [vmem:[%s0 + $0xa8] sm:$0xff]
  %v37 = vld [vmem:[%s0 + $0xb0] sm:$0xff]
  %v38 = vld [vmem:[%s0 + $0xb8] sm:$0xff]
  %v39 = vld [vmem:[%s0 + $0xc0] sm:$0xff]
  %v40 = vld [vmem:[%s0 + $0xc8] sm:$0xff]
  %v41 = vld [vmem:[%s0 + $0xd0] sm:$0xff]
  %v42 = vld [vmem:[%s0 + $0xd8] sm:$0xff]
  %v43 = vld [vmem:[%s0 + $0xe0] sm:$0xff]
  %v44 = vld [vmem:[%s0 + $0xe8] sm:$0xff]
  %v45 = vld [vmem:[%s0 + $0xf0] sm:$0xff]
  %v46 = vld [vmem:[%s0 + $0xf8] sm:$0xff]
  %v47 = vld [vmem:[%s0 + $0x100] sm:$0xff]
  %v48 = vld [vmem:[%s0 + $0x108] sm:$0xff]
  %v49 = vld [vmem:[%s0 + $0x110] sm:$0xff]
  %v50 = vld [vmem:[%s0 + $0x118] sm:$0xff]
  %v51 = vld [vmem:[%s0 + $0x120] sm:$0xff]
  %v52 = vld [vmem:[%s0 + $0x128] sm:$0xff]
  %v53 = vld [vmem:[%s0 + $0x130] sm:$0xff]
  %v54 = vld [vmem:[%s0 + $0x138] sm:$0xff]
  %v55 = vld [vmem:[%s0 + $0x140] sm:$0xff]
  %v56 = vld [vmem:[%s0 + $0x148] sm:$0xff]
  %v57 = vld [vmem:[%s0 + $0x150] sm:$0xff]
  %v58 = vld [vmem:[%s0 + $0x158] sm:$0xff]
  %v59 = vld [vmem:[%s0 + $0x160] sm:$0xff]
  %v60 = vld [vmem:[%s0 + $0x168] sm:$0xff]
  %v61 = vld [vmem:[%s0 + $0x170] sm:$0xff]
  %v62 = vld [vmem:[%s0 + $0x178] sm:$0xff]
  %v63 = vld [vmem:[%s0 + $0x180] sm:$0xff]
  %v64 = vld [vmem:[%s0 + $0x188] sm:$0xff]
  %v65 = vld [vmem:[%s0 + $0x190] sm:$0xff]
  %v66 = vld [vmem:[%s0 + $0x198] sm:$0xff]
  %v67 = vld [vmem:[%s0 + $0x1a0] sm:$0xff]
  %v68 = vld [vmem:[%s0 + $0x1a8] sm:$0xff]
  %v69 = vld [vmem:[%s0 + $0x1b0] sm:$0xff]
  %v70 = vld [vmem:[%s0 + $0x1b8] sm:$0xff]
  %v71 = vld [vmem:[%s0 + $0x1c0] sm:$0xff]
  %v72 = vld [vmem:[%s0 + $0x1c8] sm:$0xff]
  %v73 = vld [vmem:[%s0 + $0x1d0] sm:$0xff]
  %v74 = vld [vmem:[%s0 + $0x1d8] sm:$0xff]
  %v75 = vld [vmem:[%s0 + $0x1e0] sm:$0xff]
  %v76 = vld [vmem:[%s0 + $0x1e8] sm:$0xff]
  %v77 = vld [vmem:[%s0 + $0x1f0] sm:$0xff]
  %v78 = vld [vmem:[%s0 + $0x1f8] sm:$0xff]
  %v79 = vld [vmem:[%s1] sm:$0xf]
  %v80 = vld [vmem:[%s1 + $0x4] sm:$0xf]
  %v81 = vld [vmem:[%s1 + $0x8] sm:$0xf]
  %v82 = vld [vmem:[%s1 + $0xc] sm:$0xf]
  %v83 = vld [vmem:[%s1 + $0x10] sm:$0xf]
  %v84 = vld [vmem:[%s1 + $0x14] sm:$0xf]
  %v85 = vld [vmem:[%s1 + $0x18] sm:$0xf]
  %v86 = vld [vmem:[%s1 + $0x1c] sm:$0xf]
  %v87 = vld [vmem:[%s1 + $0x20] sm:$0xf]
  %v88 = vld [vmem:[%s1 + $0x24] sm:$0xf]
  %v89 = vld [vmem:[%s1 + $0x28] sm:$0xf]
  %v90 = vld [vmem:[%s1 + $0x2c] sm:$0xf]
  %v91 = vld [vmem:[%s1 + $0x30] sm:$0xf]
  %v92 = vld [vmem:[%s1 + $0x34] sm:$0xf]
  %v93 = vld [vmem:[%s1 + $0x38] sm:$0xf]
  %v94 = vld [vmem:[%s1 + $0x3c] sm:$0xf]
  %v95 = vld [vmem:[%s1 + $0x40] sm:$0xf]
  %v96 = vld [vmem:[%s1 + $0x44] sm:$0xf]
  %v161 = vunpack.c.l.b16 %v15
  %v162 = vunpack.c.h.b16 %v15
  %v163 = vunpack.c.l.b16 %v16
  %v164 = vunpack.c.h.b16 %v16
  %v165 = vunpack.c.l.b16 %v17
  %v166 = vunpack.c.h.b16 %v17
  %v167 = vunpack.c.l.b16 %v18
  %v168 = vunpack.c.h.b16 %v18
  %v169 = vunpack.c.l.b16 %v19
  %v170 = vunpack.c.h.b16 %v19
  %v171 = vunpack.c.l.b16 %v20
  %v172 = vunpack.c.h.b16 %v20
  %v173 = vunpack.c.l.b16 %v21
  %v174 = vunpack.c.h.b16 %v21
  %v175 = vunpack.c.l.b16 %v22
  %v176 = vunpack.c.h.b16 %v22
  %v177 = vunpack.c.l.b16 %v23
  %v178 = vunpack.c.h.b16 %v23
  %v179 = vunpack.c.l.b16 %v24
  %v180 = vunpack.c.h.b16 %v24
  %v181 = vunpack.c.l.b16 %v25
  %v182 = vunpack.c.h.b16 %v25
  %v183 = vunpack.c.l.b16 %v26
  %v184 = vunpack.c.h.b16 %v26
  %v185 = vunpack.c.l.b16 %v27
  %v186 = vunpack.c.h.b16 %v27
  %v187 = vunpack.c.l.b16 %v28
  %v188 = vunpack.c.h.b16 %v28
  %v189 = vunpack.c.l.b16 %v29
  %v190 = vunpack.c.h.b16 %v29
  %v191 = vunpack.c.l.b16 %v30
  %v192 = vunpack.c.h.b16 %v30
  %v193 = vunpack.c.l.b16 %v31
  %v194 = vunpack.c.h.b16 %v31
  %v195 = vunpack.c.l.b16 %v32
  %v196 = vunpack.c.h.b16 %v32
  %v197 = vunpack.c.l.b16 %v33
  %v198 = vunpack.c.h.b16 %v33
  %v199 = vunpack.c.l.b16 %v34
  %v200 = vunpack.c.h.b16 %v34
  %v201 = vunpack.c.l.b16 %v35
  %v202 = vunpack.c.h.b16 %v35
  %v203 = vunpack.c.l.b16 %v36
  %v204 = vunpack.c.h.b16 %v36
  %v205 = vunpack.c.l.b16 %v37
  %v206 = vunpack.c.h.b16 %v37
  %v207 = vunpack.c.l.b16 %v38
  %v208 = vunpack.c.h.b16 %v38
  %v209 = vunpack.c.l.b16 %v39
  %v210 = vunpack.c.h.b16 %v39
  %v211 = vunpack.c.l.b16 %v40
  %v212 = vunpack.c.h.b16 %v40
  %v213 = vunpack.c.l.b16 %v41
  %v214 = vunpack.c.h.b16 %v41
  %v215 = vunpack.c.l.b16 %v42
  %v216 = vunpack.c.h.b16 %v42
  %v217 = vunpack.c.l.b16 %v43
  %v218 = vunpack.c.h.b16 %v43
  %v219 = vunpack.c.l.b16 %v44
  %v220 = vunpack.c.h.b16 %v44
  %v221 = vunpack.c.l.b16 %v45
  %v222 = vunpack.c.h.b16 %v45
  %v223 = vunpack.c.l.b16 %v46
  %v224 = vunpack.c.h.b16 %v46
  %v225 = vunpack.c.l.b16 %v47
  %v226 = vunpack.c.h.b16 %v47
  %v227 = vunpack.c.l.b16 %v48
  %v228 = vunpack.c.h.b16 %v48
  %v229 = vunpack.c.l.b16 %v49
  %v230 = vunpack.c.h.b16 %v49
  %v231 = vunpack.c.l.b16 %v50
  %v232 = vunpack.c.h.b16 %v50
  %v233 = vunpack.c.l.b16 %v51
  %v234 = vunpack.c.h.b16 %v51
  %v235 = vunpack.c.l.b16 %v52
  %v236 = vunpack.c.h.b16 %v52
  %v237 = vunpack.c.l.b16 %v53
  %v238 = vunpack.c.h.b16 %v53
  %v239 = vunpack.c.l.b16 %v54
  %v240 = vunpack.c.h.b16 %v54
  %v241 = vunpack.c.l.b16 %v55
  %v242 = vunpack.c.h.b16 %v55
  %v243 = vunpack.c.l.b16 %v56
  %v244 = vunpack.c.h.b16 %v56
  %v245 = vunpack.c.l.b16 %v57
  %v246 = vunpack.c.h.b16 %v57
  %v247 = vunpack.c.l.b16 %v58
  %v248 = vunpack.c.h.b16 %v58
  %v249 = vunpack.c.l.b16 %v59
  %v250 = vunpack.c.h.b16 %v59
  %v251 = vunpack.c.l.b16 %v60
  %v252 = vunpack.c.h.b16 %v60
  %v253 = vunpack.c.l.b16 %v61
  %v254 = vunpack.c.h.b16 %v61
  %v255 = vunpack.c.l.b16 %v62
  %v256 = vunpack.c.h.b16 %v62
  %v257 = vunpack.c.l.b16 %v63
  %v258 = vunpack.c.h.b16 %v63
  %v259 = vunpack.c.l.b16 %v64
  %v260 = vunpack.c.h.b16 %v64
  %v261 = vunpack.c.l.b16 %v65
  %v262 = vunpack.c.h.b16 %v65
  %v263 = vunpack.c.l.b16 %v66
  %v264 = vunpack.c.h.b16 %v66
  %v265 = vunpack.c.l.b16 %v67
  %v266 = vunpack.c.h.b16 %v67
  %v267 = vunpack.c.l.b16 %v68
  %v268 = vunpack.c.h.b16 %v68
  %v269 = vunpack.c.l.b16 %v69
  %v270 = vunpack.c.h.b16 %v69
  %v271 = vunpack.c.l.b16 %v70
  %v272 = vunpack.c.h.b16 %v70
  %v273 = vunpack.c.l.b16 %v71
  %v274 = vunpack.c.h.b16 %v71
  %v275 = vunpack.c.l.b16 %v72
  %v276 = vunpack.c.h.b16 %v72
  %v277 = vunpack.c.l.b16 %v73
  %v278 = vunpack.c.h.b16 %v73
  %v279 = vunpack.c.l.b16 %v74
  %v280 = vunpack.c.h.b16 %v74
  %v281 = vunpack.c.l.b16 %v75
  %v282 = vunpack.c.h.b16 %v75
  %v283 = vunpack.c.l.b16 %v76
  %v284 = vunpack.c.h.b16 %v76
  %v285 = vunpack.c.l.b16 %v77
  %v286 = vunpack.c.h.b16 %v77
  %v287 = vunpack.c.l.b16 %v78
  %v288 = vunpack.c.h.b16 %v78
  %v289 = vpack.c.b16 %v163, %v161
  %v290 = vpack.c.b16 %v164, %v162
  %v291 = vpack.c.b16 %v167, %v165
  %v292 = vpack.c.b16 %v168, %v166
  %v293 = vpack.c.b16 %v171, %v169
  %v294 = vpack.c.b16 %v172, %v170
  %v295 = vpack.c.b16 %v175, %v173
  %v296 = vpack.c.b16 %v176, %v174
  %v297 = vpack.c.b16 %v179, %v177
  %v298 = vpack.c.b16 %v180, %v178
  %v299 = vpack.c.b16 %v183, %v181
  %v300 = vpack.c.b16 %v184, %v182
  %v301 = vpack.c.b16 %v187, %v185
  %v302 = vpack.c.b16 %v188, %v186
  %v303 = vpack.c.b16 %v191, %v189
  %v304 = vpack.c.b16 %v192, %v190
  %v305 = vpack.c.b16 %v195, %v193
  %v306 = vpack.c.b16 %v196, %v194
  %v307 = vpack.c.b16 %v199, %v197
  %v308 = vpack.c.b16 %v200, %v198
  %v309 = vpack.c.b16 %v203, %v201
  %v310 = vpack.c.b16 %v204, %v202
  %v311 = vpack.c.b16 %v207, %v205
  %v312 = vpack.c.b16 %v208, %v206
  %v313 = vpack.c.b16 %v211, %v209
  %v314 = vpack.c.b16 %v212, %v210
  %v315 = vpack.c.b16 %v215, %v213
  %v316 = vpack.c.b16 %v216, %v214
  %v317 = vpack.c.b16 %v219, %v217
  %v318 = vpack.c.b16 %v220, %v218
  %v319 = vpack.c.b16 %v223, %v221
  %v320 = vpack.c.b16 %v224, %v222
  %v321 = vpack.c.b16 %v227, %v225
  %v322 = vpack.c.b16 %v228, %v226
  %v323 = vpack.c.b16 %v231, %v229
  %v324 = vpack.c.b16 %v232, %v230
  %v325 = vpack.c.b16 %v235, %v233
  %v326 = vpack.c.b16 %v236, %v234
  %v327 = vpack.c.b16 %v239, %v237
  %v328 = vpack.c.b16 %v240, %v238
  %v329 = vpack.c.b16 %v243, %v241
  %v330 = vpack.c.b16 %v244, %v242
  %v331 = vpack.c.b16 %v247, %v245
  %v332 = vpack.c.b16 %v248, %v246
  %v333 = vpack.c.b16 %v251, %v249
  %v334 = vpack.c.b16 %v252, %v250
  %v335 = vpack.c.b16 %v255, %v253
  %v336 = vpack.c.b16 %v256, %v254
  %v337 = vpack.c.b16 %v259, %v257
  %v338 = vpack.c.b16 %v260, %v258
  %v339 = vpack.c.b16 %v263, %v261
  %v340 = vpack.c.b16 %v264, %v262
  %v341 = vpack.c.b16 %v267, %v265
  %v342 = vpack.c.b16 %v268, %v266
  %v343 = vpack.c.b16 %v271, %v269
  %v344 = vpack.c.b16 %v272, %v270
  %v345 = vpack.c.b16 %v275, %v273
  %v346 = vpack.c.b16 %v276, %v274
  %v347 = vpack.c.b16 %v279, %v277
  %v348 = vpack.c.b16 %v280, %v278
  %v349 = vpack.c.b16 %v283, %v281
  %v350 = vpack.c.b16 %v284, %v282
  %v351 = vpack.c.b16 %v287, %v285
  %v352 = vpack.c.b16 %v288, %v286
  %v403 = vunpack.c.l.b16 %v79
  %v404 = vunpack.c.l.b16 %v80
  %v405 = vunpack.c.l.b16 %v81
  %v406 = vunpack.c.l.b16 %v82
  %v407 = vunpack.c.l.b16 %v83
  %v408 = vunpack.c.l.b16 %v84
  %v409 = vunpack.c.l.b16 %v85
  %v410 = vunpack.c.l.b16 %v86
  %v411 = vunpack.c.l.b16 %v87
  %v412 = vunpack.c.l.b16 %v88
  %v413 = vunpack.c.l.b16 %v89
  %v414 = vunpack.c.l.b16 %v90
  %v415 = vunpack.c.l.b16 %v91
  %v416 = vunpack.c.l.b16 %v92
  %v417 = vunpack.c.l.b16 %v93
  %v418 = vunpack.c.l.b16 %v94
  %v419 = vunpack.c.l.b16 %v95
  %v420 = vunpack.c.l.b16 %v96
  %v421 = vpack.c.b16 %v404, %v403
  %v422 = vpack.c.b16 %v406, %v405
  %v423 = vpack.c.b16 %v408, %v407
  %v424 = vpack.c.b16 %v410, %v409
  %v425 = vpack.c.b16 %v412, %v411
  %v426 = vpack.c.b16 %v414, %v413
  %v427 = vpack.c.b16 %v416, %v415
  %v428 = vpack.c.b16 %v418, %v417
  %v429 = vpack.c.b16 %v420, %v419
  %vm439 = vcmask 130048
  %v441 = vsel %vm439, %v290, 0
  %v444 = vsel %vm439, %v292, 0
  %v447 = vsel %vm439, %v294, 0
  %v450 = vsel %vm439, %v296, 0
  %v453 = vsel %vm439, %v298, 0
  %v456 = vsel %vm439, %v300, 0
  %v459 = vsel %vm439, %v302, 0
  %v462 = vsel %vm439, %v304, 0
  %v465 = vsel %vm439, %v306, 0
  %v468 = vsel %vm439, %v308, 0
  %v471 = vsel %vm439, %v310, 0
  %v474 = vsel %vm439, %v312, 0
  %v477 = vsel %vm439, %v314, 0
  %v480 = vsel %vm439, %v316, 0
  %v483 = vsel %vm439, %v318, 0
  %v486 = vsel %vm439, %v320, 0
  %v489 = vsel %vm439, %v322, 0
  %v492 = vsel %vm439, %v324, 0
  %v495 = vsel %vm439, %v326, 0
  %v498 = vsel %vm439, %v328, 0
  %v501 = vsel %vm439, %v330, 0
  %v504 = vsel %vm439, %v332, 0
  %v507 = vsel %vm439, %v334, 0
  %v510 = vsel %vm439, %v336, 0
  %v513 = vsel %vm439, %v338, 0
  %v516 = vsel %vm439, %v340, 0
  %v519 = vsel %vm439, %v342, 0
  %v522 = vsel %vm439, %v344, 0
  %v525 = vsel %vm439, %v346, 0
  %v528 = vsel %vm439, %v348, 0
  %v531 = vsel %vm439, %v350, 0
  %v534 = vsel %vm439, %v352, 0
  %536 = vmatprep.subr.bf16.mxu0 0
  %537 = vmatpush1.bf16.msra.mxu0 %v428
  %538 = vmatprep.subr.bf16.mxu0 0
  %539 = vmatpush1.bf16.msra.mxu0 %v427
  %540 = vmatprep.subr.bf16.mxu0 0
  %541 = vmatpush1.bf16.msra.mxu0 %v426
  %542 = vmatprep.subr.bf16.mxu0 0
  %543 = vmatpush1.bf16.msra.mxu0 %v425
  %544 = vmatprep.subr.bf16.mxu0 0
  %545 = vmatpush1.bf16.msra.mxu0 %v424
  %546 = vmatprep.subr.bf16.mxu0 0
  %547 = vmatpush1.bf16.msra.mxu0 %v423
  %548 = vmatprep.subr.bf16.mxu0 0
  %549 = vmatpush1.bf16.msra.mxu0 %v422
  %550 = vmatprep.subr.bf16.mxu0 0
  %551 = vmatpush1.bf16.msra.mxu0 %v421
  %552 = vmatprep.subr.bf16.mxu0 0
  %553 = vmatpush2.bf16.msra.mxu0 0
  %554 = vmatprep.subr.bf16.mxu0 0
  %555 = vmatpush2.bf16.msra.mxu0 0
  %556 = vmatprep.subr.bf16.mxu0 0
  %557 = vmatpush2.bf16.msra.mxu0 0
  %558 = vmatprep.subr.bf16.mxu0 0
  %559 = vmatpush2.bf16.msra.mxu0 0
  %560 = vmatprep.subr.bf16.mxu0 0
  %561 = vmatpush2.bf16.msra.mxu0 0
  %562 = vmatprep.subr.bf16.mxu0 0
  %563 = vmatpush2.bf16.msra.mxu0 0
  %564 = vmatprep.subr.bf16.mxu0 0
  %565 = vmatpush2.bf16.msra.mxu0 0
  %566 = vmatprep.subr.bf16.mxu0 0
  %567 = vmatpush2.bf16.msra.mxu0 %v429
  %568 = vmatprep.mubr.bf16.mxu0 %v441
  %569 = vmatmul.mubr.bf16.gmra.mxu0 %v289
  %v570 = vpop.f32.mrf.mxu0
  %v571 = vadd.f32 0.0, %v570
  %v572 = vpop.f32.mrf.mxu0
  %v573 = vpop.f32.mrf.mxu0
  %v574 = vadd.f32 0.0, %v573
  %v575 = vpop.f32.mrf.mxu0
  %576 = vmatprep.mubr.bf16.mxu0 %v444
  %577 = vmatmul.mubr.bf16.gmra.mxu0 %v291
  %v578 = vpop.f32.mrf.mxu0
  %v579 = vadd.f32 0.0, %v578
  %v580 = vpop.f32.mrf.mxu0
  %v581 = vpop.f32.mrf.mxu0
  %v582 = vadd.f32 0.0, %v581
  %v583 = vpop.f32.mrf.mxu0
  %584 = vmatprep.mubr.bf16.mxu0 %v447
  %585 = vmatmul.mubr.bf16.gmra.mxu0 %v293
  %v586 = vpop.f32.mrf.mxu0
  %v587 = vadd.f32 0.0, %v586
  %v588 = vpop.f32.mrf.mxu0
  %v589 = vpop.f32.mrf.mxu0
  %v590 = vadd.f32 0.0, %v589
  %v591 = vpop.f32.mrf.mxu0
  %592 = vmatprep.mubr.bf16.mxu0 %v450
  %593 = vmatmul.mubr.bf16.gmra.mxu0 %v295
  %v594 = vpop.f32.mrf.mxu0
  %v595 = vadd.f32 0.0, %v594
  %v596 = vpop.f32.mrf.mxu0
  %v597 = vpop.f32.mrf.mxu0
  %v598 = vadd.f32 0.0, %v597
  %v599 = vpop.f32.mrf.mxu0
  %600 = vmatprep.mubr.bf16.mxu0 %v453
  %601 = vmatmul.mubr.bf16.gmra.mxu0 %v297
  %v602 = vpop.f32.mrf.mxu0
  %v603 = vadd.f32 0.0, %v602
  %v604 = vpop.f32.mrf.mxu0
  %v605 = vpop.f32.mrf.mxu0
  %v606 = vadd.f32 0.0, %v605
  %v607 = vpop.f32.mrf.mxu0
  %608 = vmatprep.mubr.bf16.mxu0 %v456
  %609 = vmatmul.mubr.bf16.gmra.mxu0 %v299
  %v610 = vpop.f32.mrf.mxu0
  %v611 = vadd.f32 0.0, %v610
  %v612 = vpop.f32.mrf.mxu0
  %v613 = vpop.f32.mrf.mxu0
  %v614 = vadd.f32 0.0, %v613
  %v615 = vpop.f32.mrf.mxu0
  %616 = vmatprep.mubr.bf16.mxu0 %v459
  %617 = vmatmul.mubr.bf16.gmra.mxu0 %v301
  %v618 = vpop.f32.mrf.mxu0
  %v619 = vadd.f32 0.0, %v618
  %v620 = vpop.f32.mrf.mxu0
  %v621 = vpop.f32.mrf.mxu0
  %v622 = vadd.f32 0.0, %v621
  %v623 = vpop.f32.mrf.mxu0
  %624 = vmatprep.mubr.bf16.mxu0 %v462
  %625 = vmatmul.mubr.bf16.gmra.mxu0 %v303
  %v626 = vpop.f32.mrf.mxu0
  %v627 = vadd.f32 0.0, %v626
  %v628 = vpop.f32.mrf.mxu0
  %v629 = vpop.f32.mrf.mxu0
  %v630 = vadd.f32 0.0, %v629
  %v631 = vpop.f32.mrf.mxu0
  %632 = vmatprep.mubr.bf16.mxu0 %v465
  %633 = vmatmul.mubr.bf16.gmra.mxu0 %v305
  %v634 = vpop.f32.mrf.mxu0
  %v635 = vadd.f32 0.0, %v634
  %v636 = vpop.f32.mrf.mxu0
  %v637 = vpop.f32.mrf.mxu0
  %v638 = vadd.f32 0.0, %v637
  %v639 = vpop.f32.mrf.mxu0
  %640 = vmatprep.mubr.bf16.mxu0 %v468
  %641 = vmatmul.mubr.bf16.gmra.mxu0 %v307
  %v642 = vpop.f32.mrf.mxu0
  %v643 = vadd.f32 0.0, %v642
  %v644 = vpop.f32.mrf.mxu0
  %v645 = vpop.f32.mrf.mxu0
  %v646 = vadd.f32 0.0, %v645
  %v647 = vpop.f32.mrf.mxu0
  %648 = vmatprep.mubr.bf16.mxu0 %v471
  %649 = vmatmul.mubr.bf16.gmra.mxu0 %v309
  %v650 = vpop.f32.mrf.mxu0
  %v651 = vadd.f32 0.0, %v650
  %v652 = vpop.f32.mrf.mxu0
  %v653 = vpop.f32.mrf.mxu0
  %v654 = vadd.f32 0.0, %v653
  %v655 = vpop.f32.mrf.mxu0
  %656 = vmatprep.mubr.bf16.mxu0 %v474
  %657 = vmatmul.mubr.bf16.gmra.mxu0 %v311
  %v658 = vpop.f32.mrf.mxu0
  %v659 = vadd.f32 0.0, %v658
  %v660 = vpop.f32.mrf.mxu0
  %v661 = vpop.f32.mrf.mxu0
  %v662 = vadd.f32 0.0, %v661
  %v663 = vpop.f32.mrf.mxu0
  %664 = vmatprep.mubr.bf16.mxu0 %v477
  %665 = vmatmul.mubr.bf16.gmra.mxu0 %v313
  %v666 = vpop.f32.mrf.mxu0
  %v667 = vadd.f32 0.0, %v666
  %v668 = vpop.f32.mrf.mxu0
  %v669 = vpop.f32.mrf.mxu0
  %v670 = vadd.f32 0.0, %v669
  %v671 = vpop.f32.mrf.mxu0
  %672 = vmatprep.mubr.bf16.mxu0 %v480
  %673 = vmatmul.mubr.bf16.gmra.mxu0 %v315
  %v674 = vpop.f32.mrf.mxu0
  %v675 = vadd.f32 0.0, %v674
  %v676 = vpop.f32.mrf.mxu0
  %v677 = vpop.f32.mrf.mxu0
  %v678 = vadd.f32 0.0, %v677
  %v679 = vpop.f32.mrf.mxu0
  %680 = vmatprep.mubr.bf16.mxu0 %v483
  %681 = vmatmul.mubr.bf16.gmra.mxu0 %v317
  %v682 = vpop.f32.mrf.mxu0
  %v683 = vadd.f32 0.0, %v682
  %v684 = vpop.f32.mrf.mxu0
  %v685 = vpop.f32.mrf.mxu0
  %v686 = vadd.f32 0.0, %v685
  %v687 = vpop.f32.mrf.mxu0
  %688 = vmatprep.mubr.bf16.mxu0 %v486
  %689 = vmatmul.mubr.bf16.gmra.mxu0 %v319
  %v690 = vpop.f32.mrf.mxu0
  %v691 = vadd.f32 0.0, %v690
  %v692 = vpop.f32.mrf.mxu0
  %v693 = vpop.f32.mrf.mxu0
  %v694 = vadd.f32 0.0, %v693
  %v695 = vpop.f32.mrf.mxu0
  %696 = vmatprep.mubr.bf16.mxu0 %v489
  %697 = vmatmul.mubr.bf16.gmra.mxu0 %v321
  %v698 = vpop.f32.mrf.mxu0
  %v699 = vadd.f32 0.0, %v698
  %v700 = vpop.f32.mrf.mxu0
  %v701 = vpop.f32.mrf.mxu0
  %v702 = vadd.f32 0.0, %v701
  %v703 = vpop.f32.mrf.mxu0
  %704 = vmatprep.mubr.bf16.mxu0 %v492
  %705 = vmatmul.mubr.bf16.gmra.mxu0 %v323
  %v706 = vpop.f32.mrf.mxu0
  %v707 = vadd.f32 0.0, %v706
  %v708 = vpop.f32.mrf.mxu0
  %v709 = vpop.f32.mrf.mxu0
  %v710 = vadd.f32 0.0, %v709
  %v711 = vpop.f32.mrf.mxu0
  %712 = vmatprep.mubr.bf16.mxu0 %v495
  %713 = vmatmul.mubr.bf16.gmra.mxu0 %v325
  %v714 = vpop.f32.mrf.mxu0
  %v715 = vadd.f32 0.0, %v714
  %v716 = vpop.f32.mrf.mxu0
  %v717 = vpop.f32.mrf.mxu0
  %v718 = vadd.f32 0.0, %v717
  %v719 = vpop.f32.mrf.mxu0
  %720 = vmatprep.mubr.bf16.mxu0 %v498
  %721 = vmatmul.mubr.bf16.gmra.mxu0 %v327
  %v722 = vpop.f32.mrf.mxu0
  %v723 = vadd.f32 0.0, %v722
  %v724 = vpop.f32.mrf.mxu0
  %v725 = vpop.f32.mrf.mxu0
  %v726 = vadd.f32 0.0, %v725
  %v727 = vpop.f32.mrf.mxu0
  %728 = vmatprep.mubr.bf16.mxu0 %v501
  %729 = vmatmul.mubr.bf16.gmra.mxu0 %v329
  %v730 = vpop.f32.mrf.mxu0
  %v731 = vadd.f32 0.0, %v730
  %v732 = vpop.f32.mrf.mxu0
  %v733 = vpop.f32.mrf.mxu0
  %v734 = vadd.f32 0.0, %v733
  %v735 = vpop.f32.mrf.mxu0
  %736 = vmatprep.mubr.bf16.mxu0 %v504
  %737 = vmatmul.mubr.bf16.gmra.mxu0 %v331
  %v738 = vpop.f32.mrf.mxu0
  %v739 = vadd.f32 0.0, %v738
  %v740 = vpop.f32.mrf.mxu0
  %v741 = vpop.f32.mrf.mxu0
  %v742 = vadd.f32 0.0, %v741
  %v743 = vpop.f32.mrf.mxu0
  %744 = vmatprep.mubr.bf16.mxu0 %v507
  %745 = vmatmul.mubr.bf16.gmra.mxu0 %v333
  %v746 = vpop.f32.mrf.mxu0
  %v747 = vadd.f32 0.0, %v746
  %v748 = vpop.f32.mrf.mxu0
  %v749 = vpop.f32.mrf.mxu0
  %v750 = vadd.f32 0.0, %v749
  %v751 = vpop.f32.mrf.mxu0
  %752 = vmatprep.mubr.bf16.mxu0 %v510
  %753 = vmatmul.mubr.bf16.gmra.mxu0 %v335
  %v754 = vpop.f32.mrf.mxu0
  %v755 = vadd.f32 0.0, %v754
  %v756 = vpop.f32.mrf.mxu0
  %v757 = vpop.f32.mrf.mxu0
  %v758 = vadd.f32 0.0, %v757
  %v759 = vpop.f32.mrf.mxu0
  %760 = vmatprep.mubr.bf16.mxu0 %v513
  %761 = vmatmul.mubr.bf16.gmra.mxu0 %v337
  %v762 = vpop.f32.mrf.mxu0
  %v763 = vadd.f32 0.0, %v762
  %v764 = vpop.f32.mrf.mxu0
  %v765 = vpop.f32.mrf.mxu0
  %v766 = vadd.f32 0.0, %v765
  %v767 = vpop.f32.mrf.mxu0
  %768 = vmatprep.mubr.bf16.mxu0 %v516
  %769 = vmatmul.mubr.bf16.gmra.mxu0 %v339
  %v770 = vpop.f32.mrf.mxu0
  %v771 = vadd.f32 0.0, %v770
  %v772 = vpop.f32.mrf.mxu0
  %v773 = vpop.f32.mrf.mxu0
  %v774 = vadd.f32 0.0, %v773
  %v775 = vpop.f32.mrf.mxu0
  %776 = vmatprep.mubr.bf16.mxu0 %v519
  %777 = vmatmul.mubr.bf16.gmra.mxu0 %v341
  %v778 = vpop.f32.mrf.mxu0
  %v779 = vadd.f32 0.0, %v778
  %v780 = vpop.f32.mrf.mxu0
  %v781 = vpop.f32.mrf.mxu0
  %v782 = vadd.f32 0.0, %v781
  %v783 = vpop.f32.mrf.mxu0
  %784 = vmatprep.mubr.bf16.mxu0 %v522
  %785 = vmatmul.mubr.bf16.gmra.mxu0 %v343
  %v786 = vpop.f32.mrf.mxu0
  %v787 = vadd.f32 0.0, %v786
  %v788 = vpop.f32.mrf.mxu0
  %v789 = vpop.f32.mrf.mxu0
  %v790 = vadd.f32 0.0, %v789
  %v791 = vpop.f32.mrf.mxu0
  %792 = vmatprep.mubr.bf16.mxu0 %v525
  %793 = vmatmul.mubr.bf16.gmra.mxu0 %v345
  %v794 = vpop.f32.mrf.mxu0
  %v795 = vadd.f32 0.0, %v794
  %v796 = vpop.f32.mrf.mxu0
  %v797 = vpop.f32.mrf.mxu0
  %v798 = vadd.f32 0.0, %v797
  %v799 = vpop.f32.mrf.mxu0
  %800 = vmatprep.mubr.bf16.mxu0 %v528
  %801 = vmatmul.mubr.bf16.gmra.mxu0 %v347
  %v802 = vpop.f32.mrf.mxu0
  %v803 = vadd.f32 0.0, %v802
  %v804 = vpop.f32.mrf.mxu0
  %v805 = vpop.f32.mrf.mxu0
  %v806 = vadd.f32 0.0, %v805
  %v807 = vpop.f32.mrf.mxu0
  %808 = vmatprep.mubr.bf16.mxu0 %v531
  %809 = vmatmul.mubr.bf16.gmra.mxu0 %v349
  %v810 = vpop.f32.mrf.mxu0
  %v811 = vadd.f32 0.0, %v810
  %v812 = vpop.f32.mrf.mxu0
  %v813 = vpop.f32.mrf.mxu0
  %v814 = vadd.f32 0.0, %v813
  %v815 = vpop.f32.mrf.mxu0
  %816 = vmatprep.mubr.bf16.mxu0 %v534
  %817 = vmatmul.mubr.bf16.gmra.mxu0 %v351
  %v818 = vpop.f32.mrf.mxu0
  %v819 = vadd.f32 0.0, %v818
  %v820 = vpop.f32.mrf.mxu0
  %v821 = vpop.f32.mrf.mxu0
  %v822 = vadd.f32 0.0, %v821
  %v823 = vpop.f32.mrf.mxu0
  %824 = vdwg.mxu0
  %825 = vst [vmem:[%s2] sm:$0xff] %v571
  %826 = vst [vmem:[%s2 + $0x8] sm:$0xff] %v574
  %827 = vst [vmem:[%s2 + $0x10] sm:$0xff] %v579
  %828 = vst [vmem:[%s2 + $0x18] sm:$0xff] %v582
  %829 = vst [vmem:[%s2 + $0x20] sm:$0xff] %v587
  %830 = vst [vmem:[%s2 + $0x28] sm:$0xff] %v590
  %831 = vst [vmem:[%s2 + $0x30] sm:$0xff] %v595
  %832 = vst [vmem:[%s2 + $0x38] sm:$0xff] %v598
  %833 = vst [vmem:[%s2 + $0x40] sm:$0xff] %v603
  %834 = vst [vmem:[%s2 + $0x48] sm:$0xff] %v606
  %835 = vst [vmem:[%s2 + $0x50] sm:$0xff] %v611
  %836 = vst [vmem:[%s2 + $0x58] sm:$0xff] %v614
  %837 = vst [vmem:[%s2 + $0x60] sm:$0xff] %v619
  %838 = vst [vmem:[%s2 + $0x68] sm:$0xff] %v622
  %839 = vst [vmem:[%s2 + $0x70] sm:$0xff] %v627
  %840 = vst [vmem:[%s2 + $0x78] sm:$0xff] %v630
  %841 = vst [vmem:[%s2 + $0x80] sm:$0xff] %v635
  %842 = vst [vmem:[%s2 + $0x88] sm:$0xff] %v638
  %843 = vst [vmem:[%s2 + $0x90] sm:$0xff] %v643
  %844 = vst [vmem:[%s2 + $0x98] sm:$0xff] %v646
  %845 = vst [vmem:[%s2 + $0xa0] sm:$0xff] %v651
  %846 = vst [vmem:[%s2 + $0xa8] sm:$0xff] %v654
  %847 = vst [vmem:[%s2 + $0xb0] sm:$0xff] %v659
  %848 = vst [vmem:[%s2 + $0xb8] sm:$0xff] %v662
  %849 = vst [vmem:[%s2 + $0xc0] sm:$0xff] %v667
  %850 = vst [vmem:[%s2 + $0xc8] sm:$0xff] %v670
  %851 = vst [vmem:[%s2 + $0xd0] sm:$0xff] %v675
  %852 = vst [vmem:[%s2 + $0xd8] sm:$0xff] %v678
  %853 = vst [vmem:[%s2 + $0xe0] sm:$0xff] %v683
  %854 = vst [vmem:[%s2 + $0xe8] sm:$0xff] %v686
  %855 = vst [vmem:[%s2 + $0xf0] sm:$0xff] %v691
  %856 = vst [vmem:[%s2 + $0xf8] sm:$0xff] %v694
  %857 = vst [vmem:[%s2 + $0x100] sm:$0xff] %v699
  %858 = vst [vmem:[%s2 + $0x108] sm:$0xff] %v702
  %859 = vst [vmem:[%s2 + $0x110] sm:$0xff] %v707
  %860 = vst [vmem:[%s2 + $0x118] sm:$0xff] %v710
  %861 = vst [vmem:[%s2 + $0x120] sm:$0xff] %v715
  %862 = vst [vmem:[%s2 + $0x128] sm:$0xff] %v718
  %863 = vst [vmem:[%s2 + $0x130] sm:$0xff] %v723
  %864 = vst [vmem:[%s2 + $0x138] sm:$0xff] %v726
  %865 = vst [vmem:[%s2 + $0x140] sm:$0xff] %v731
  %866 = vst [vmem:[%s2 + $0x148] sm:$0xff] %v734
  %867 = vst [vmem:[%s2 + $0x150] sm:$0xff] %v739
  %868 = vst [vmem:[%s2 + $0x158] sm:$0xff] %v742
  %869 = vst [vmem:[%s2 + $0x160] sm:$0xff] %v747
  %870 = vst [vmem:[%s2 + $0x168] sm:$0xff] %v750
  %871 = vst [vmem:[%s2 + $0x170] sm:$0xff] %v755
  %872 = vst [vmem:[%s2 + $0x178] sm:$0xff] %v758
  %873 = vst [vmem:[%s2 + $0x180] sm:$0xff] %v763
  %874 = vst [vmem:[%s2 + $0x188] sm:$0xff] %v766
  %875 = vst [vmem:[%s2 + $0x190] sm:$0xff] %v771
  %876 = vst [vmem:[%s2 + $0x198] sm:$0xff] %v774
  %877 = vst [vmem:[%s2 + $0x1a0] sm:$0xff] %v779
  %878 = vst [vmem:[%s2 + $0x1a8] sm:$0xff] %v782
  %879 = vst [vmem:[%s2 + $0x1b0] sm:$0xff] %v787
  %880 = vst [vmem:[%s2 + $0x1b8] sm:$0xff] %v790
  %881 = vst [vmem:[%s2 + $0x1c0] sm:$0xff] %v795
  %882 = vst [vmem:[%s2 + $0x1c8] sm:$0xff] %v798
  %883 = vst [vmem:[%s2 + $0x1d0] sm:$0xff] %v803
  %884 = vst [vmem:[%s2 + $0x1d8] sm:$0xff] %v806
  %885 = vst [vmem:[%s2 + $0x1e0] sm:$0xff] %v811
  %886 = vst [vmem:[%s2 + $0x1e8] sm:$0xff] %v814
  %887 = vst [vmem:[%s2 + $0x1f0] sm:$0xff] %v819
  %888 = vst [vmem:[%s2 + $0x1f8] sm:$0xff] %v822
  %v889 = vadd.f32 %v571, %v574
  %v890 = vadd.f32 %v889, %v579
  %v891 = vadd.f32 %v890, %v582
  %v892 = vadd.f32 %v891, %v587
  %v893 = vadd.f32 %v892, %v590
  %v894 = vadd.f32 %v893, %v595
  %v895 = vadd.f32 %v894, %v598
  %v896 = vadd.f32 %v895, %v603
  %v897 = vadd.f32 %v896, %v606
  %v898 = vadd.f32 %v897, %v611
  %v899 = vadd.f32 %v898, %v614
  %v900 = vadd.f32 %v899, %v619
  %v901 = vadd.f32 %v900, %v622
  %v902 = vadd.f32 %v901, %v627
  %v903 = vadd.f32 %v902, %v630
  %v904 = vadd.f32 %v903, %v635
  %v905 = vadd.f32 %v904, %v638
  %v906 = vadd.f32 %v905, %v643
  %v907 = vadd.f32 %v906, %v646
  %v908 = vadd.f32 %v907, %v651
  %v909 = vadd.f32 %v908, %v654
  %v910 = vadd.f32 %v909, %v659
  %v911 = vadd.f32 %v910, %v662
  %v912 = vadd.f32 %v911, %v667
  %v913 = vadd.f32 %v912, %v670
  %v914 = vadd.f32 %v913, %v675
  %v915 = vadd.f32 %v914, %v678
  %v916 = vadd.f32 %v915, %v683
  %v917 = vadd.f32 %v916, %v686
  %v918 = vadd.f32 %v917, %v691
  %v919 = vadd.f32 %v918, %v694
  %v920 = vadd.f32 %v919, %v699
  %v921 = vadd.f32 %v920, %v702
  %v922 = vadd.f32 %v921, %v707
  %v923 = vadd.f32 %v922, %v710
  %v924 = vadd.f32 %v923, %v715
  %v925 = vadd.f32 %v924, %v718
  %v926 = vadd.f32 %v925, %v723
  %v927 = vadd.f32 %v926, %v726
  %v928 = vadd.f32 %v927, %v731
  %v929 = vadd.f32 %v928, %v734
  %v930 = vadd.f32 %v929, %v739
  %v931 = vadd.f32 %v930, %v742
  %v932 = vadd.f32 %v931, %v747
  %v933 = vadd.f32 %v932, %v750
  %v934 = vadd.f32 %v933, %v755
  %v935 = vadd.f32 %v934, %v758
  %v936 = vadd.f32 %v935, %v763
  %v937 = vadd.f32 %v936, %v766
  %v938 = vadd.f32 %v937, %v771
  %v939 = vadd.f32 %v938, %v774
  %v940 = vadd.f32 %v939, %v779
  %v941 = vadd.f32 %v940, %v782
  %v942 = vadd.f32 %v941, %v787
  %v943 = vadd.f32 %v942, %v790
  %v944 = vadd.f32 %v943, %v795
  %v945 = vadd.f32 %v944, %v798
  %v946 = vadd.f32 %v945, %v803
  %v947 = vadd.f32 %v946, %v806
  %v948 = vadd.f32 %v947, %v811
  %v949 = vadd.f32 %v948, %v814
  %v950 = vadd.f32 %v949, %v819
  %v951 = vadd.f32 %v950, %v822
  %v952 = vrot.slane %v951, 4
  %v953 = vadd.f32 %v951, %v952
  %v954 = vrot.slane %v953, 2
  %v955 = vadd.f32 %v953, %v954
  %v956 = vrot.slane %v955, 1
  %v957 = vadd.f32 %v955, %v956
  %v958 = vmul.f32 %v571, %v571
  %v959 = vmul.f32 %v574, %v574
  %v960 = vmul.f32 %v579, %v579
  %v961 = vmul.f32 %v582, %v582
  %v962 = vmul.f32 %v587, %v587
  %v963 = vmul.f32 %v590, %v590
  %v964 = vmul.f32 %v595, %v595
  %v965 = vmul.f32 %v598, %v598
  %v966 = vmul.f32 %v603, %v603
  %v967 = vmul.f32 %v606, %v606
  %v968 = vmul.f32 %v611, %v611
  %v969 = vmul.f32 %v614, %v614
  %v970 = vmul.f32 %v619, %v619
  %v971 = vmul.f32 %v622, %v622
  %v972 = vmul.f32 %v627, %v627
  %v973 = vmul.f32 %v630, %v630
  %v974 = vmul.f32 %v635, %v635
  %v975 = vmul.f32 %v638, %v638
  %v976 = vmul.f32 %v643, %v643
  %v977 = vmul.f32 %v646, %v646
  %v978 = vmul.f32 %v651, %v651
  %v979 = vmul.f32 %v654, %v654
  %v980 = vmul.f32 %v659, %v659
  %v981 = vmul.f32 %v662, %v662
  %v982 = vmul.f32 %v667, %v667
  %v983 = vmul.f32 %v670, %v670
  %v984 = vmul.f32 %v675, %v675
  %v985 = vmul.f32 %v678, %v678
  %v986 = vmul.f32 %v683, %v683
  %v987 = vmul.f32 %v686, %v686
  %v988 = vmul.f32 %v691, %v691
  %v989 = vmul.f32 %v694, %v694
  %v990 = vmul.f32 %v699, %v699
  %v991 = vmul.f32 %v702, %v702
  %v992 = vmul.f32 %v707, %v707
  %v993 = vmul.f32 %v710, %v710
  %v994 = vmul.f32 %v715, %v715
  %v995 = vmul.f32 %v718, %v718
  %v996 = vmul.f32 %v723, %v723
  %v997 = vmul.f32 %v726, %v726
  %v998 = vmul.f32 %v731, %v731
  %v999 = vmul.f32 %v734, %v734
  %v1000 = vmul.f32 %v739, %v739
  %v1001 = vmul.f32 %v742, %v742
  %v1002 = vmul.f32 %v747, %v747
  %v1003 = vmul.f32 %v750, %v750
  %v1004 = vmul.f32 %v755, %v755
  %v1005 = vmul.f32 %v758, %v758
  %v1006 = vmul.f32 %v763, %v763
  %v1007 = vmul.f32 %v766, %v766
  %v1008 = vmul.f32 %v771, %v771
  %v1009 = vmul.f32 %v774, %v774
  %v1010 = vmul.f32 %v779, %v779
  %v1011 = vmul.f32 %v782, %v782
  %v1012 = vmul.f32 %v787, %v787
  %v1013 = vmul.f32 %v790, %v790
  %v1014 = vmul.f32 %v795, %v795
  %v1015 = vmul.f32 %v798, %v798
  %v1016 = vmul.f32 %v803, %v803
  %v1017 = vmul.f32 %v806, %v806
  %v1018 = vmul.f32 %v811, %v811
  %v1019 = vmul.f32 %v814, %v814
  %v1020 = vmul.f32 %v819, %v819
  %v1021 = vmul.f32 %v822, %v822
  %v1022 = vadd.f32 %v958, %v959
  %v1023 = vadd.f32 %v1022, %v960
  %v1024 = vadd.f32 %v1023, %v961
  %v1025 = vadd.f32 %v1024, %v962
  %v1026 = vadd.f32 %v1025, %v963
  %v1027 = vadd.f32 %v1026, %v964
  %v1028 = vadd.f32 %v1027, %v965
  %v1029 = vadd.f32 %v1028, %v966
  %v1030 = vadd.f32 %v1029, %v967
  %v1031 = vadd.f32 %v1030, %v968
  %v1032 = vadd.f32 %v1031, %v969
  %v1033 = vadd.f32 %v1032, %v970
  %v1034 = vadd.f32 %v1033, %v971
  %v1035 = vadd.f32 %v1034, %v972
  %v1036 = vadd.f32 %v1035, %v973
  %v1037 = vadd.f32 %v1036, %v974
  %v1038 = vadd.f32 %v1037, %v975
  %v1039 = vadd.f32 %v1038, %v976
  %v1040 = vadd.f32 %v1039, %v977
  %v1041 = vadd.f32 %v1040, %v978
  %v1042 = vadd.f32 %v1041, %v979
  %v1043 = vadd.f32 %v1042, %v980
  %v1044 = vadd.f32 %v1043, %v981
  %v1045 = vadd.f32 %v1044, %v982
  %v1046 = vadd.f32 %v1045, %v983
  %v1047 = vadd.f32 %v1046, %v984
  %v1048 = vadd.f32 %v1047, %v985
  %v1049 = vadd.f32 %v1048, %v986
  %v1050 = vadd.f32 %v1049, %v987
  %v1051 = vadd.f32 %v1050, %v988
  %v1052 = vadd.f32 %v1051, %v989
  %v1053 = vadd.f32 %v1052, %v990
  %v1054 = vadd.f32 %v1053, %v991
  %v1055 = vadd.f32 %v1054, %v992
  %v1056 = vadd.f32 %v1055, %v993
  %v1057 = vadd.f32 %v1056, %v994
  %v1058 = vadd.f32 %v1057, %v995
  %v1059 = vadd.f32 %v1058, %v996
  %v1060 = vadd.f32 %v1059, %v997
  %v1061 = vadd.f32 %v1060, %v998
  %v1062 = vadd.f32 %v1061, %v999
  %v1063 = vadd.f32 %v1062, %v1000
  %v1064 = vadd.f32 %v1063, %v1001
  %v1065 = vadd.f32 %v1064, %v1002
  %v1066 = vadd.f32 %v1065, %v1003
  %v1067 = vadd.f32 %v1066, %v1004
  %v1068 = vadd.f32 %v1067, %v1005
  %v1069 = vadd.f32 %v1068, %v1006
  %v1070 = vadd.f32 %v1069, %v1007
  %v1071 = vadd.f32 %v1070, %v1008
  %v1072 = vadd.f32 %v1071, %v1009
  %v1073 = vadd.f32 %v1072, %v1010
  %v1074 = vadd.f32 %v1073, %v1011
  %v1075 = vadd.f32 %v1074, %v1012
  %v1076 = vadd.f32 %v1075, %v1013
  %v1077 = vadd.f32 %v1076, %v1014
  %v1078 = vadd.f32 %v1077, %v1015
  %v1079 = vadd.f32 %v1078, %v1016
  %v1080 = vadd.f32 %v1079, %v1017
  %v1081 = vadd.f32 %v1080, %v1018
  %v1082 = vadd.f32 %v1081, %v1019
  %v1083 = vadd.f32 %v1082, %v1020
  %v1084 = vadd.f32 %v1083, %v1021
  %v1085 = vrot.slane %v1084, 4
  %v1086 = vadd.f32 %v1084, %v1085
  %v1087 = vrot.slane %v1086, 2
  %v1088 = vadd.f32 %v1086, %v1087
  %v1089 = vrot.slane %v1088, 1
  %v1090 = vadd.f32 %v1088, %v1089
  %1091 = vst [vmem:[%s3] sm:$0xff] %v957
  %1092 = vst [vmem:[%s4] sm:$0xff] %v1090
  // Predicated region
  $region10: #{dcgan_generator_forward.15} parent=0 // pred_check
    _
  $region11: #{dcgan_generator_forward.15} parent=0 // pred_check_branch
    %1094 = sbr.rel (0) target = $region13
  $region12: #{dcgan_generator_forward.15} parent=0 // pred_region
    _
  $region13: #{dcgan_generator_forward.15} parent=0 // pred_fallthru
    _
  // Predicated region
  $region14: #{dcgan_generator_forward.15} parent=0 // pred_check
    _
  $region15: #{dcgan_generator_forward.15} parent=0 // pred_check_branch
    %1096 = sbr.rel (0) target = $region17
  $region16: #{dcgan_generator_forward.15} parent=0 // pred_region
    _
  $region17: #{dcgan_generator_forward.15} parent=0 // pred_fallthru
    _
  // Predicated region
  $region18: #{dcgan_generator_forward.15} parent=0 // pred_check
    _
  $region19: #{dcgan_generator_forward.15} parent=0 // pred_check_branch
    %1098 = sbr.rel (0) target = $region21
  $region20: #{dcgan_generator_forward.15} parent=0 // pred_region
    _
  $region21: #{dcgan_generator_forward.15} parent=0 // pred_fallthru
    _
  // Predicated region
  $region22: #{dcgan_generator_forward.15} parent=0 // pred_check
    _
  $region23: #{dcgan_generator_forward.15} parent=0 // pred_check_branch
    %1100 = sbr.rel (0) target = $region25
  $region24: #{dcgan_generator_forward.15} parent=0 // pred_region
    _
  $region25: #{dcgan_generator_forward.15} parent=0 // pred_fallthru
    _
  // Predicated region
  $region26: #{dcgan_generator_forward.15} parent=0 // pred_check
    _
  $region27: #{dcgan_generator_forward.15} parent=0 // pred_check_branch
    %1102 = sbr.rel (0) target = $region29
  $region28: #{dcgan_generator_forward.15} parent=0 // pred_region
    _
  $region29: #{dcgan_generator_forward.15} parent=0 // pred_fallthru
    _
  // Predicated region
  $region30: #{dcgan_generator_forward.15} parent=0 // pred_check
    _
  $region31: #{dcgan_generator_forward.15} parent=0 // pred_check_branch
    %1104 = sbr.rel (0) target = $region33
  $region32: #{dcgan_generator_forward.15} parent=0 // pred_region
    _
  $region33: #{dcgan_generator_forward.15} parent=0 // pred_fallthru
    _

// kernel: dcgan_generator_forward.16
$region0: #{dcgan_generator_forward.16}
  #allocation0 [shape = 'u32[]', space=smem, size = 0x4, offset = 0x4, fixed_abs, tag = 'smem constant byte address 0x4 - core index']
  #allocation1 [shape = 'u32[144,128]{1,0:T(1,128)}', space=vmem, size = 0x12000, scoped, tag = 'internal scratch']
  %s0 = inlined_call_operand.vmem [shape: f32[512,128], index: 0, kind: input, shape index: {}, may-alias: {0,3}]
  %s1 = inlined_call_operand.vmem [shape: f32[1,128], index: 1, kind: input, shape index: {}]
  %s2 = inlined_call_operand.vmem [shape: f32[1,128], index: 2, kind: input, shape index: {}]
  %s3 = inlined_call_operand.vmem [shape: f32[512,128], index: 3, kind: output, shape index: {}, may-alias: {0,3}]
  %s4 = sld [smem:[#allocation0]]
  $region22: #{dcgan_generator_forward.16} parent=0
    _
  %s6 = ssub.s32 1, %s4
  %s7 = scalar_select 0, %s6, %s4
  // Predicated region
  $region2: #{dcgan_generator_forward.16} parent=0 // pred_check
    _
  $region3: #{dcgan_generator_forward.16} parent=0 // pred_check_branch
    %9 = sbr.rel (0) target = $region5
  $region4: #{dcgan_generator_forward.16} parent=0 // pred_region
    _
  $region5: #{dcgan_generator_forward.16} parent=0 // pred_fallthru
    _
  // Predicated region
  $region6: #{dcgan_generator_forward.16} parent=0 // pred_check
    _
  $region7: #{dcgan_generator_forward.16} parent=0 // pred_check_branch
    %11 = sbr.rel (0) target = $region9
  $region8: #{dcgan_generator_forward.16} parent=0 // pred_region
    _
  $region9: #{dcgan_generator_forward.16} parent=0 // pred_fallthru
    _
  // Predicated region
  $region10: #{dcgan_generator_forward.16} parent=0 // pred_check
    _
  $region11: #{dcgan_generator_forward.16} parent=0 // pred_check_branch
    %13 = sbr.rel (0) target = $region13
  $region12: #{dcgan_generator_forward.16} parent=0 // pred_region
    _
  $region13: #{dcgan_generator_forward.16} parent=0 // pred_fallthru
    _
  %v14 = vld [vmem:[%s0] sm:$0xff]
  %v15 = vld [vmem:[%s0 + $0x8] sm:$0xff]
  %v16 = vld [vmem:[%s0 + $0x10] sm:$0xff]
  %v17 = vld [vmem:[%s0 + $0x18] sm:$0xff]
  %v18 = vld [vmem:[%s0 + $0x20] sm:$0xff]
  %v19 = vld [vmem:[%s0 + $0x28] sm:$0xff]
  %v20 = vld [vmem:[%s0 + $0x30] sm:$0xff]
  %v21 = vld [vmem:[%s0 + $0x38] sm:$0xff]
  %v22 = vld [vmem:[%s0 + $0x40] sm:$0xff]
  %v23 = vld [vmem:[%s0 + $0x48] sm:$0xff]
  %v24 = vld [vmem:[%s0 + $0x50] sm:$0xff]
  %v25 = vld [vmem:[%s0 + $0x58] sm:$0xff]
  %v26 = vld [vmem:[%s0 + $0x60] sm:$0xff]
  %v27 = vld [vmem:[%s0 + $0x68] sm:$0xff]
  %v28 = vld [vmem:[%s0 + $0x70] sm:$0xff]
  %v29 = vld [vmem:[%s0 + $0x78] sm:$0xff]
  %v30 = vld [vmem:[%s0 + $0x80] sm:$0xff]
  %v31 = vld [vmem:[%s0 + $0x88] sm:$0xff]
  %v32 = vld [vmem:[%s0 + $0x90] sm:$0xff]
  %v33 = vld [vmem:[%s0 + $0x98] sm:$0xff]
  %v34 = vld [vmem:[%s0 + $0xa0] sm:$0xff]
  %v35 = vld [vmem:[%s0 + $0xa8] sm:$0xff]
  %v36 = vld [vmem:[%s0 + $0xb0] sm:$0xff]
  %v37 = vld [vmem:[%s0 + $0xb8] sm:$0xff]
  %v38 = vld [vmem:[%s0 + $0xc0] sm:$0xff]
  %v39 = vld [vmem:[%s0 + $0xc8] sm:$0xff]
  %v40 = vld [vmem:[%s0 + $0xd0] sm:$0xff]
  %v41 = vld [vmem:[%s0 + $0xd8] sm:$0xff]
  %v42 = vld [vmem:[%s0 + $0xe0] sm:$0xff]
  %v43 = vld [vmem:[%s0 + $0xe8] sm:$0xff]
  %v44 = vld [vmem:[%s0 + $0xf0] sm:$0xff]
  %v45 = vld [vmem:[%s0 + $0xf8] sm:$0xff]
  %v46 = vld [vmem:[%s0 + $0x100] sm:$0xff]
  %v47 = vld [vmem:[%s0 + $0x108] sm:$0xff]
  %v48 = vld [vmem:[%s0 + $0x110] sm:$0xff]
  %v49 = vld [vmem:[%s0 + $0x118] sm:$0xff]
  %v50 = vld [vmem:[%s0 + $0x120] sm:$0xff]
  %v51 = vld [vmem:[%s0 + $0x128] sm:$0xff]
  %v52 = vld [vmem:[%s0 + $0x130] sm:$0xff]
  %v53 = vld [vmem:[%s0 + $0x138] sm:$0xff]
  %v54 = vld [vmem:[%s0 + $0x140] sm:$0xff]
  %v55 = vld [vmem:[%s0 + $0x148] sm:$0xff]
  %v56 = vld [vmem:[%s0 + $0x150] sm:$0xff]
  %v57 = vld [vmem:[%s0 + $0x158] sm:$0xff]
  %v58 = vld [vmem:[%s0 + $0x160] sm:$0xff]
  %v59 = vld [vmem:[%s0 + $0x168] sm:$0xff]
  %v60 = vld [vmem:[%s0 + $0x170] sm:$0xff]
  %v61 = vld [vmem:[%s0 + $0x178] sm:$0xff]
  %v62 = vld [vmem:[%s0 + $0x180] sm:$0xff]
  %v63 = vld [vmem:[%s0 + $0x188] sm:$0xff]
  %v64 = vld [vmem:[%s0 + $0x190] sm:$0xff]
  %v65 = vld [vmem:[%s0 + $0x198] sm:$0xff]
  %v66 = vld [vmem:[%s0 + $0x1a0] sm:$0xff]
  %v67 = vld [vmem:[%s0 + $0x1a8] sm:$0xff]
  %v68 = vld [vmem:[%s0 + $0x1b0] sm:$0xff]
  %v69 = vld [vmem:[%s0 + $0x1b8] sm:$0xff]
  %v70 = vld [vmem:[%s0 + $0x1c0] sm:$0xff]
  %v71 = vld [vmem:[%s0 + $0x1c8] sm:$0xff]
  %v72 = vld [vmem:[%s0 + $0x1d0] sm:$0xff]
  %v73 = vld [vmem:[%s0 + $0x1d8] sm:$0xff]
  %v74 = vld [vmem:[%s0 + $0x1e0] sm:$0xff]
  %v75 = vld [vmem:[%s0 + $0x1e8] sm:$0xff]
  %v76 = vld [vmem:[%s0 + $0x1f0] sm:$0xff]
  %v77 = vld [vmem:[%s0 + $0x1f8] sm:$0xff]
  %v78 = vld [vmem:[%s1] sm:$0x1]
  %v80 = vlaneseq
  %v81 = vshrl.u32 %v80, 7
  %v82 = vsub.s32 0, %v81
  %v83 = vrot.slane %v78, %v82
  %v85 = vmul.f32 %v14, %v83
  %v86 = vmul.f32 %v15, %v83
  %v87 = vmul.f32 %v16, %v83
  %v88 = vmul.f32 %v17, %v83
  %v89 = vmul.f32 %v18, %v83
  %v90 = vmul.f32 %v19, %v83
  %v91 = vmul.f32 %v20, %v83
  %v92 = vmul.f32 %v21, %v83
  %v93 = vmul.f32 %v22, %v83
  %v94 = vmul.f32 %v23, %v83
  %v95 = vmul.f32 %v24, %v83
  %v96 = vmul.f32 %v25, %v83
  %v97 = vmul.f32 %v26, %v83
  %v98 = vmul.f32 %v27, %v83
  %v99 = vmul.f32 %v28, %v83
  %v100 = vmul.f32 %v29, %v83
  %v101 = vmul.f32 %v30, %v83
  %v102 = vmul.f32 %v31, %v83
  %v103 = vmul.f32 %v32, %v83
  %v104 = vmul.f32 %v33, %v83
  %v105 = vmul.f32 %v34, %v83
  %v106 = vmul.f32 %v35, %v83
  %v107 = vmul.f32 %v36, %v83
  %v108 = vmul.f32 %v37, %v83
  %v109 = vmul.f32 %v38, %v83
  %v110 = vmul.f32 %v39, %v83
  %v111 = vmul.f32 %v40, %v83
  %v112 = vmul.f32 %v41, %v83
  %v113 = vmul.f32 %v42, %v83
  %v114 = vmul.f32 %v43, %v83
  %v115 = vmul.f32 %v44, %v83
  %v116 = vmul.f32 %v45, %v83
  %v117 = vmul.f32 %v46, %v83
  %v118 = vmul.f32 %v47, %v83
  %v119 = vmul.f32 %v48, %v83
  %v120 = vmul.f32 %v49, %v83
  %v121 = vmul.f32 %v50, %v83
  %v122 = vmul.f32 %v51, %v83
  %v123 = vmul.f32 %v52, %v83
  %v124 = vmul.f32 %v53, %v83
  %v125 = vmul.f32 %v54, %v83
  %v126 = vmul.f32 %v55, %v83
  %v127 = vmul.f32 %v56, %v83
  %v128 = vmul.f32 %v57, %v83
  %v129 = vmul.f32 %v58, %v83
  %v130 = vmul.f32 %v59, %v83
  %v131 = vmul.f32 %v60, %v83
  %v132 = vmul.f32 %v61, %v83
  %v133 = vmul.f32 %v62, %v83
  %v134 = vmul.f32 %v63, %v83
  %v135 = vmul.f32 %v64, %v83
  %v136 = vmul.f32 %v65, %v83
  %v137 = vmul.f32 %v66, %v83
  %v138 = vmul.f32 %v67, %v83
  %v139 = vmul.f32 %v68, %v83
  %v140 = vmul.f32 %v69, %v83
  %v141 = vmul.f32 %v70, %v83
  %v142 = vmul.f32 %v71, %v83
  %v143 = vmul.f32 %v72, %v83
  %v144 = vmul.f32 %v73, %v83
  %v145 = vmul.f32 %v74, %v83
  %v146 = vmul.f32 %v75, %v83
  %v147 = vmul.f32 %v76, %v83
  %v148 = vmul.f32 %v77, %v83
  %v149 = vld [vmem:[%s2] sm:$0x1]
  %v151 = vlaneseq
  %v152 = vshrl.u32 %v151, 7
  %v153 = vsub.s32 0, %v152
  %v154 = vrot.slane %v149, %v153
  %v156 = vadd.f32 %v85, %v154
  %v157 = vadd.f32 %v86, %v154
  %v158 = vadd.f32 %v87, %v154
  %v159 = vadd.f32 %v88, %v154
  %v160 = vadd.f32 %v89, %v154
  %v161 = vadd.f32 %v90, %v154
  %v162 = vadd.f32 %v91, %v154
  %v163 = vadd.f32 %v92, %v154
  %v164 = vadd.f32 %v93, %v154
  %v165 = vadd.f32 %v94, %v154
  %v166 = vadd.f32 %v95, %v154
  %v167 = vadd.f32 %v96, %v154
  %v168 = vadd.f32 %v97, %v154
  %v169 = vadd.f32 %v98, %v154
  %v170 = vadd.f32 %v99, %v154
  %v171 = vadd.f32 %v100, %v154
  %v172 = vadd.f32 %v101, %v154
  %v173 = vadd.f32 %v102, %v154
  %v174 = vadd.f32 %v103, %v154
  %v175 = vadd.f32 %v104, %v154
  %v176 = vadd.f32 %v105, %v154
  %v177 = vadd.f32 %v106, %v154
  %v178 = vadd.f32 %v107, %v154
  %v179 = vadd.f32 %v108, %v154
  %v180 = vadd.f32 %v109, %v154
  %v181 = vadd.f32 %v110, %v154
  %v182 = vadd.f32 %v111, %v154
  %v183 = vadd.f32 %v112, %v154
  %v184 = vadd.f32 %v113, %v154
  %v185 = vadd.f32 %v114, %v154
  %v186 = vadd.f32 %v115, %v154
  %v187 = vadd.f32 %v116, %v154
  %v188 = vadd.f32 %v117, %v154
  %v189 = vadd.f32 %v118, %v154
  %v190 = vadd.f32 %v119, %v154
  %v191 = vadd.f32 %v120, %v154
  %v192 = vadd.f32 %v121, %v154
  %v193 = vadd.f32 %v122, %v154
  %v194 = vadd.f32 %v123, %v154
  %v195 = vadd.f32 %v124, %v154
  %v196 = vadd.f32 %v125, %v154
  %v197 = vadd.f32 %v126, %v154
  %v198 = vadd.f32 %v127, %v154
  %v199 = vadd.f32 %v128, %v154
  %v200 = vadd.f32 %v129, %v154
  %v201 = vadd.f32 %v130, %v154
  %v202 = vadd.f32 %v131, %v154
  %v203 = vadd.f32 %v132, %v154
  %v204 = vadd.f32 %v133, %v154
  %v205 = vadd.f32 %v134, %v154
  %v206 = vadd.f32 %v135, %v154
  %v207 = vadd.f32 %v136, %v154
  %v208 = vadd.f32 %v137, %v154
  %v209 = vadd.f32 %v138, %v154
  %v210 = vadd.f32 %v139, %v154
  %v211 = vadd.f32 %v140, %v154
  %v212 = vadd.f32 %v141, %v154
  %v213 = vadd.f32 %v142, %v154
  %v214 = vadd.f32 %v143, %v154
  %v215 = vadd.f32 %v144, %v154
  %v216 = vadd.f32 %v145, %v154
  %v217 = vadd.f32 %v146, %v154
  %v218 = vadd.f32 %v147, %v154
  %v219 = vadd.f32 %v148, %v154
  %v220 = vmax.f32 %v156, 0.0
  %v221 = vmax.f32 %v157, 0.0
  %v222 = vmax.f32 %v158, 0.0
  %v223 = vmax.f32 %v159, 0.0
  %v224 = vmax.f32 %v160, 0.0
  %v225 = vmax.f32 %v161, 0.0
  %v226 = vmax.f32 %v162, 0.0
  %v227 = vmax.f32 %v163, 0.0
  %v228 = vmax.f32 %v164, 0.0
  %v229 = vmax.f32 %v165, 0.0
  %v230 = vmax.f32 %v166, 0.0
  %v231 = vmax.f32 %v167, 0.0
  %v232 = vmax.f32 %v168, 0.0
  %v233 = vmax.f32 %v169, 0.0
  %v234 = vmax.f32 %v170, 0.0
  %v235 = vmax.f32 %v171, 0.0
  %v236 = vmax.f32 %v172, 0.0
  %v237 = vmax.f32 %v173, 0.0
  %v238 = vmax.f32 %v174, 0.0
  %v239 = vmax.f32 %v175, 0.0
  %v240 = vmax.f32 %v176, 0.0
  %v241 = vmax.f32 %v177, 0.0
  %v242 = vmax.f32 %v178, 0.0
  %v243 = vmax.f32 %v179, 0.0
  %v244 = vmax.f32 %v180, 0.0
  %v245 = vmax.f32 %v181, 0.0
  %v246 = vmax.f32 %v182, 0.0
  %v247 = vmax.f32 %v183, 0.0
  %v248 = vmax.f32 %v184, 0.0
  %v249 = vmax.f32 %v185, 0.0
  %v250 = vmax.f32 %v186, 0.0
  %v251 = vmax.f32 %v187, 0.0
  %v252 = vmax.f32 %v188, 0.0
  %v253 = vmax.f32 %v189, 0.0
  %v254 = vmax.f32 %v190, 0.0
  %v255 = vmax.f32 %v191, 0.0
  %v256 = vmax.f32 %v192, 0.0
  %v257 = vmax.f32 %v193, 0.0
  %v258 = vmax.f32 %v194, 0.0
  %v259 = vmax.f32 %v195, 0.0
  %v260 = vmax.f32 %v196, 0.0
  %v261 = vmax.f32 %v197, 0.0
  %v262 = vmax.f32 %v198, 0.0
  %v263 = vmax.f32 %v199, 0.0
  %v264 = vmax.f32 %v200, 0.0
  %v265 = vmax.f32 %v201, 0.0
  %v266 = vmax.f32 %v202, 0.0
  %v267 = vmax.f32 %v203, 0.0
  %v268 = vmax.f32 %v204, 0.0
  %v269 = vmax.f32 %v205, 0.0
  %v270 = vmax.f32 %v206, 0.0
  %v271 = vmax.f32 %v207, 0.0
  %v272 = vmax.f32 %v208, 0.0
  %v273 = vmax.f32 %v209, 0.0
  %v274 = vmax.f32 %v210, 0.0
  %v275 = vmax.f32 %v211, 0.0
  %v276 = vmax.f32 %v212, 0.0
  %v277 = vmax.f32 %v213, 0.0
  %v278 = vmax.f32 %v214, 0.0
  %v279 = vmax.f32 %v215, 0.0
  %v280 = vmax.f32 %v216, 0.0
  %v281 = vmax.f32 %v217, 0.0
  %v282 = vmax.f32 %v218, 0.0
  %v283 = vmax.f32 %v219, 0.0
  %284 = vst [vmem:[%s3] sm:$0xff] %v220
  %285 = vst [vmem:[%s3 + $0x8] sm:$0xff] %v221
  %286 = vst [vmem:[%s3 + $0x10] sm:$0xff] %v222
  %287 = vst [vmem:[%s3 + $0x18] sm:$0xff] %v223
  %288 = vst [vmem:[%s3 + $0x20] sm:$0xff] %v224
  %289 = vst [vmem:[%s3 + $0x28] sm:$0xff] %v225
  %290 = vst [vmem:[%s3 + $0x30] sm:$0xff] %v226
  %291 = vst [vmem:[%s3 + $0x38] sm:$0xff] %v227
  %292 = vst [vmem:[%s3 + $0x40] sm:$0xff] %v228
  %293 = vst [vmem:[%s3 + $0x48] sm:$0xff] %v229
  %294 = vst [vmem:[%s3 + $0x50] sm:$0xff] %v230
  %295 = vst [vmem:[%s3 + $0x58] sm:$0xff] %v231
  %296 = vst [vmem:[%s3 + $0x60] sm:$0xff] %v232
  %297 = vst [vmem:[%s3 + $0x68] sm:$0xff] %v233
  %298 = vst [vmem:[%s3 + $0x70] sm:$0xff] %v234
  %299 = vst [vmem:[%s3 + $0x78] sm:$0xff] %v235
  %300 = vst [vmem:[%s3 + $0x80] sm:$0xff] %v236
  %301 = vst [vmem:[%s3 + $0x88] sm:$0xff] %v237
  %302 = vst [vmem:[%s3 + $0x90] sm:$0xff] %v238
  %303 = vst [vmem:[%s3 + $0x98] sm:$0xff] %v239
  %304 = vst [vmem:[%s3 + $0xa0] sm:$0xff] %v240
  %305 = vst [vmem:[%s3 + $0xa8] sm:$0xff] %v241
  %306 = vst [vmem:[%s3 + $0xb0] sm:$0xff] %v242
  %307 = vst [vmem:[%s3 + $0xb8] sm:$0xff] %v243
  %308 = vst [vmem:[%s3 + $0xc0] sm:$0xff] %v244
  %309 = vst [vmem:[%s3 + $0xc8] sm:$0xff] %v245
  %310 = vst [vmem:[%s3 + $0xd0] sm:$0xff] %v246
  %311 = vst [vmem:[%s3 + $0xd8] sm:$0xff] %v247
  %312 = vst [vmem:[%s3 + $0xe0] sm:$0xff] %v248
  %313 = vst [vmem:[%s3 + $0xe8] sm:$0xff] %v249
  %314 = vst [vmem:[%s3 + $0xf0] sm:$0xff] %v250
  %315 = vst [vmem:[%s3 + $0xf8] sm:$0xff] %v251
  %316 = vst [vmem:[%s3 + $0x100] sm:$0xff] %v252
  %317 = vst [vmem:[%s3 + $0x108] sm:$0xff] %v253
  %318 = vst [vmem:[%s3 + $0x110] sm:$0xff] %v254
  %319 = vst [vmem:[%s3 + $0x118] sm:$0xff] %v255
  %320 = vst [vmem:[%s3 + $0x120] sm:$0xff] %v256
  %321 = vst [vmem:[%s3 + $0x128] sm:$0xff] %v257
  %322 = vst [vmem:[%s3 + $0x130] sm:$0xff] %v258
  %323 = vst [vmem:[%s3 + $0x138] sm:$0xff] %v259
  %324 = vst [vmem:[%s3 + $0x140] sm:$0xff] %v260
  %325 = vst [vmem:[%s3 + $0x148] sm:$0xff] %v261
  %326 = vst [vmem:[%s3 + $0x150] sm:$0xff] %v262
  %327 = vst [vmem:[%s3 + $0x158] sm:$0xff] %v263
  %328 = vst [vmem:[%s3 + $0x160] sm:$0xff] %v264
  %329 = vst [vmem:[%s3 + $0x168] sm:$0xff] %v265
  %330 = vst [vmem:[%s3 + $0x170] sm:$0xff] %v266
  %331 = vst [vmem:[%s3 + $0x178] sm:$0xff] %v267
  %332 = vst [vmem:[%s3 + $0x180] sm:$0xff] %v268
  %333 = vst [vmem:[%s3 + $0x188] sm:$0xff] %v269
  %334 = vst [vmem:[%s3 + $0x190] sm:$0xff] %v270
  %335 = vst [vmem:[%s3 + $0x198] sm:$0xff] %v271
  %336 = vst [vmem:[%s3 + $0x1a0] sm:$0xff] %v272
  %337 = vst [vmem:[%s3 + $0x1a8] sm:$0xff] %v273
  %338 = vst [vmem:[%s3 + $0x1b0] sm:$0xff] %v274
  %339 = vst [vmem:[%s3 + $0x1b8] sm:$0xff] %v275
  %340 = vst [vmem:[%s3 + $0x1c0] sm:$0xff] %v276
  %341 = vst [vmem:[%s3 + $0x1c8] sm:$0xff] %v277
  %342 = vst [vmem:[%s3 + $0x1d0] sm:$0xff] %v278
  %343 = vst [vmem:[%s3 + $0x1d8] sm:$0xff] %v279
  %344 = vst [vmem:[%s3 + $0x1e0] sm:$0xff] %v280
  %345 = vst [vmem:[%s3 + $0x1e8] sm:$0xff] %v281
  %346 = vst [vmem:[%s3 + $0x1f0] sm:$0xff] %v282
  %347 = vst [vmem:[%s3 + $0x1f8] sm:$0xff] %v283
  // Predicated region
  $region14: #{dcgan_generator_forward.16} parent=0 // pred_check
    _
  $region15: #{dcgan_generator_forward.16} parent=0 // pred_check_branch
    %349 = sbr.rel (0) target = $region17
  $region16: #{dcgan_generator_forward.16} parent=0 // pred_region
    _
  $region17: #{dcgan_generator_forward.16} parent=0 // pred_fallthru
    _
  // Predicated region
  $region18: #{dcgan_generator_forward.16} parent=0 // pred_check
    _
  $region19: #{dcgan_generator_forward.16} parent=0 // pred_check_branch
    %351 = sbr.rel (0) target = $region21
  $region20: #{dcgan_generator_forward.16} parent=0 // pred_region
    _
  $region21: #{dcgan_generator_forward.16} parent=0 // pred_fallthru
    _

// kernel: dcgan_generator_forward.17
$region0: #{dcgan_generator_forward.17}
  #allocation0 [shape = 'u32[]', space=smem, size = 0x4, offset = 0x4, fixed_abs, tag = 'smem constant byte address 0x4 - core index']
  #allocation1 [shape = 'u32[144,128]{1,0:T(1,128)}', space=vmem, size = 0x12000, scoped, tag = 'internal scratch']
  %s0 = inlined_call_operand.vmem [shape: bf16[2048,72], index: 0, kind: input, shape index: {}]
  %s1 = inlined_call_operand.vmem [shape: bf16[72,128], index: 1, kind: input, shape index: {}]
  %s2 = inlined_call_operand.vmem [shape: f32[2048,128], index: 2, kind: output, shape index: {}]
  %s3 = sld [smem:[#allocation0]]
  $region41: #{dcgan_generator_forward.17} parent=0
    _
  %s5 = ssub.s32 1, %s3
  %s6 = scalar_select 0, %s5, %s3
  loop: start=0, step=1, limit=4
  $region2: #{dcgan_generator_forward.17} parent=0 // loop_pre_header
    _
  $region3: #{dcgan_generator_forward.17} parent=0 // loop_header
    %s8 = sphi 0, %s12
    %p9 = scmp.ge.s32.totalorder %s8, 4
    %s18 = sphi 0, %s20
    %s21 = sphi 0, %s18
    %s22 = sphi 0, %s21
    %s38 = sphi 0, %s22
    %s42 = sphi 0, %s42
    %s44 = sphi 0, %s42
    %s45 = sphi 0, %s44
    %s59 = sphi 0, %s45
    %s65 = sphi 0, %s67
    %s68 = sphi 0, %s65
    %s69 = sphi 0, %s68
    %s85 = sphi 0, %s69
  $region4: #{dcgan_generator_forward.17} parent=0 // loop_header_branch
    %11 = sbr.rel (%p9) target = $region8
  $region5: #{dcgan_generator_forward.17} parent=0 // loop_body
    %s13 = ssub.s32 %s8, 1
    %s14 = ssub.s32 %s8, 2
    %s15 = sadd.s32 %s8, 1
    %s16 = ssub.s32 %s8, %s15
    %p17 = scmp.eq.s32.totalorder %s16, 0
    %s19 = sadd.s32 %s18, 1
    %s20 = scalar_select %p17, %s18, %s19
    %p23 = pneg %p17
    %p24 = scmp.eq.s32.totalorder %s8, 1
    %p25 = por %p23, %p24
    %p26 = scmp.ne.s32.totalorder %s18, %s21
    %p27 = scmp.eq.s32.totalorder %s8, 0
    %p28 = por %p26, %p27
    %p29 = scmp.ne.s32.totalorder %s18, %s21
    %p30 = scmp.eq.s32.totalorder %s13, 1
    %p31 = por %p29, %p30
    %p32 = scmp.ne.s32.totalorder %s21, %s22
    %p33 = scmp.eq.s32.totalorder %s13, 0
    %p34 = por %p32, %p33
    %p35 = scmp.ne.s32.totalorder %s21, %s22
    %p36 = scmp.eq.s32.totalorder %s14, 1
    %p37 = por %p35, %p36
    %p39 = scmp.ne.s32.totalorder %s22, %s38
    %p40 = scmp.eq.s32.totalorder %s14, 0
    %p41 = por %p39, %p40
    %s43 = sadd.s32 %s42, 1
    %p46 = scmp.eq.s32.totalorder %s8, 1
    %p47 = scmp.ne.s32.totalorder %s42, %s44
    %p48 = scmp.eq.s32.totalorder %s8, 0
    %p49 = por %p47, %p48
    %p50 = scmp.ne.s32.totalorder %s42, %s44
    %p51 = scmp.eq.s32.totalorder %s13, 1
    %p52 = por %p50, %p51
    %p53 = scmp.ne.s32.totalorder %s44, %s45
    %p54 = scmp.eq.s32.totalorder %s13, 0
    %p55 = por %p53, %p54
    %p56 = scmp.ne.s32.totalorder %s44, %s45
    %p57 = scmp.eq.s32.totalorder %s14, 1
    %p58 = por %p56, %p57
    %p60 = scmp.ne.s32.totalorder %s45, %s59
    %p61 = scmp.eq.s32.totalorder %s14, 0
    %p62 = por %p60, %p61
    %s63 = ssub.s32 %s8, %s15
    %p64 = scmp.eq.s32.totalorder %s63, 0
    %s66 = sadd.s32 %s65, 1
    %s67 = scalar_select %p64, %s65, %s66
    %p70 = pneg %p64
    %p71 = scmp.eq.s32.totalorder %s8, 1
    %p72 = por %p70, %p71
    %p73 = scmp.ne.s32.totalorder %s65, %s68
    %p74 = scmp.eq.s32.totalorder %s8, 0
    %p75 = por %p73, %p74
    %p76 = scmp.ne.s32.totalorder %s65, %s68
    %p77 = scmp.eq.s32.totalorder %s13, 1
    %p78 = por %p76, %p77
    %p79 = scmp.ne.s32.totalorder %s68, %s69
    %p80 = scmp.eq.s32.totalorder %s13, 0
    %p81 = por %p79, %p80
    %p82 = scmp.ne.s32.totalorder %s68, %s69
    %p83 = scmp.eq.s32.totalorder %s14, 1
    %p84 = por %p82, %p83
    %p86 = scmp.ne.s32.totalorder %s69, %s85
    %p87 = scmp.eq.s32.totalorder %s14, 0
    %p88 = por %p86, %p87
    %p89 = scmp.le.s32.totalorder 1, %s8
    %p90 = scmp.lt.s32.totalorder %s8, 3
    %p91 = pnand %p89, %p90
    %p92 = pneg %p91
    // Predicated region
    $region9: #{dcgan_generator_forward.17} parent=5 // pred_check
      _
    $region10: #{dcgan_generator_forward.17} parent=5 // pred_check_branch
      %94 = sbr.rel (%p91) target = $region12
    $region11: #{dcgan_generator_forward.17} parent=5 // pred_region
      %s95 = ssub.s32 %s8, 1
      // Predicated region
      $region13: #{dcgan_generator_forward.17} parent=11 // pred_check
        %p96 = pneg %p55
      $region14: #{dcgan_generator_forward.17} parent=11 // pred_check_branch
        %98 = sbr.rel (%p96) target = $region16
      $region15: #{dcgan_generator_forward.17} parent=11 // pred_region
        _
      $region16: #{dcgan_generator_forward.17} parent=11 // pred_fallthru
        _
    $region12: #{dcgan_generator_forward.17} parent=5 // pred_fallthru
      _
    %p99 = scmp.lt.s32.totalorder %s8, 2
    // Predicated region
    $region17: #{dcgan_generator_forward.17} parent=5 // pred_check
      %p100 = pneg %p99
    $region18: #{dcgan_generator_forward.17} parent=5 // pred_check_branch
      %102 = sbr.rel (%p100) target = $region20
    $region19: #{dcgan_generator_forward.17} parent=5 // pred_region
      // Predicated region
      $region21: #{dcgan_generator_forward.17} parent=19 // pred_check
        %p103 = pneg %p28
      $region22: #{dcgan_generator_forward.17} parent=19 // pred_check_branch
        %105 = sbr.rel (%p103) target = $region24
      $region23: #{dcgan_generator_forward.17} parent=19 // pred_region
        %s106 = smul.u32 128, %s8
        %p107 = scmp.lt.s32.totalorder %s106, 255
        %s108 = scalar_select %p107, %s106, 255
        %s109 = smul.addr %s108, 4
        %s110 = scalar_lea.vmem %s0, %s109
        %s111 = smul.u32 128, %s8
      $region24: #{dcgan_generator_forward.17} parent=19 // pred_fallthru
        _
    $region20: #{dcgan_generator_forward.17} parent=5 // pred_fallthru
      _
    %p112 = scmp.le.s32.totalorder 1, %s8
    %p113 = scmp.lt.s32.totalorder %s8, 3
    %p114 = pnand %p112, %p113
    %p115 = pneg %p114
    // Predicated region
    $region25: #{dcgan_generator_forward.17} parent=5 // pred_check
      _
    $region26: #{dcgan_generator_forward.17} parent=5 // pred_check_branch
      %117 = sbr.rel (%p114) target = $region28
    $region27: #{dcgan_generator_forward.17} parent=5 // pred_region
      %s118 = ssub.s32 %s8, 1
      %s119 = smul.u32 128, %s13
      %p120 = scmp.lt.s32.totalorder %s119, 255
      %s121 = scalar_select %p120, %s119, 255
      %s122 = smul.addr %s121, 4
      %s123 = scalar_lea.vmem %s0, %s122
      %p124 = pneg %p34
      %p125 = pneg %p31
      %p126 = pneg %p55
      %p127 = pneg %p52
      %p128 = pneg %p81
      %p129 = pneg %p78
      %s130 = smul.u32 128, %s13
      %p131 = scmp.lt.s32.totalorder %s130, 255
      %s132 = scalar_select %p131, %s130, 255
      %s133 = smul.addr %s132, 8
      %s134 = scalar_lea.vmem %s2, %s133
      %s135 = smul.u32 128, %s13
      %p136 = scmp.lt.s32.totalorder %s135, 255
      %s137 = scalar_select %p136, %s135, 255
      %s138 = smul.addr %s137, 4
      %s139 = scalar_lea.vmem %s0, %s138
      %s140 = smul.u32 128, %s13
      %s141 = smul.u32 128, %s13
      %p142 = scmp.lt.s32.totalorder %s141, 255
      %s143 = scalar_select %p142, %s141, 255
      %s144 = smul.addr %s143, 8
      %s145 = scalar_lea.vmem %s2, %s144
      %s146 = smul.u32 128, %s13
      %v148 = vld [vmem:[%s139] sm:$0xf]
      %v149 = vld [vmem:[%s139 + $0x4] sm:$0xf]
      %v150 = vld [vmem:[%s139 + $0x8] sm:$0xf]
      %v151 = vld [vmem:[%s139 + $0xc] sm:$0xf]
      %v152 = vld [vmem:[%s139 + $0x10] sm:$0xf]
      %v153 = vld [vmem:[%s139 + $0x14] sm:$0xf]
      %v154 = vld [vmem:[%s139 + $0x18] sm:$0xf]
      %v155 = vld [vmem:[%s139 + $0x1c] sm:$0xf]
      %v156 = vld [vmem:[%s139 + $0x20] sm:$0xf]
      %v157 = vld [vmem:[%s139 + $0x24] sm:$0xf]
      %v158 = vld [vmem:[%s139 + $0x28] sm:$0xf]
      %v159 = vld [vmem:[%s139 + $0x2c] sm:$0xf]
      %v160 = vld [vmem:[%s139 + $0x30] sm:$0xf]
      %v161 = vld [vmem:[%s139 + $0x34] sm:$0xf]
      %v162 = vld [vmem:[%s139 + $0x38] sm:$0xf]
      %v163 = vld [vmem:[%s139 + $0x3c] sm:$0xf]
      %v164 = vld [vmem:[%s139 + $0x40] sm:$0xf]
      %v165 = vld [vmem:[%s139 + $0x44] sm:$0xf]
      %v166 = vld [vmem:[%s139 + $0x48] sm:$0xf]
      %v167 = vld [vmem:[%s139 + $0x4c] sm:$0xf]
      %v168 = vld [vmem:[%s139 + $0x50] sm:$0xf]
      %v169 = vld [vmem:[%s139 + $0x54] sm:$0xf]
      %v170 = vld [vmem:[%s139 + $0x58] sm:$0xf]
      %v171 = vld [vmem:[%s139 + $0x5c] sm:$0xf]
      %v172 = vld [vmem:[%s139 + $0x60] sm:$0xf]
      %v173 = vld [vmem:[%s139 + $0x64] sm:$0xf]
      %v174 = vld [vmem:[%s139 + $0x68] sm:$0xf]
      %v175 = vld [vmem:[%s139 + $0x6c] sm:$0xf]
      %v176 = vld [vmem:[%s139 + $0x70] sm:$0xf]
      %v177 = vld [vmem:[%s139 + $0x74] sm:$0xf]
      %v178 = vld [vmem:[%s139 + $0x78] sm:$0xf]
      %v179 = vld [vmem:[%s139 + $0x7c] sm:$0xf]
      %v180 = vld [vmem:[%s139 + $0x80] sm:$0xf]
      %v181 = vld [vmem:[%s139 + $0x84] sm:$0xf]
      %v182 = vld [vmem:[%s139 + $0x88] sm:$0xf]
      %v183 = vld [vmem:[%s139 + $0x8c] sm:$0xf]
      %v184 = vld [vmem:[%s139 + $0x90] sm:$0xf]
      %v185 = vld [vmem:[%s139 + $0x94] sm:$0xf]
      %v186 = vld [vmem:[%s139 + $0x98] sm:$0xf]
      %v187 = vld [vmem:[%s139 + $0x9c] sm:$0xf]
      %v188 = vld [vmem:[%s139 + $0xa0] sm:$0xf]
      %v189 = vld [vmem:[%s139 + $0xa4] sm:$0xf]
      %v190 = vld [vmem:[%s139 + $0xa8] sm:$0xf]
      %v191 = vld [vmem:[%s139 + $0xac] sm:$0xf]
      %v192 = vld [vmem:[%s139 + $0xb0] sm:$0xf]
      %v193 = vld [vmem:[%s139 + $0xb4] sm:$0xf]
      %v194 = vld [vmem:[%s139 + $0xb8] sm:$0xf]
      %v195 = vld [vmem:[%s139 + $0xbc] sm:$0xf]
      %v196 = vld [vmem:[%s139 + $0xc0] sm:$0xf]
      %v197 = vld [vmem:[%s139 + $0xc4] sm:$0xf]
      %v198 = vld [vmem:[%s139 + $0xc8] sm:$0xf]
      %v199 = vld [vmem:[%s139 + $0xcc] sm:$0xf]
      %v200 = vld [vmem:[%s139 + $0xd0] sm:$0xf]
      %v201 = vld [vmem:[%s139 + $0xd4] sm:$0xf]
      %v202 = vld [vmem:[%s139 + $0xd8] sm:$0xf]
      %v203 = vld [vmem:[%s139 + $0xdc] sm:$0xf]
      %v204 = vld [vmem:[%s139 + $0xe0] sm:$0xf]
      %v205 = vld [vmem:[%s139 + $0xe4] sm:$0xf]
      %v206 = vld [vmem:[%s139 + $0xe8] sm:$0xf]
      %v207 = vld [vmem:[%s139 + $0xec] sm:$0xf]
      %v208 = vld [vmem:[%s139 + $0xf0] sm:$0xf]
      %v209 = vld [vmem:[%s139 + $0xf4] sm:$0xf]
      %v210 = vld [vmem:[%s139 + $0xf8] sm:$0xf]
      %v211 = vld [vmem:[%s139 + $0xfc] sm:$0xf]
      %v212 = vld [vmem:[%s139 + $0x100] sm:$0xf]
      %v213 = vld [vmem:[%s139 + $0x104] sm:$0xf]
      %v214 = vld [vmem:[%s139 + $0x108] sm:$0xf]
      %v215 = vld [vmem:[%s139 + $0x10c] sm:$0xf]
      %v216 = vld [vmem:[%s139 + $0x110] sm:$0xf]
      %v217 = vld [vmem:[%s139 + $0x114] sm:$0xf]
      %v218 = vld [vmem:[%s139 + $0x118] sm:$0xf]
      %v219 = vld [vmem:[%s139 + $0x11c] sm:$0xf]
      %v220 = vld [vmem:[%s139 + $0x120] sm:$0xf]
      %v221 = vld [vmem:[%s139 + $0x124] sm:$0xf]
      %v222 = vld [vmem:[%s139 + $0x128] sm:$0xf]
      %v223 = vld [vmem:[%s139 + $0x12c] sm:$0xf]
      %v224 = vld [vmem:[%s139 + $0x130] sm:$0xf]
      %v225 = vld [vmem:[%s139 + $0x134] sm:$0xf]
      %v226 = vld [vmem:[%s139 + $0x138] sm:$0xf]
      %v227 = vld [vmem:[%s139 + $0x13c] sm:$0xf]
      %v228 = vld [vmem:[%s139 + $0x140] sm:$0xf]
      %v229 = vld [vmem:[%s139 + $0x144] sm:$0xf]
      %v230 = vld [vmem:[%s139 + $0x148] sm:$0xf]
      %v231 = vld [vmem:[%s139 + $0x14c] sm:$0xf]
      %v232 = vld [vmem:[%s139 + $0x150] sm:$0xf]
      %v233 = vld [vmem:[%s139 + $0x154] sm:$0xf]
      %v234 = vld [vmem:[%s139 + $0x158] sm:$0xf]
      %v235 = vld [vmem:[%s139 + $0x15c] sm:$0xf]
      %v236 = vld [vmem:[%s139 + $0x160] sm:$0xf]
      %v237 = vld [vmem:[%s139 + $0x164] sm:$0xf]
      %v238 = vld [vmem:[%s139 + $0x168] sm:$0xf]
      %v239 = vld [vmem:[%s139 + $0x16c] sm:$0xf]
      %v240 = vld [vmem:[%s139 + $0x170] sm:$0xf]
      %v241 = vld [vmem:[%s139 + $0x174] sm:$0xf]
      %v242 = vld [vmem:[%s139 + $0x178] sm:$0xf]
      %v243 = vld [vmem:[%s139 + $0x17c] sm:$0xf]
      %v244 = vld [vmem:[%s139 + $0x180] sm:$0xf]
      %v245 = vld [vmem:[%s139 + $0x184] sm:$0xf]
      %v246 = vld [vmem:[%s139 + $0x188] sm:$0xf]
      %v247 = vld [vmem:[%s139 + $0x18c] sm:$0xf]
      %v248 = vld [vmem:[%s139 + $0x190] sm:$0xf]
      %v249 = vld [vmem:[%s139 + $0x194] sm:$0xf]
      %v250 = vld [vmem:[%s139 + $0x198] sm:$0xf]
      %v251 = vld [vmem:[%s139 + $0x19c] sm:$0xf]
      %v252 = vld [vmem:[%s139 + $0x1a0] sm:$0xf]
      %v253 = vld [vmem:[%s139 + $0x1a4] sm:$0xf]
      %v254 = vld [vmem:[%s139 + $0x1a8] sm:$0xf]
      %v255 = vld [vmem:[%s139 + $0x1ac] sm:$0xf]
      %v256 = vld [vmem:[%s139 + $0x1b0] sm:$0xf]
      %v257 = vld [vmem:[%s139 + $0x1b4] sm:$0xf]
      %v258 = vld [vmem:[%s139 + $0x1b8] sm:$0xf]
      %v259 = vld [vmem:[%s139 + $0x1bc] sm:$0xf]
      %v260 = vld [vmem:[%s139 + $0x1c0] sm:$0xf]
      %v261 = vld [vmem:[%s139 + $0x1c4] sm:$0xf]
      %v262 = vld [vmem:[%s139 + $0x1c8] sm:$0xf]
      %v263 = vld [vmem:[%s139 + $0x1cc] sm:$0xf]
      %v264 = vld [vmem:[%s139 + $0x1d0] sm:$0xf]
      %v265 = vld [vmem:[%s139 + $0x1d4] sm:$0xf]
      %v266 = vld [vmem:[%s139 + $0x1d8] sm:$0xf]
      %v267 = vld [vmem:[%s139 + $0x1dc] sm:$0xf]
      %v268 = vld [vmem:[%s139 + $0x1e0] sm:$0xf]
      %v269 = vld [vmem:[%s139 + $0x1e4] sm:$0xf]
      %v270 = vld [vmem:[%s139 + $0x1e8] sm:$0xf]
      %v271 = vld [vmem:[%s139 + $0x1ec] sm:$0xf]
      %v272 = vld [vmem:[%s139 + $0x1f0] sm:$0xf]
      %v273 = vld [vmem:[%s139 + $0x1f4] sm:$0xf]
      %v274 = vld [vmem:[%s139 + $0x1f8] sm:$0xf]
      %v275 = vld [vmem:[%s139 + $0x1fc] sm:$0xf]
      %v276 = vld [vmem:[%s1] sm:$0xf]
      %v277 = vld [vmem:[%s1 + $0x4] sm:$0xf]
      %v278 = vld [vmem:[%s1 + $0x8] sm:$0xf]
      %v279 = vld [vmem:[%s1 + $0xc] sm:$0xf]
      %v280 = vld [vmem:[%s1 + $0x10] sm:$0xf]
      %v281 = vld [vmem:[%s1 + $0x14] sm:$0xf]
      %v282 = vld [vmem:[%s1 + $0x18] sm:$0xf]
      %v283 = vld [vmem:[%s1 + $0x1c] sm:$0xf]
      %v284 = vld [vmem:[%s1 + $0x20] sm:$0xf]
      %v413 = vunpack.c.l.b16 %v148
      %v414 = vunpack.c.l.b16 %v149
      %v415 = vunpack.c.l.b16 %v150
      %v416 = vunpack.c.l.b16 %v151
      %v417 = vunpack.c.l.b16 %v152
      %v418 = vunpack.c.l.b16 %v153
      %v419 = vunpack.c.l.b16 %v154
      %v420 = vunpack.c.l.b16 %v155
      %v421 = vunpack.c.l.b16 %v156
      %v422 = vunpack.c.l.b16 %v157
      %v423 = vunpack.c.l.b16 %v158
      %v424 = vunpack.c.l.b16 %v159
      %v425 = vunpack.c.l.b16 %v160
      %v426 = vunpack.c.l.b16 %v161
      %v427 = vunpack.c.l.b16 %v162
      %v428 = vunpack.c.l.b16 %v163
      %v429 = vunpack.c.l.b16 %v164
      %v430 = vunpack.c.l.b16 %v165
      %v431 = vunpack.c.l.b16 %v166
      %v432 = vunpack.c.l.b16 %v167
      %v433 = vunpack.c.l.b16 %v168
      %v434 = vunpack.c.l.b16 %v169
      %v435 = vunpack.c.l.b16 %v170
      %v436 = vunpack.c.l.b16 %v171
      %v437 = vunpack.c.l.b16 %v172
      %v438 = vunpack.c.l.b16 %v173
      %v439 = vunpack.c.l.b16 %v174
      %v440 = vunpack.c.l.b16 %v175
      %v441 = vunpack.c.l.b16 %v176
      %v442 = vunpack.c.l.b16 %v177
      %v443 = vunpack.c.l.b16 %v178
      %v444 = vunpack.c.l.b16 %v179
      %v445 = vunpack.c.l.b16 %v180
      %v446 = vunpack.c.l.b16 %v181
      %v447 = vunpack.c.l.b16 %v182
      %v448 = vunpack.c.l.b16 %v183
      %v449 = vunpack.c.l.b16 %v184
      %v450 = vunpack.c.l.b16 %v185
      %v451 = vunpack.c.l.b16 %v186
      %v452 = vunpack.c.l.b16 %v187
      %v453 = vunpack.c.l.b16 %v188
      %v454 = vunpack.c.l.b16 %v189
      %v455 = vunpack.c.l.b16 %v190
      %v456 = vunpack.c.l.b16 %v191
      %v457 = vunpack.c.l.b16 %v192
      %v458 = vunpack.c.l.b16 %v193
      %v459 = vunpack.c.l.b16 %v194
      %v460 = vunpack.c.l.b16 %v195
      %v461 = vunpack.c.l.b16 %v196
      %v462 = vunpack.c.l.b16 %v197
      %v463 = vunpack.c.l.b16 %v198
      %v464 = vunpack.c.l.b16 %v199
      %v465 = vunpack.c.l.b16 %v200
      %v466 = vunpack.c.l.b16 %v201
      %v467 = vunpack.c.l.b16 %v202
      %v468 = vunpack.c.l.b16 %v203
      %v469 = vunpack.c.l.b16 %v204
      %v470 = vunpack.c.l.b16 %v205
      %v471 = vunpack.c.l.b16 %v206
      %v472 = vunpack.c.l.b16 %v207
      %v473 = vunpack.c.l.b16 %v208
      %v474 = vunpack.c.l.b16 %v209
      %v475 = vunpack.c.l.b16 %v210
      %v476 = vunpack.c.l.b16 %v211
      %v477 = vunpack.c.l.b16 %v212
      %v478 = vunpack.c.l.b16 %v213
      %v479 = vunpack.c.l.b16 %v214
      %v480 = vunpack.c.l.b16 %v215
      %v481 = vunpack.c.l.b16 %v216
      %v482 = vunpack.c.l.b16 %v217
      %v483 = vunpack.c.l.b16 %v218
      %v484 = vunpack.c.l.b16 %v219
      %v485 = vunpack.c.l.b16 %v220
      %v486 = vunpack.c.l.b16 %v221
      %v487 = vunpack.c.l.b16 %v222
      %v488 = vunpack.c.l.b16 %v223
      %v489 = vunpack.c.l.b16 %v224
      %v490 = vunpack.c.l.b16 %v225
      %v491 = vunpack.c.l.b16 %v226
      %v492 = vunpack.c.l.b16 %v227
      %v493 = vunpack.c.l.b16 %v228
      %v494 = vunpack.c.l.b16 %v229
      %v495 = vunpack.c.l.b16 %v230
      %v496 = vunpack.c.l.b16 %v231
      %v497 = vunpack.c.l.b16 %v232
      %v498 = vunpack.c.l.b16 %v233
      %v499 = vunpack.c.l.b16 %v234
      %v500 = vunpack.c.l.b16 %v235
      %v501 = vunpack.c.l.b16 %v236
      %v502 = vunpack.c.l.b16 %v237
      %v503 = vunpack.c.l.b16 %v238
      %v504 = vunpack.c.l.b16 %v239
      %v505 = vunpack.c.l.b16 %v240
      %v506 = vunpack.c.l.b16 %v241
      %v507 = vunpack.c.l.b16 %v242
      %v508 = vunpack.c.l.b16 %v243
      %v509 = vunpack.c.l.b16 %v244
      %v510 = vunpack.c.l.b16 %v245
      %v511 = vunpack.c.l.b16 %v246
      %v512 = vunpack.c.l.b16 %v247
      %v513 = vunpack.c.l.b16 %v248
      %v514 = vunpack.c.l.b16 %v249
      %v515 = vunpack.c.l.b16 %v250
      %v516 = vunpack.c.l.b16 %v251
      %v517 = vunpack.c.l.b16 %v252
      %v518 = vunpack.c.l.b16 %v253
      %v519 = vunpack.c.l.b16 %v254
      %v520 = vunpack.c.l.b16 %v255
      %v521 = vunpack.c.l.b16 %v256
      %v522 = vunpack.c.l.b16 %v257
      %v523 = vunpack.c.l.b16 %v258
      %v524 = vunpack.c.l.b16 %v259
      %v525 = vunpack.c.l.b16 %v260
      %v526 = vunpack.c.l.b16 %v261
      %v527 = vunpack.c.l.b16 %v262
      %v528 = vunpack.c.l.b16 %v263
      %v529 = vunpack.c.l.b16 %v264
      %v530 = vunpack.c.l.b16 %v265
      %v531 = vunpack.c.l.b16 %v266
      %v532 = vunpack.c.l.b16 %v267
      %v533 = vunpack.c.l.b16 %v268
      %v534 = vunpack.c.l.b16 %v269
      %v535 = vunpack.c.l.b16 %v270
      %v536 = vunpack.c.l.b16 %v271
      %v537 = vunpack.c.l.b16 %v272
      %v538 = vunpack.c.l.b16 %v273
      %v539 = vunpack.c.l.b16 %v274
      %v540 = vunpack.c.l.b16 %v275
      %v541 = vpack.c.b16 %v414, %v413
      %v542 = vpack.c.b16 %v416, %v415
      %v543 = vpack.c.b16 %v418, %v417
      %v544 = vpack.c.b16 %v420, %v419
      %v545 = vpack.c.b16 %v422, %v421
      %v546 = vpack.c.b16 %v424, %v423
      %v547 = vpack.c.b16 %v426, %v425
      %v548 = vpack.c.b16 %v428, %v427
      %v549 = vpack.c.b16 %v430, %v429
      %v550 = vpack.c.b16 %v432, %v431
      %v551 = vpack.c.b16 %v434, %v433
      %v552 = vpack.c.b16 %v436, %v435
      %v553 = vpack.c.b16 %v438, %v437
      %v554 = vpack.c.b16 %v440, %v439
      %v555 = vpack.c.b16 %v442, %v441
      %v556 = vpack.c.b16 %v444, %v443
      %v557 = vpack.c.b16 %v446, %v445
      %v558 = vpack.c.b16 %v448, %v447
      %v559 = vpack.c.b16 %v450, %v449
      %v560 = vpack.c.b16 %v452, %v451
      %v561 = vpack.c.b16 %v454, %v453
      %v562 = vpack.c.b16 %v456, %v455
      %v563 = vpack.c.b16 %v458, %v457
      %v564 = vpack.c.b16 %v460, %v459
      %v565 = vpack.c.b16 %v462, %v461
      %v566 = vpack.c.b16 %v464, %v463
      %v567 = vpack.c.b16 %v466, %v465
      %v568 = vpack.c.b16 %v468, %v467
      %v569 = vpack.c.b16 %v470, %v469
      %v570 = vpack.c.b16 %v472, %v471
      %v571 = vpack.c.b16 %v474, %v473
      %v572 = vpack.c.b16 %v476, %v475
      %v573 = vpack.c.b16 %v478, %v477
      %v574 = vpack.c.b16 %v480, %v479
      %v575 = vpack.c.b16 %v482, %v481
      %v576 = vpack.c.b16 %v484, %v483
      %v577 = vpack.c.b16 %v486, %v485
      %v578 = vpack.c.b16 %v488, %v487
      %v579 = vpack.c.b16 %v490, %v489
      %v580 = vpack.c.b16 %v492, %v491
      %v581 = vpack.c.b16 %v494, %v493
      %v582 = vpack.c.b16 %v496, %v495
      %v583 = vpack.c.b16 %v498, %v497
      %v584 = vpack.c.b16 %v500, %v499
      %v585 = vpack.c.b16 %v502, %v501
      %v586 = vpack.c.b16 %v504, %v503
      %v587 = vpack.c.b16 %v506, %v505
      %v588 = vpack.c.b16 %v508, %v507
      %v589 = vpack.c.b16 %v510, %v509
      %v590 = vpack.c.b16 %v512, %v511
      %v591 = vpack.c.b16 %v514, %v513
      %v592 = vpack.c.b16 %v516, %v515
      %v593 = vpack.c.b16 %v518, %v517
      %v594 = vpack.c.b16 %v520, %v519
      %v595 = vpack.c.b16 %v522, %v521
      %v596 = vpack.c.b16 %v524, %v523
      %v597 = vpack.c.b16 %v526, %v525
      %v598 = vpack.c.b16 %v528, %v527
      %v599 = vpack.c.b16 %v530, %v529
      %v600 = vpack.c.b16 %v532, %v531
      %v601 = vpack.c.b16 %v534, %v533
      %v602 = vpack.c.b16 %v536, %v535
      %v603 = vpack.c.b16 %v538, %v537
      %v604 = vpack.c.b16 %v540, %v539
      %v614 = vunpack.c.l.b16 %v276
      %v615 = vunpack.c.l.b16 %v277
      %v616 = vunpack.c.l.b16 %v278
      %v617 = vunpack.c.l.b16 %v279
      %v618 = vunpack.c.l.b16 %v280
      %v619 = vunpack.c.l.b16 %v281
      %v620 = vunpack.c.l.b16 %v282
      %v621 = vunpack.c.l.b16 %v283
      %v622 = vunpack.c.l.b16 %v284
      %v623 = vpack.c.b16 %v615, %v614
      %v624 = vpack.c.b16 %v617, %v616
      %v625 = vpack.c.b16 %v619, %v618
      %v626 = vpack.c.b16 %v621, %v620
      %v627 = vpack.c.b16 %v622, %v622
      %vm632 = vcmask 588800
      %v634 = vsel %vm632, %v541, 0
      %v637 = vsel %vm632, %v542, 0
      %v640 = vsel %vm632, %v543, 0
      %v643 = vsel %vm632, %v544, 0
      %v646 = vsel %vm632, %v545, 0
      %v649 = vsel %vm632, %v546, 0
      %v652 = vsel %vm632, %v547, 0
      %v655 = vsel %vm632, %v548, 0
      %v658 = vsel %vm632, %v549, 0
      %v661 = vsel %vm632, %v550, 0
      %v664 = vsel %vm632, %v551, 0
      %v667 = vsel %vm632, %v552, 0
      %v670 = vsel %vm632, %v553, 0
      %v673 = vsel %vm632, %v554, 0
      %v676 = vsel %vm632, %v555, 0
      %v679 = vsel %vm632, %v556, 0
      %v682 = vsel %vm632, %v557, 0
      %v685 = vsel %vm632, %v558, 0
      %v688 = vsel %vm632, %v559, 0
      %v691 = vsel %vm632, %v560, 0
      %v694 = vsel %vm632, %v561, 0
      %v697 = vsel %vm632, %v562, 0
      %v700 = vsel %vm632, %v563, 0
      %v703 = vsel %vm632, %v564, 0
      %v706 = vsel %vm632, %v565, 0
      %v709 = vsel %vm632, %v566, 0
      %v712 = vsel %vm632, %v567, 0
      %v715 = vsel %vm632, %v568, 0
      %v718 = vsel %vm632, %v569, 0
      %v721 = vsel %vm632, %v570, 0
      %v724 = vsel %vm632, %v571, 0
      %v727 = vsel %vm632, %v572, 0
      %v730 = vsel %vm632, %v573, 0
      %v733 = vsel %vm632, %v574, 0
      %v736 = vsel %vm632, %v575, 0
      %v739 = vsel %vm632, %v576, 0
      %v742 = vsel %vm632, %v577, 0
      %v745 = vsel %vm632, %v578, 0
      %v748 = vsel %vm632, %v579, 0
      %v751 = vsel %vm632, %v580, 0
      %v754 = vsel %vm632, %v581, 0
      %v757 = vsel %vm632, %v582, 0
      %v760 = vsel %vm632, %v583, 0
      %v763 = vsel %vm632, %v584, 0
      %v766 = vsel %vm632, %v585, 0
      %v769 = vsel %vm632, %v586, 0
      %v772 = vsel %vm632, %v587, 0
      %v775 = vsel %vm632, %v588, 0
      %v778 = vsel %vm632, %v589, 0
      %v781 = vsel %vm632, %v590, 0
      %v784 = vsel %vm632, %v591, 0
      %v787 = vsel %vm632, %v592, 0
      %v790 = vsel %vm632, %v593, 0
      %v793 = vsel %vm632, %v594, 0
      %v796 = vsel %vm632, %v595, 0
      %v799 = vsel %vm632, %v596, 0
      %v802 = vsel %vm632, %v597, 0
      %v805 = vsel %vm632, %v598, 0
      %v808 = vsel %vm632, %v599, 0
      %v811 = vsel %vm632, %v600, 0
      %v814 = vsel %vm632, %v601, 0
      %v817 = vsel %vm632, %v602, 0
      %v820 = vsel %vm632, %v603, 0
      %v823 = vsel %vm632, %v604, 0
      %vm825 = vcmask 1043456
      %v827 = vsel %vm825, %v627, 0
      %829 = vmatprep.subr.bf16.mxu0 0
      %830 = vmatpush1.bf16.msra.mxu0 0
      %831 = vmatprep.subr.bf16.mxu0 0
      %832 = vmatpush1.bf16.msra.mxu0 0
      %833 = vmatprep.subr.bf16.mxu0 0
      %834 = vmatpush1.bf16.msra.mxu0 0
      %835 = vmatprep.subr.bf16.mxu0 0
      %836 = vmatpush1.bf16.msra.mxu0 %v827
      %837 = vmatprep.subr.bf16.mxu0 0
      %838 = vmatpush1.bf16.msra.mxu0 %v626
      %839 = vmatprep.subr.bf16.mxu0 0
      %840 = vmatpush1.bf16.msra.mxu0 %v625
      %841 = vmatprep.subr.bf16.mxu0 0
      %842 = vmatpush1.bf16.msra.mxu0 %v624
      %843 = vmatprep.subr.bf16.mxu0 0
      %844 = vmatpush1.bf16.msra.mxu0 %v623
      %845 = vmatprep.subr.bf16.mxu0 0
      %846 = vmatpush2.bf16.msra.mxu0 0
      %847 = vmatprep.subr.bf16.mxu0 0
      %848 = vmatpush2.bf16.msra.mxu0 0
      %849 = vmatprep.subr.bf16.mxu0 0
      %850 = vmatpush2.bf16.msra.mxu0 0
      %851 = vmatprep.subr.bf16.mxu0 0
      %852 = vmatpush2.bf16.msra.mxu0 0
      %853 = vmatprep.subr.bf16.mxu0 0
      %854 = vmatpush2.bf16.msra.mxu0 0
      %855 = vmatprep.subr.bf16.mxu0 0
      %856 = vmatpush2.bf16.msra.mxu0 0
      %857 = vmatprep.subr.bf16.mxu0 0
      %858 = vmatpush2.bf16.msra.mxu0 0
      %859 = vmatprep.subr.bf16.mxu0 0
      %860 = vmatpush2.bf16.msra.mxu0 0
      %861 = vmatprep.mubr.bf16.mxu0 0
      %862 = vmatmul.mubr.bf16.gmra.mxu0 %v634
      %v863 = vpop.f32.mrf.mxu0
      %v864 = vadd.f32 0.0, %v863
      %v865 = vpop.f32.mrf.mxu0
      %v866 = vpop.f32.mrf.mxu0
      %v867 = vadd.f32 0.0, %v866
      %v868 = vpop.f32.mrf.mxu0
      %869 = vmatprep.mubr.bf16.mxu0 0
      %870 = vmatmul.mubr.bf16.gmra.mxu0 %v637
      %v871 = vpop.f32.mrf.mxu0
      %v872 = vadd.f32 0.0, %v871
      %v873 = vpop.f32.mrf.mxu0
      %v874 = vpop.f32.mrf.mxu0
      %v875 = vadd.f32 0.0, %v874
      %v876 = vpop.f32.mrf.mxu0
      %877 = vmatprep.mubr.bf16.mxu0 0
      %878 = vmatmul.mubr.bf16.gmra.mxu0 %v640
      %v879 = vpop.f32.mrf.mxu0
      %v880 = vadd.f32 0.0, %v879
      %v881 = vpop.f32.mrf.mxu0
      %v882 = vpop.f32.mrf.mxu0
      %v883 = vadd.f32 0.0, %v882
      %v884 = vpop.f32.mrf.mxu0
      %885 = vmatprep.mubr.bf16.mxu0 0
      %886 = vmatmul.mubr.bf16.gmra.mxu0 %v643
      %v887 = vpop.f32.mrf.mxu0
      %v888 = vadd.f32 0.0, %v887
      %v889 = vpop.f32.mrf.mxu0
      %v890 = vpop.f32.mrf.mxu0
      %v891 = vadd.f32 0.0, %v890
      %v892 = vpop.f32.mrf.mxu0
      %893 = vmatprep.mubr.bf16.mxu0 0
      %894 = vmatmul.mubr.bf16.gmra.mxu0 %v646
      %v895 = vpop.f32.mrf.mxu0
      %v896 = vadd.f32 0.0, %v895
      %v897 = vpop.f32.mrf.mxu0
      %v898 = vpop.f32.mrf.mxu0
      %v899 = vadd.f32 0.0, %v898
      %v900 = vpop.f32.mrf.mxu0
      %901 = vmatprep.mubr.bf16.mxu0 0
      %902 = vmatmul.mubr.bf16.gmra.mxu0 %v649
      %v903 = vpop.f32.mrf.mxu0
      %v904 = vadd.f32 0.0, %v903
      %v905 = vpop.f32.mrf.mxu0
      %v906 = vpop.f32.mrf.mxu0
      %v907 = vadd.f32 0.0, %v906
      %v908 = vpop.f32.mrf.mxu0
      %909 = vmatprep.mubr.bf16.mxu0 0
      %910 = vmatmul.mubr.bf16.gmra.mxu0 %v652
      %v911 = vpop.f32.mrf.mxu0
      %v912 = vadd.f32 0.0, %v911
      %v913 = vpop.f32.mrf.mxu0
      %v914 = vpop.f32.mrf.mxu0
      %v915 = vadd.f32 0.0, %v914
      %v916 = vpop.f32.mrf.mxu0
      %917 = vmatprep.mubr.bf16.mxu0 0
      %918 = vmatmul.mubr.bf16.gmra.mxu0 %v655
      %v919 = vpop.f32.mrf.mxu0
      %v920 = vadd.f32 0.0, %v919
      %v921 = vpop.f32.mrf.mxu0
      %v922 = vpop.f32.mrf.mxu0
      %v923 = vadd.f32 0.0, %v922
      %v924 = vpop.f32.mrf.mxu0
      %925 = vmatprep.mubr.bf16.mxu0 0
      %926 = vmatmul.mubr.bf16.gmra.mxu0 %v658
      %v927 = vpop.f32.mrf.mxu0
      %v928 = vadd.f32 0.0, %v927
      %v929 = vpop.f32.mrf.mxu0
      %v930 = vpop.f32.mrf.mxu0
      %v931 = vadd.f32 0.0, %v930
      %v932 = vpop.f32.mrf.mxu0
      %933 = vmatprep.mubr.bf16.mxu0 0
      %934 = vmatmul.mubr.bf16.gmra.mxu0 %v661
      %v935 = vpop.f32.mrf.mxu0
      %v936 = vadd.f32 0.0, %v935
      %v937 = vpop.f32.mrf.mxu0
      %v938 = vpop.f32.mrf.mxu0
      %v939 = vadd.f32 0.0, %v938
      %v940 = vpop.f32.mrf.mxu0
      %941 = vmatprep.mubr.bf16.mxu0 0
      %942 = vmatmul.mubr.bf16.gmra.mxu0 %v664
      %v943 = vpop.f32.mrf.mxu0
      %v944 = vadd.f32 0.0, %v943
      %v945 = vpop.f32.mrf.mxu0
      %v946 = vpop.f32.mrf.mxu0
      %v947 = vadd.f32 0.0, %v946
      %v948 = vpop.f32.mrf.mxu0
      %949 = vmatprep.mubr.bf16.mxu0 0
      %950 = vmatmul.mubr.bf16.gmra.mxu0 %v667
      %v951 = vpop.f32.mrf.mxu0
      %v952 = vadd.f32 0.0, %v951
      %v953 = vpop.f32.mrf.mxu0
      %v954 = vpop.f32.mrf.mxu0
      %v955 = vadd.f32 0.0, %v954
      %v956 = vpop.f32.mrf.mxu0
      %957 = vmatprep.mubr.bf16.mxu0 0
      %958 = vmatmul.mubr.bf16.gmra.mxu0 %v670
      %v959 = vpop.f32.mrf.mxu0
      %v960 = vadd.f32 0.0, %v959
      %v961 = vpop.f32.mrf.mxu0
      %v962 = vpop.f32.mrf.mxu0
      %v963 = vadd.f32 0.0, %v962
      %v964 = vpop.f32.mrf.mxu0
      %965 = vmatprep.mubr.bf16.mxu0 0
      %966 = vmatmul.mubr.bf16.gmra.mxu0 %v673
      %v967 = vpop.f32.mrf.mxu0
      %v968 = vadd.f32 0.0, %v967
      %v969 = vpop.f32.mrf.mxu0
      %v970 = vpop.f32.mrf.mxu0
      %v971 = vadd.f32 0.0, %v970
      %v972 = vpop.f32.mrf.mxu0
      %973 = vmatprep.mubr.bf16.mxu0 0
      %974 = vmatmul.mubr.bf16.gmra.mxu0 %v676
      %v975 = vpop.f32.mrf.mxu0
      %v976 = vadd.f32 0.0, %v975
      %v977 = vpop.f32.mrf.mxu0
      %v978 = vpop.f32.mrf.mxu0
      %v979 = vadd.f32 0.0, %v978
      %v980 = vpop.f32.mrf.mxu0
      %981 = vmatprep.mubr.bf16.mxu0 0
      %982 = vmatmul.mubr.bf16.gmra.mxu0 %v679
      %v983 = vpop.f32.mrf.mxu0
      %v984 = vadd.f32 0.0, %v983
      %v985 = vpop.f32.mrf.mxu0
      %v986 = vpop.f32.mrf.mxu0
      %v987 = vadd.f32 0.0, %v986
      %v988 = vpop.f32.mrf.mxu0
      %989 = vmatprep.mubr.bf16.mxu0 0
      %990 = vmatmul.mubr.bf16.gmra.mxu0 %v682
      %v991 = vpop.f32.mrf.mxu0
      %v992 = vadd.f32 0.0, %v991
      %v993 = vpop.f32.mrf.mxu0
      %v994 = vpop.f32.mrf.mxu0
      %v995 = vadd.f32 0.0, %v994
      %v996 = vpop.f32.mrf.mxu0
      %997 = vmatprep.mubr.bf16.mxu0 0
      %998 = vmatmul.mubr.bf16.gmra.mxu0 %v685
      %v999 = vpop.f32.mrf.mxu0
      %v1000 = vadd.f32 0.0, %v999
      %v1001 = vpop.f32.mrf.mxu0
      %v1002 = vpop.f32.mrf.mxu0
      %v1003 = vadd.f32 0.0, %v1002
      %v1004 = vpop.f32.mrf.mxu0
      %1005 = vmatprep.mubr.bf16.mxu0 0
      %1006 = vmatmul.mubr.bf16.gmra.mxu0 %v688
      %v1007 = vpop.f32.mrf.mxu0
      %v1008 = vadd.f32 0.0, %v1007
      %v1009 = vpop.f32.mrf.mxu0
      %v1010 = vpop.f32.mrf.mxu0
      %v1011 = vadd.f32 0.0, %v1010
      %v1012 = vpop.f32.mrf.mxu0
      %1013 = vmatprep.mubr.bf16.mxu0 0
      %1014 = vmatmul.mubr.bf16.gmra.mxu0 %v691
      %v1015 = vpop.f32.mrf.mxu0
      %v1016 = vadd.f32 0.0, %v1015
      %v1017 = vpop.f32.mrf.mxu0
      %v1018 = vpop.f32.mrf.mxu0
      %v1019 = vadd.f32 0.0, %v1018
      %v1020 = vpop.f32.mrf.mxu0
      %1021 = vmatprep.mubr.bf16.mxu0 0
      %1022 = vmatmul.mubr.bf16.gmra.mxu0 %v694
      %v1023 = vpop.f32.mrf.mxu0
      %v1024 = vadd.f32 0.0, %v1023
      %v1025 = vpop.f32.mrf.mxu0
      %v1026 = vpop.f32.mrf.mxu0
      %v1027 = vadd.f32 0.0, %v1026
      %v1028 = vpop.f32.mrf.mxu0
      %1029 = vmatprep.mubr.bf16.mxu0 0
      %1030 = vmatmul.mubr.bf16.gmra.mxu0 %v697
      %v1031 = vpop.f32.mrf.mxu0
      %v1032 = vadd.f32 0.0, %v1031
      %v1033 = vpop.f32.mrf.mxu0
      %v1034 = vpop.f32.mrf.mxu0
      %v1035 = vadd.f32 0.0, %v1034
      %v1036 = vpop.f32.mrf.mxu0
      %1037 = vmatprep.mubr.bf16.mxu0 0
      %1038 = vmatmul.mubr.bf16.gmra.mxu0 %v700
      %v1039 = vpop.f32.mrf.mxu0
      %v1040 = vadd.f32 0.0, %v1039
      %v1041 = vpop.f32.mrf.mxu0
      %v1042 = vpop.f32.mrf.mxu0
      %v1043 = vadd.f32 0.0, %v1042
      %v1044 = vpop.f32.mrf.mxu0
      %1045 = vmatprep.mubr.bf16.mxu0 0
      %1046 = vmatmul.mubr.bf16.gmra.mxu0 %v703
      %v1047 = vpop.f32.mrf.mxu0
      %v1048 = vadd.f32 0.0, %v1047
      %v1049 = vpop.f32.mrf.mxu0
      %v1050 = vpop.f32.mrf.mxu0
      %v1051 = vadd.f32 0.0, %v1050
      %v1052 = vpop.f32.mrf.mxu0
      %1053 = vmatprep.mubr.bf16.mxu0 0
      %1054 = vmatmul.mubr.bf16.gmra.mxu0 %v706
      %v1055 = vpop.f32.mrf.mxu0
      %v1056 = vadd.f32 0.0, %v1055
      %v1057 = vpop.f32.mrf.mxu0
      %v1058 = vpop.f32.mrf.mxu0
      %v1059 = vadd.f32 0.0, %v1058
      %v1060 = vpop.f32.mrf.mxu0
      %1061 = vmatprep.mubr.bf16.mxu0 0
      %1062 = vmatmul.mubr.bf16.gmra.mxu0 %v709
      %v1063 = vpop.f32.mrf.mxu0
      %v1064 = vadd.f32 0.0, %v1063
      %v1065 = vpop.f32.mrf.mxu0
      %v1066 = vpop.f32.mrf.mxu0
      %v1067 = vadd.f32 0.0, %v1066
      %v1068 = vpop.f32.mrf.mxu0
      %1069 = vmatprep.mubr.bf16.mxu0 0
      %1070 = vmatmul.mubr.bf16.gmra.mxu0 %v712
      %v1071 = vpop.f32.mrf.mxu0
      %v1072 = vadd.f32 0.0, %v1071
      %v1073 = vpop.f32.mrf.mxu0
      %v1074 = vpop.f32.mrf.mxu0
      %v1075 = vadd.f32 0.0, %v1074
      %v1076 = vpop.f32.mrf.mxu0
      %1077 = vmatprep.mubr.bf16.mxu0 0
      %1078 = vmatmul.mubr.bf16.gmra.mxu0 %v715
      %v1079 = vpop.f32.mrf.mxu0
      %v1080 = vadd.f32 0.0, %v1079
      %v1081 = vpop.f32.mrf.mxu0
      %v1082 = vpop.f32.mrf.mxu0
      %v1083 = vadd.f32 0.0, %v1082
      %v1084 = vpop.f32.mrf.mxu0
      %1085 = vmatprep.mubr.bf16.mxu0 0
      %1086 = vmatmul.mubr.bf16.gmra.mxu0 %v718
      %v1087 = vpop.f32.mrf.mxu0
      %v1088 = vadd.f32 0.0, %v1087
      %v1089 = vpop.f32.mrf.mxu0
      %v1090 = vpop.f32.mrf.mxu0
      %v1091 = vadd.f32 0.0, %v1090
      %v1092 = vpop.f32.mrf.mxu0
      %1093 = vmatprep.mubr.bf16.mxu0 0
      %1094 = vmatmul.mubr.bf16.gmra.mxu0 %v721
      %v1095 = vpop.f32.mrf.mxu0
      %v1096 = vadd.f32 0.0, %v1095
      %v1097 = vpop.f32.mrf.mxu0
      %v1098 = vpop.f32.mrf.mxu0
      %v1099 = vadd.f32 0.0, %v1098
      %v1100 = vpop.f32.mrf.mxu0
      %1101 = vmatprep.mubr.bf16.mxu0 0
      %1102 = vmatmul.mubr.bf16.gmra.mxu0 %v724
      %v1103 = vpop.f32.mrf.mxu0
      %v1104 = vadd.f32 0.0, %v1103
      %v1105 = vpop.f32.mrf.mxu0
      %v1106 = vpop.f32.mrf.mxu0
      %v1107 = vadd.f32 0.0, %v1106
      %v1108 = vpop.f32.mrf.mxu0
      %1109 = vmatprep.mubr.bf16.mxu0 0
      %1110 = vmatmul.mubr.bf16.gmra.mxu0 %v727
      %v1111 = vpop.f32.mrf.mxu0
      %v1112 = vadd.f32 0.0, %v1111
      %v1113 = vpop.f32.mrf.mxu0
      %v1114 = vpop.f32.mrf.mxu0
      %v1115 = vadd.f32 0.0, %v1114
      %v1116 = vpop.f32.mrf.mxu0
      %1117 = vmatprep.mubr.bf16.mxu0 0
      %1118 = vmatmul.mubr.bf16.gmra.mxu0 %v730
      %v1119 = vpop.f32.mrf.mxu0
      %v1120 = vadd.f32 0.0, %v1119
      %v1121 = vpop.f32.mrf.mxu0
      %v1122 = vpop.f32.mrf.mxu0
      %v1123 = vadd.f32 0.0, %v1122
      %v1124 = vpop.f32.mrf.mxu0
      %1125 = vmatprep.mubr.bf16.mxu0 0
      %1126 = vmatmul.mubr.bf16.gmra.mxu0 %v733
      %v1127 = vpop.f32.mrf.mxu0
      %v1128 = vadd.f32 0.0, %v1127
      %v1129 = vpop.f32.mrf.mxu0
      %v1130 = vpop.f32.mrf.mxu0
      %v1131 = vadd.f32 0.0, %v1130
      %v1132 = vpop.f32.mrf.mxu0
      %1133 = vmatprep.mubr.bf16.mxu0 0
      %1134 = vmatmul.mubr.bf16.gmra.mxu0 %v736
      %v1135 = vpop.f32.mrf.mxu0
      %v1136 = vadd.f32 0.0, %v1135
      %v1137 = vpop.f32.mrf.mxu0
      %v1138 = vpop.f32.mrf.mxu0
      %v1139 = vadd.f32 0.0, %v1138
      %v1140 = vpop.f32.mrf.mxu0
      %1141 = vmatprep.mubr.bf16.mxu0 0
      %1142 = vmatmul.mubr.bf16.gmra.mxu0 %v739
      %v1143 = vpop.f32.mrf.mxu0
      %v1144 = vadd.f32 0.0, %v1143
      %v1145 = vpop.f32.mrf.mxu0
      %v1146 = vpop.f32.mrf.mxu0
      %v1147 = vadd.f32 0.0, %v1146
      %v1148 = vpop.f32.mrf.mxu0
      %1149 = vmatprep.mubr.bf16.mxu0 0
      %1150 = vmatmul.mubr.bf16.gmra.mxu0 %v742
      %v1151 = vpop.f32.mrf.mxu0
      %v1152 = vadd.f32 0.0, %v1151
      %v1153 = vpop.f32.mrf.mxu0
      %v1154 = vpop.f32.mrf.mxu0
      %v1155 = vadd.f32 0.0, %v1154
      %v1156 = vpop.f32.mrf.mxu0
      %1157 = vmatprep.mubr.bf16.mxu0 0
      %1158 = vmatmul.mubr.bf16.gmra.mxu0 %v745
      %v1159 = vpop.f32.mrf.mxu0
      %v1160 = vadd.f32 0.0, %v1159
      %v1161 = vpop.f32.mrf.mxu0
      %v1162 = vpop.f32.mrf.mxu0
      %v1163 = vadd.f32 0.0, %v1162
      %v1164 = vpop.f32.mrf.mxu0
      %1165 = vmatprep.mubr.bf16.mxu0 0
      %1166 = vmatmul.mubr.bf16.gmra.mxu0 %v748
      %v1167 = vpop.f32.mrf.mxu0
      %v1168 = vadd.f32 0.0, %v1167
      %v1169 = vpop.f32.mrf.mxu0
      %v1170 = vpop.f32.mrf.mxu0
      %v1171 = vadd.f32 0.0, %v1170
      %v1172 = vpop.f32.mrf.mxu0
      %1173 = vmatprep.mubr.bf16.mxu0 0
      %1174 = vmatmul.mubr.bf16.gmra.mxu0 %v751
      %v1175 = vpop.f32.mrf.mxu0
      %v1176 = vadd.f32 0.0, %v1175
      %v1177 = vpop.f32.mrf.mxu0
      %v1178 = vpop.f32.mrf.mxu0
      %v1179 = vadd.f32 0.0, %v1178
      %v1180 = vpop.f32.mrf.mxu0
      %1181 = vmatprep.mubr.bf16.mxu0 0
      %1182 = vmatmul.mubr.bf16.gmra.mxu0 %v754
      %v1183 = vpop.f32.mrf.mxu0
      %v1184 = vadd.f32 0.0, %v1183
      %v1185 = vpop.f32.mrf.mxu0
      %v1186 = vpop.f32.mrf.mxu0
      %v1187 = vadd.f32 0.0, %v1186
      %v1188 = vpop.f32.mrf.mxu0
      %1189 = vmatprep.mubr.bf16.mxu0 0
      %1190 = vmatmul.mubr.bf16.gmra.mxu0 %v757
      %v1191 = vpop.f32.mrf.mxu0
      %v1192 = vadd.f32 0.0, %v1191
      %v1193 = vpop.f32.mrf.mxu0
      %v1194 = vpop.f32.mrf.mxu0
      %v1195 = vadd.f32 0.0, %v1194
      %v1196 = vpop.f32.mrf.mxu0
      %1197 = vmatprep.mubr.bf16.mxu0 0
      %1198 = vmatmul.mubr.bf16.gmra.mxu0 %v760
      %v1199 = vpop.f32.mrf.mxu0
      %v1200 = vadd.f32 0.0, %v1199
      %v1201 = vpop.f32.mrf.mxu0
      %v1202 = vpop.f32.mrf.mxu0
      %v1203 = vadd.f32 0.0, %v1202
      %v1204 = vpop.f32.mrf.mxu0
      %1205 = vmatprep.mubr.bf16.mxu0 0
      %1206 = vmatmul.mubr.bf16.gmra.mxu0 %v763
      %v1207 = vpop.f32.mrf.mxu0
      %v1208 = vadd.f32 0.0, %v1207
      %v1209 = vpop.f32.mrf.mxu0
      %v1210 = vpop.f32.mrf.mxu0
      %v1211 = vadd.f32 0.0, %v1210
      %v1212 = vpop.f32.mrf.mxu0
      %1213 = vmatprep.mubr.bf16.mxu0 0
      %1214 = vmatmul.mubr.bf16.gmra.mxu0 %v766
      %v1215 = vpop.f32.mrf.mxu0
      %v1216 = vadd.f32 0.0, %v1215
      %v1217 = vpop.f32.mrf.mxu0
      %v1218 = vpop.f32.mrf.mxu0
      %v1219 = vadd.f32 0.0, %v1218
      %v1220 = vpop.f32.mrf.mxu0
      %1221 = vmatprep.mubr.bf16.mxu0 0
      %1222 = vmatmul.mubr.bf16.gmra.mxu0 %v769
      %v1223 = vpop.f32.mrf.mxu0
      %v1224 = vadd.f32 0.0, %v1223
      %v1225 = vpop.f32.mrf.mxu0
      %v1226 = vpop.f32.mrf.mxu0
      %v1227 = vadd.f32 0.0, %v1226
      %v1228 = vpop.f32.mrf.mxu0
      %1229 = vmatprep.mubr.bf16.mxu0 0
      %1230 = vmatmul.mubr.bf16.gmra.mxu0 %v772
      %v1231 = vpop.f32.mrf.mxu0
      %v1232 = vadd.f32 0.0, %v1231
      %v1233 = vpop.f32.mrf.mxu0
      %v1234 = vpop.f32.mrf.mxu0
      %v1235 = vadd.f32 0.0, %v1234
      %v1236 = vpop.f32.mrf.mxu0
      %1237 = vmatprep.mubr.bf16.mxu0 0
      %1238 = vmatmul.mubr.bf16.gmra.mxu0 %v775
      %v1239 = vpop.f32.mrf.mxu0
      %v1240 = vadd.f32 0.0, %v1239
      %v1241 = vpop.f32.mrf.mxu0
      %v1242 = vpop.f32.mrf.mxu0
      %v1243 = vadd.f32 0.0, %v1242
      %v1244 = vpop.f32.mrf.mxu0
      %1245 = vmatprep.mubr.bf16.mxu0 0
      %1246 = vmatmul.mubr.bf16.gmra.mxu0 %v778
      %v1247 = vpop.f32.mrf.mxu0
      %v1248 = vadd.f32 0.0, %v1247
      %v1249 = vpop.f32.mrf.mxu0
      %v1250 = vpop.f32.mrf.mxu0
      %v1251 = vadd.f32 0.0, %v1250
      %v1252 = vpop.f32.mrf.mxu0
      %1253 = vmatprep.mubr.bf16.mxu0 0
      %1254 = vmatmul.mubr.bf16.gmra.mxu0 %v781
      %v1255 = vpop.f32.mrf.mxu0
      %v1256 = vadd.f32 0.0, %v1255
      %v1257 = vpop.f32.mrf.mxu0
      %v1258 = vpop.f32.mrf.mxu0
      %v1259 = vadd.f32 0.0, %v1258
      %v1260 = vpop.f32.mrf.mxu0
      %1261 = vmatprep.mubr.bf16.mxu0 0
      %1262 = vmatmul.mubr.bf16.gmra.mxu0 %v784
      %v1263 = vpop.f32.mrf.mxu0
      %v1264 = vadd.f32 0.0, %v1263
      %v1265 = vpop.f32.mrf.mxu0
      %v1266 = vpop.f32.mrf.mxu0
      %v1267 = vadd.f32 0.0, %v1266
      %v1268 = vpop.f32.mrf.mxu0
      %1269 = vmatprep.mubr.bf16.mxu0 0
      %1270 = vmatmul.mubr.bf16.gmra.mxu0 %v787
      %v1271 = vpop.f32.mrf.mxu0
      %v1272 = vadd.f32 0.0, %v1271
      %v1273 = vpop.f32.mrf.mxu0
      %v1274 = vpop.f32.mrf.mxu0
      %v1275 = vadd.f32 0.0, %v1274
      %v1276 = vpop.f32.mrf.mxu0
      %1277 = vmatprep.mubr.bf16.mxu0 0
      %1278 = vmatmul.mubr.bf16.gmra.mxu0 %v790
      %v1279 = vpop.f32.mrf.mxu0
      %v1280 = vadd.f32 0.0, %v1279
      %v1281 = vpop.f32.mrf.mxu0
      %v1282 = vpop.f32.mrf.mxu0
      %v1283 = vadd.f32 0.0, %v1282
      %v1284 = vpop.f32.mrf.mxu0
      %1285 = vmatprep.mubr.bf16.mxu0 0
      %1286 = vmatmul.mubr.bf16.gmra.mxu0 %v793
      %v1287 = vpop.f32.mrf.mxu0
      %v1288 = vadd.f32 0.0, %v1287
      %v1289 = vpop.f32.mrf.mxu0
      %v1290 = vpop.f32.mrf.mxu0
      %v1291 = vadd.f32 0.0, %v1290
      %v1292 = vpop.f32.mrf.mxu0
      %1293 = vmatprep.mubr.bf16.mxu0 0
      %1294 = vmatmul.mubr.bf16.gmra.mxu0 %v796
      %v1295 = vpop.f32.mrf.mxu0
      %v1296 = vadd.f32 0.0, %v1295
      %v1297 = vpop.f32.mrf.mxu0
      %v1298 = vpop.f32.mrf.mxu0
      %v1299 = vadd.f32 0.0, %v1298
      %v1300 = vpop.f32.mrf.mxu0
      %1301 = vmatprep.mubr.bf16.mxu0 0
      %1302 = vmatmul.mubr.bf16.gmra.mxu0 %v799
      %v1303 = vpop.f32.mrf.mxu0
      %v1304 = vadd.f32 0.0, %v1303
      %v1305 = vpop.f32.mrf.mxu0
      %v1306 = vpop.f32.mrf.mxu0
      %v1307 = vadd.f32 0.0, %v1306
      %v1308 = vpop.f32.mrf.mxu0
      %1309 = vmatprep.mubr.bf16.mxu0 0
      %1310 = vmatmul.mubr.bf16.gmra.mxu0 %v802
      %v1311 = vpop.f32.mrf.mxu0
      %v1312 = vadd.f32 0.0, %v1311
      %v1313 = vpop.f32.mrf.mxu0
      %v1314 = vpop.f32.mrf.mxu0
      %v1315 = vadd.f32 0.0, %v1314
      %v1316 = vpop.f32.mrf.mxu0
      %1317 = vmatprep.mubr.bf16.mxu0 0
      %1318 = vmatmul.mubr.bf16.gmra.mxu0 %v805
      %v1319 = vpop.f32.mrf.mxu0
      %v1320 = vadd.f32 0.0, %v1319
      %v1321 = vpop.f32.mrf.mxu0
      %v1322 = vpop.f32.mrf.mxu0
      %v1323 = vadd.f32 0.0, %v1322
      %v1324 = vpop.f32.mrf.mxu0
      %1325 = vmatprep.mubr.bf16.mxu0 0
      %1326 = vmatmul.mubr.bf16.gmra.mxu0 %v808
      %v1327 = vpop.f32.mrf.mxu0
      %v1328 = vadd.f32 0.0, %v1327
      %v1329 = vpop.f32.mrf.mxu0
      %v1330 = vpop.f32.mrf.mxu0
      %v1331 = vadd.f32 0.0, %v1330
      %v1332 = vpop.f32.mrf.mxu0
      %1333 = vmatprep.mubr.bf16.mxu0 0
      %1334 = vmatmul.mubr.bf16.gmra.mxu0 %v811
      %v1335 = vpop.f32.mrf.mxu0
      %v1336 = vadd.f32 0.0, %v1335
      %v1337 = vpop.f32.mrf.mxu0
      %v1338 = vpop.f32.mrf.mxu0
      %v1339 = vadd.f32 0.0, %v1338
      %v1340 = vpop.f32.mrf.mxu0
      %1341 = vmatprep.mubr.bf16.mxu0 0
      %1342 = vmatmul.mubr.bf16.gmra.mxu0 %v814
      %v1343 = vpop.f32.mrf.mxu0
      %v1344 = vadd.f32 0.0, %v1343
      %v1345 = vpop.f32.mrf.mxu0
      %v1346 = vpop.f32.mrf.mxu0
      %v1347 = vadd.f32 0.0, %v1346
      %v1348 = vpop.f32.mrf.mxu0
      %1349 = vmatprep.mubr.bf16.mxu0 0
      %1350 = vmatmul.mubr.bf16.gmra.mxu0 %v817
      %v1351 = vpop.f32.mrf.mxu0
      %v1352 = vadd.f32 0.0, %v1351
      %v1353 = vpop.f32.mrf.mxu0
      %v1354 = vpop.f32.mrf.mxu0
      %v1355 = vadd.f32 0.0, %v1354
      %v1356 = vpop.f32.mrf.mxu0
      %1357 = vmatprep.mubr.bf16.mxu0 0
      %1358 = vmatmul.mubr.bf16.gmra.mxu0 %v820
      %v1359 = vpop.f32.mrf.mxu0
      %v1360 = vadd.f32 0.0, %v1359
      %v1361 = vpop.f32.mrf.mxu0
      %v1362 = vpop.f32.mrf.mxu0
      %v1363 = vadd.f32 0.0, %v1362
      %v1364 = vpop.f32.mrf.mxu0
      %1365 = vmatprep.mubr.bf16.mxu0 0
      %1366 = vmatmul.mubr.bf16.gmra.mxu0 %v823
      %v1367 = vpop.f32.mrf.mxu0
      %v1368 = vadd.f32 0.0, %v1367
      %v1369 = vpop.f32.mrf.mxu0
      %v1370 = vpop.f32.mrf.mxu0
      %v1371 = vadd.f32 0.0, %v1370
      %v1372 = vpop.f32.mrf.mxu0
      %1373 = vdwg.mxu0
      %v1374 = vtanh.pop %v864
      %v1375 = vtanh.pop %v867
      %v1376 = vtanh.pop %v872
      %v1377 = vtanh.pop %v875
      %v1378 = vtanh.pop %v880
      %v1379 = vtanh.pop %v883
      %v1380 = vtanh.pop %v888
      %v1381 = vtanh.pop %v891
      %v1382 = vtanh.pop %v896
      %v1383 = vtanh.pop %v899
      %v1384 = vtanh.pop %v904
      %v1385 = vtanh.pop %v907
      %v1386 = vtanh.pop %v912
      %v1387 = vtanh.pop %v915
      %v1388 = vtanh.pop %v920
      %v1389 = vtanh.pop %v923
      %v1390 = vtanh.pop %v928
      %v1391 = vtanh.pop %v931
      %v1392 = vtanh.pop %v936
      %v1393 = vtanh.pop %v939
      %v1394 = vtanh.pop %v944
      %v1395 = vtanh.pop %v947
      %v1396 = vtanh.pop %v952
      %v1397 = vtanh.pop %v955
      %v1398 = vtanh.pop %v960
      %v1399 = vtanh.pop %v963
      %v1400 = vtanh.pop %v968
      %v1401 = vtanh.pop %v971
      %v1402 = vtanh.pop %v976
      %v1403 = vtanh.pop %v979
      %v1404 = vtanh.pop %v984
      %v1405 = vtanh.pop %v987
      %v1406 = vtanh.pop %v992
      %v1407 = vtanh.pop %v995
      %v1408 = vtanh.pop %v1000
      %v1409 = vtanh.pop %v1003
      %v1410 = vtanh.pop %v1008
      %v1411 = vtanh.pop %v1011
      %v1412 = vtanh.pop %v1016
      %v1413 = vtanh.pop %v1019
      %v1414 = vtanh.pop %v1024
      %v1415 = vtanh.pop %v1027
      %v1416 = vtanh.pop %v1032
      %v1417 = vtanh.pop %v1035
      %v1418 = vtanh.pop %v1040
      %v1419 = vtanh.pop %v1043
      %v1420 = vtanh.pop %v1048
      %v1421 = vtanh.pop %v1051
      %v1422 = vtanh.pop %v1056
      %v1423 = vtanh.pop %v1059
      %v1424 = vtanh.pop %v1064
      %v1425 = vtanh.pop %v1067
      %v1426 = vtanh.pop %v1072
      %v1427 = vtanh.pop %v1075
      %v1428 = vtanh.pop %v1080
      %v1429 = vtanh.pop %v1083
      %v1430 = vtanh.pop %v1088
      %v1431 = vtanh.pop %v1091
      %v1432 = vtanh.pop %v1096
      %v1433 = vtanh.pop %v1099
      %v1434 = vtanh.pop %v1104
      %v1435 = vtanh.pop %v1107
      %v1436 = vtanh.pop %v1112
      %v1437 = vtanh.pop %v1115
      %v1438 = vtanh.pop %v1120
      %v1439 = vtanh.pop %v1123
      %v1440 = vtanh.pop %v1128
      %v1441 = vtanh.pop %v1131
      %v1442 = vtanh.pop %v1136
      %v1443 = vtanh.pop %v1139
      %v1444 = vtanh.pop %v1144
      %v1445 = vtanh.pop %v1147
      %v1446 = vtanh.pop %v1152
      %v1447 = vtanh.pop %v1155
      %v1448 = vtanh.pop %v1160
      %v1449 = vtanh.pop %v1163
      %v1450 = vtanh.pop %v1168
      %v1451 = vtanh.pop %v1171
      %v1452 = vtanh.pop %v1176
      %v1453 = vtanh.pop %v1179
      %v1454 = vtanh.pop %v1184
      %v1455 = vtanh.pop %v1187
      %v1456 = vtanh.pop %v1192
      %v1457 = vtanh.pop %v1195
      %v1458 = vtanh.pop %v1200
      %v1459 = vtanh.pop %v1203
      %v1460 = vtanh.pop %v1208
      %v1461 = vtanh.pop %v1211
      %v1462 = vtanh.pop %v1216
      %v1463 = vtanh.pop %v1219
      %v1464 = vtanh.pop %v1224
      %v1465 = vtanh.pop %v1227
      %v1466 = vtanh.pop %v1232
      %v1467 = vtanh.pop %v1235
      %v1468 = vtanh.pop %v1240
      %v1469 = vtanh.pop %v1243
      %v1470 = vtanh.pop %v1248
      %v1471 = vtanh.pop %v1251
      %v1472 = vtanh.pop %v1256
      %v1473 = vtanh.pop %v1259
      %v1474 = vtanh.pop %v1264
      %v1475 = vtanh.pop %v1267
      %v1476 = vtanh.pop %v1272
      %v1477 = vtanh.pop %v1275
      %v1478 = vtanh.pop %v1280
      %v1479 = vtanh.pop %v1283
      %v1480 = vtanh.pop %v1288
      %v1481 = vtanh.pop %v1291
      %v1482 = vtanh.pop %v1296
      %v1483 = vtanh.pop %v1299
      %v1484 = vtanh.pop %v1304
      %v1485 = vtanh.pop %v1307
      %v1486 = vtanh.pop %v1312
      %v1487 = vtanh.pop %v1315
      %v1488 = vtanh.pop %v1320
      %v1489 = vtanh.pop %v1323
      %v1490 = vtanh.pop %v1328
      %v1491 = vtanh.pop %v1331
      %v1492 = vtanh.pop %v1336
      %v1493 = vtanh.pop %v1339
      %v1494 = vtanh.pop %v1344
      %v1495 = vtanh.pop %v1347
      %v1496 = vtanh.pop %v1352
      %v1497 = vtanh.pop %v1355
      %v1498 = vtanh.pop %v1360
      %v1499 = vtanh.pop %v1363
      %v1500 = vtanh.pop %v1368
      %v1501 = vtanh.pop %v1371
      %1502 = vst [vmem:[%s145] sm:$0xff] %v1374
      %1503 = vst [vmem:[%s145 + $0x8] sm:$0xff] %v1375
      %1504 = vst [vmem:[%s145 + $0x10] sm:$0xff] %v1376
      %1505 = vst [vmem:[%s145 + $0x18] sm:$0xff] %v1377
      %1506 = vst [vmem:[%s145 + $0x20] sm:$0xff] %v1378
      %1507 = vst [vmem:[%s145 + $0x28] sm:$0xff] %v1379
      %1508 = vst [vmem:[%s145 + $0x30] sm:$0xff] %v1380
      %1509 = vst [vmem:[%s145 + $0x38] sm:$0xff] %v1381
      %1510 = vst [vmem:[%s145 + $0x40] sm:$0xff] %v1382
      %1511 = vst [vmem:[%s145 + $0x48] sm:$0xff] %v1383
      %1512 = vst [vmem:[%s145 + $0x50] sm:$0xff] %v1384
      %1513 = vst [vmem:[%s145 + $0x58] sm:$0xff] %v1385
      %1514 = vst [vmem:[%s145 + $0x60] sm:$0xff] %v1386
      %1515 = vst [vmem:[%s145 + $0x68] sm:$0xff] %v1387
      %1516 = vst [vmem:[%s145 + $0x70] sm:$0xff] %v1388
      %1517 = vst [vmem:[%s145 + $0x78] sm:$0xff] %v1389
      %1518 = vst [vmem:[%s145 + $0x80] sm:$0xff] %v1390
      %1519 = vst [vmem:[%s145 + $0x88] sm:$0xff] %v1391
      %1520 = vst [vmem:[%s145 + $0x90] sm:$0xff] %v1392
      %1521 = vst [vmem:[%s145 + $0x98] sm:$0xff] %v1393
      %1522 = vst [vmem:[%s145 + $0xa0] sm:$0xff] %v1394
      %1523 = vst [vmem:[%s145 + $0xa8] sm:$0xff] %v1395
      %1524 = vst [vmem:[%s145 + $0xb0] sm:$0xff] %v1396
      %1525 = vst [vmem:[%s145 + $0xb8] sm:$0xff] %v1397
      %1526 = vst [vmem:[%s145 + $0xc0] sm:$0xff] %v1398
      %1527 = vst [vmem:[%s145 + $0xc8] sm:$0xff] %v1399
      %1528 = vst [vmem:[%s145 + $0xd0] sm:$0xff] %v1400
      %1529 = vst [vmem:[%s145 + $0xd8] sm:$0xff] %v1401
      %1530 = vst [vmem:[%s145 + $0xe0] sm:$0xff] %v1402
      %1531 = vst [vmem:[%s145 + $0xe8] sm:$0xff] %v1403
      %1532 = vst [vmem:[%s145 + $0xf0] sm:$0xff] %v1404
      %1533 = vst [vmem:[%s145 + $0xf8] sm:$0xff] %v1405
      %1534 = vst [vmem:[%s145 + $0x100] sm:$0xff] %v1406
      %1535 = vst [vmem:[%s145 + $0x108] sm:$0xff] %v1407
      %1536 = vst [vmem:[%s145 + $0x110] sm:$0xff] %v1408
      %1537 = vst [vmem:[%s145 + $0x118] sm:$0xff] %v1409
      %1538 = vst [vmem:[%s145 + $0x120] sm:$0xff] %v1410
      %1539 = vst [vmem:[%s145 + $0x128] sm:$0xff] %v1411
      %1540 = vst [vmem:[%s145 + $0x130] sm:$0xff] %v1412
      %1541 = vst [vmem:[%s145 + $0x138] sm:$0xff] %v1413
      %1542 = vst [vmem:[%s145 + $0x140] sm:$0xff] %v1414
      %1543 = vst [vmem:[%s145 + $0x148] sm:$0xff] %v1415
      %1544 = vst [vmem:[%s145 + $0x150] sm:$0xff] %v1416
      %1545 = vst [vmem:[%s145 + $0x158] sm:$0xff] %v1417
      %1546 = vst [vmem:[%s145 + $0x160] sm:$0xff] %v1418
      %1547 = vst [vmem:[%s145 + $0x168] sm:$0xff] %v1419
      %1548 = vst [vmem:[%s145 + $0x170] sm:$0xff] %v1420
      %1549 = vst [vmem:[%s145 + $0x178] sm:$0xff] %v1421
      %1550 = vst [vmem:[%s145 + $0x180] sm:$0xff] %v1422
      %1551 = vst [vmem:[%s145 + $0x188] sm:$0xff] %v1423
      %1552 = vst [vmem:[%s145 + $0x190] sm:$0xff] %v1424
      %1553 = vst [vmem:[%s145 + $0x198] sm:$0xff] %v1425
      %1554 = vst [vmem:[%s145 + $0x1a0] sm:$0xff] %v1426
      %1555 = vst [vmem:[%s145 + $0x1a8] sm:$0xff] %v1427
      %1556 = vst [vmem:[%s145 + $0x1b0] sm:$0xff] %v1428
      %1557 = vst [vmem:[%s145 + $0x1b8] sm:$0xff] %v1429
      %1558 = vst [vmem:[%s145 + $0x1c0] sm:$0xff] %v1430
      %1559 = vst [vmem:[%s145 + $0x1c8] sm:$0xff] %v1431
      %1560 = vst [vmem:[%s145 + $0x1d0] sm:$0xff] %v1432
      %1561 = vst [vmem:[%s145 + $0x1d8] sm:$0xff] %v1433
      %1562 = vst [vmem:[%s145 + $0x1e0] sm:$0xff] %v1434
      %1563 = vst [vmem:[%s145 + $0x1e8] sm:$0xff] %v1435
      %1564 = vst [vmem:[%s145 + $0x1f0] sm:$0xff] %v1436
      %1565 = vst [vmem:[%s145 + $0x1f8] sm:$0xff] %v1437
      %1566 = vst [vmem:[%s145 + $0x200] sm:$0xff] %v1438
      %1567 = vst [vmem:[%s145 + $0x208] sm:$0xff] %v1439
      %1568 = vst [vmem:[%s145 + $0x210] sm:$0xff] %v1440
      %1569 = vst [vmem:[%s145 + $0x218] sm:$0xff] %v1441
      %1570 = vst [vmem:[%s145 + $0x220] sm:$0xff] %v1442
      %1571 = vst [vmem:[%s145 + $0x228] sm:$0xff] %v1443
      %1572 = vst [vmem:[%s145 + $0x230] sm:$0xff] %v1444
      %1573 = vst [vmem:[%s145 + $0x238] sm:$0xff] %v1445
      %1574 = vst [vmem:[%s145 + $0x240] sm:$0xff] %v1446
      %1575 = vst [vmem:[%s145 + $0x248] sm:$0xff] %v1447
      %1576 = vst [vmem:[%s145 + $0x250] sm:$0xff] %v1448
      %1577 = vst [vmem:[%s145 + $0x258] sm:$0xff] %v1449
      %1578 = vst [vmem:[%s145 + $0x260] sm:$0xff] %v1450
      %1579 = vst [vmem:[%s145 + $0x268] sm:$0xff] %v1451
      %1580 = vst [vmem:[%s145 + $0x270] sm:$0xff] %v1452
      %1581 = vst [vmem:[%s145 + $0x278] sm:$0xff] %v1453
      %1582 = vst [vmem:[%s145 + $0x280] sm:$0xff] %v1454
      %1583 = vst [vmem:[%s145 + $0x288] sm:$0xff] %v1455
      %1584 = vst [vmem:[%s145 + $0x290] sm:$0xff] %v1456
      %1585 = vst [vmem:[%s145 + $0x298] sm:$0xff] %v1457
      %1586 = vst [vmem:[%s145 + $0x2a0] sm:$0xff] %v1458
      %1587 = vst [vmem:[%s145 + $0x2a8] sm:$0xff] %v1459
      %1588 = vst [vmem:[%s145 + $0x2b0] sm:$0xff] %v1460
      %1589 = vst [vmem:[%s145 + $0x2b8] sm:$0xff] %v1461
      %1590 = vst [vmem:[%s145 + $0x2c0] sm:$0xff] %v1462
      %1591 = vst [vmem:[%s145 + $0x2c8] sm:$0xff] %v1463
      %1592 = vst [vmem:[%s145 + $0x2d0] sm:$0xff] %v1464
      %1593 = vst [vmem:[%s145 + $0x2d8] sm:$0xff] %v1465
      %1594 = vst [vmem:[%s145 + $0x2e0] sm:$0xff] %v1466
      %1595 = vst [vmem:[%s145 + $0x2e8] sm:$0xff] %v1467
      %1596 = vst [vmem:[%s145 + $0x2f0] sm:$0xff] %v1468
      %1597 = vst [vmem:[%s145 + $0x2f8] sm:$0xff] %v1469
      %1598 = vst [vmem:[%s145 + $0x300] sm:$0xff] %v1470
      %1599 = vst [vmem:[%s145 + $0x308] sm:$0xff] %v1471
      %1600 = vst [vmem:[%s145 + $0x310] sm:$0xff] %v1472
      %1601 = vst [vmem:[%s145 + $0x318] sm:$0xff] %v1473
      %1602 = vst [vmem:[%s145 + $0x320] sm:$0xff] %v1474
      %1603 = vst [vmem:[%s145 + $0x328] sm:$0xff] %v1475
      %1604 = vst [vmem:[%s145 + $0x330] sm:$0xff] %v1476
      %1605 = vst [vmem:[%s145 + $0x338] sm:$0xff] %v1477
      %1606 = vst [vmem:[%s145 + $0x340] sm:$0xff] %v1478
      %1607 = vst [vmem:[%s145 + $0x348] sm:$0xff] %v1479
      %1608 = vst [vmem:[%s145 + $0x350] sm:$0xff] %v1480
      %1609 = vst [vmem:[%s145 + $0x358] sm:$0xff] %v1481
      %1610 = vst [vmem:[%s145 + $0x360] sm:$0xff] %v1482
      %1611 = vst [vmem:[%s145 + $0x368] sm:$0xff] %v1483
      %1612 = vst [vmem:[%s145 + $0x370] sm:$0xff] %v1484
      %1613 = vst [vmem:[%s145 + $0x378] sm:$0xff] %v1485
      %1614 = vst [vmem:[%s145 + $0x380] sm:$0xff] %v1486
      %1615 = vst [vmem:[%s145 + $0x388] sm:$0xff] %v1487
      %1616 = vst [vmem:[%s145 + $0x390] sm:$0xff] %v1488
      %1617 = vst [vmem:[%s145 + $0x398] sm:$0xff] %v1489
      %1618 = vst [vmem:[%s145 + $0x3a0] sm:$0xff] %v1490
      %1619 = vst [vmem:[%s145 + $0x3a8] sm:$0xff] %v1491
      %1620 = vst [vmem:[%s145 + $0x3b0] sm:$0xff] %v1492
      %1621 = vst [vmem:[%s145 + $0x3b8] sm:$0xff] %v1493
      %1622 = vst [vmem:[%s145 + $0x3c0] sm:$0xff] %v1494
      %1623 = vst [vmem:[%s145 + $0x3c8] sm:$0xff] %v1495
      %1624 = vst [vmem:[%s145 + $0x3d0] sm:$0xff] %v1496
      %1625 = vst [vmem:[%s145 + $0x3d8] sm:$0xff] %v1497
      %1626 = vst [vmem:[%s145 + $0x3e0] sm:$0xff] %v1498
      %1627 = vst [vmem:[%s145 + $0x3e8] sm:$0xff] %v1499
      %1628 = vst [vmem:[%s145 + $0x3f0] sm:$0xff] %v1500
      %1629 = vst [vmem:[%s145 + $0x3f8] sm:$0xff] %v1501
      %s1630 = smul.u32 128, %s13
      %p1631 = scmp.lt.s32.totalorder %s1630, 255
      %s1632 = scalar_select %p1631, %s1630, 255
      %s1633 = smul.addr %s1632, 8
      %s1634 = scalar_lea.vmem %s2, %s1633
      // Predicated region
      $region29: #{dcgan_generator_forward.17} parent=27 // pred_check
        %p1635 = pneg %p78
      $region30: #{dcgan_generator_forward.17} parent=27 // pred_check_branch
        %1637 = sbr.rel (%p1635) target = $region32
      $region31: #{dcgan_generator_forward.17} parent=27 // pred_region
        %s1638 = smul.u32 128, %s13
      $region32: #{dcgan_generator_forward.17} parent=27 // pred_fallthru
        _
    $region28: #{dcgan_generator_forward.17} parent=5 // pred_fallthru
      _
    %p1639 = scmp.le.s32.totalorder 2, %s8
    // Predicated region
    $region33: #{dcgan_generator_forward.17} parent=5 // pred_check
      %p1640 = pneg %p1639
    $region34: #{dcgan_generator_forward.17} parent=5 // pred_check_branch
      %1642 = sbr.rel (%p1640) target = $region36
    $region35: #{dcgan_generator_forward.17} parent=5 // pred_region
      %s1643 = ssub.s32 %s8, 2
      // Predicated region
      $region37: #{dcgan_generator_forward.17} parent=35 // pred_check
        %p1644 = pneg %p84
      $region38: #{dcgan_generator_forward.17} parent=35 // pred_check_branch
        %1646 = sbr.rel (%p1644) target = $region40
      $region39: #{dcgan_generator_forward.17} parent=35 // pred_region
        %s1647 = smul.u32 128, %s14
        %p1648 = scmp.lt.s32.totalorder %s1647, 255
        %s1649 = scalar_select %p1648, %s1647, 255
        %s1650 = smul.addr %s1649, 8
        %s1651 = scalar_lea.vmem %s2, %s1650
      $region40: #{dcgan_generator_forward.17} parent=35 // pred_fallthru
        _
    $region36: #{dcgan_generator_forward.17} parent=5 // pred_fallthru
      _
  $region6: #{dcgan_generator_forward.17} parent=0 // loop_footer
    %s12 = sadd.s32 1, %s8
  $region7: #{dcgan_generator_forward.17} parent=0 // loop_footer_branch
    %7 = sbr.rel target = $region3
  $region8: #{dcgan_generator_forward.17} parent=0 // loop_exit
    _

</llo_original>
